<compile_context>
chip_gen: v7x
topology: tpu7x:2x2x1
jax: 0.10.0
libtpu: 0.0.40
codegen_flags: <defaults>
</compile_context>

<pallas_src>
import jax
import jax.numpy as jnp
import numpy as np
from jax.experimental import pallas as pl
from jax.experimental.pallas import tpu as pltpu


# --------------------------- fused forward + loss kernel ---------------------

def _pointnet2_fused_kernel(x_ref, tgt_ref, w1t_ref, w2t_ref, w3t_ref,
                            wf1_ref, wf2p_ref, bcol_ref, brow_ref,
                            logp_ref, pts_ref, nll_ref, feat_acc):
    nn_i = pl.program_id(1)
    TB = x_ref.shape[0]

    @pl.when(nn_i == 0)
    def _init():
        # ReLU outputs are >= 0, so 0 is the identity of the running max.
        feat_acc[...] = jnp.zeros_like(feat_acc)

    w1t = w1t_ref[...]                          # [128, 6]   f32 (VPU layer)
    w2t = w2t_ref[...]                          # [128, 128] bf16
    w3t = w3t_ref[...]                          # [256, 128] bf16
    b1 = bcol_ref[0:128, 0:1]                   # [128, 1]   f32
    b2 = bcol_ref[0:128, 1:2]                   # [128, 1]
    b3 = bcol_ref[:, 2:3]                       # [256, 1]

    # --- SA shared MLP, channels-first, per batch row (TB is small/static) ---
    for b in range(TB):
        xb = x_ref[b]                           # [6, TN] f32, native layout
        # layer 1 (K = 6): rank-1 updates on the VPU instead of an MXU pass
        h = w1t[:, 0:1] * xb[0:1, :]
        for c in range(1, 6):
            h = h + w1t[:, c:c + 1] * xb[c:c + 1, :]
        h = jnp.maximum(h + b1, 0.0).astype(jnp.bfloat16)          # [128, TN]
        # layers 2/3 on the MXU (bf16 in, f32 accumulate)
        h = jnp.dot(w2t, h, preferred_element_type=jnp.float32) + b2
        h = jnp.maximum(h, 0.0).astype(jnp.bfloat16)               # [128, TN]
        h = jnp.dot(w3t, h, preferred_element_type=jnp.float32) + b3
        h = jnp.maximum(h, 0.0)                                    # [256, TN]
        # group_all max pool over this N tile -> running max (channels-first)
        col = jnp.max(h, axis=1, keepdims=True)                    # [256, 1]
        feat_acc[:, b:b + 1] = jnp.maximum(feat_acc[:, b:b + 1], col)

    # --- classifier head + fused NLL loss, once per batch chunk --------------
    @pl.when(nn_i == pl.num_programs(1) - 1)
    def _head():
        feat = jnp.transpose(feat_acc[...])                        # [TB, 256]
        pts_ref[...] = feat.astype(pts_ref.dtype)

        bf1 = brow_ref[:, 0:128]                                   # [1, 128]
        bf2 = brow_ref[:, 128:256]                                 # [1, 128]
        z = jnp.dot(feat.astype(jnp.bfloat16), wf1_ref[...],
                    preferred_element_type=jnp.float32) + bf1
        z = jnp.maximum(z, 0.0)
        # TODO(synk): Dropout(p=0.4) is eval-mode identity and omitted.
        logits = jnp.dot(z.astype(jnp.bfloat16), wf2p_ref[...],
                         preferred_element_type=jnp.float32) + bf2
        # padded classes carry bias -1e30 -> never the max, exp underflows to 0
        m = jnp.max(logits, axis=-1, keepdims=True)
        lse = jnp.log(jnp.sum(jnp.exp(logits - m), axis=-1, keepdims=True))
        logp = logits - m - lse
        logp_ref[...] = logp.astype(logp_ref.dtype)

        # fused F.nll_loss numerator: per-row -log p[target]
        # (targets are assumed to lie in [0, num_class); a pad-class target
        #  would silently pick a padded column.)
        tgt = tgt_ref[...]                                         # [TB, 1]
        col_iota = jax.lax.broadcasted_iota(jnp.int32, logp.shape, 1)
        picked = jnp.where(col_iota == tgt, logp, 0.0)
        nll_ref[...] = -jnp.sum(picked, axis=1, keepdims=True)     # [TB, 1]


def _pick_tiles(B, N, max_rows=4096):
    """Pick (TB, TN).

    TB: full batch (output blocks need TB == B or TB % 8 == 0); for large
    divisible-by-8 batches use chunks of 8 so the 'parallel' axis has >= 2
    steps (megacore) and the in-kernel unroll stays bounded.
    TN: the x block's last dim must be a multiple of 128 or the full N.
    max_rows = TB*TN budget keeps the [*, TN] f32/bf16 activation chain well
    under v7x's 64 MiB VMEM (v5e/v6e could go higher).
    """
    TB = B
    if B > 8 and B % 8 == 0:
        TB = 8
    TN = N
    if TB * N > max_rows and N % 128 == 0:
        TN = 128
        while TN * 2 <= N and N % (TN * 2) == 0 and TB * TN * 2 <= max_rows:
            TN *= 2
    return TB, TN


def simplified_model_forward_and_loss(xyz, target, params, num_class):
    """xyz: [B, 6, N] f32 (3 coords + 3 normals, PyTorch channel-first layout).
    target: [B] int class indices.

    Returns (log_probs [B, num_class], pooled points [B, 256], nll_loss [])."""
    B, C, N = xyz.shape
    assert C == 6, "normal_channel=True -> 6 input channels"
    assert num_class <= 128
    cpad = 128

    w1t, w2t, w3t = params["w1t"], params["w2t"], params["w3t"]
    wf1, wf2p = params["wf1"], params["wf2p"]
    bcol, brow = params["bcol"], params["brow"]

    TB, TN = _pick_tiles(B, N)
    assert B % TB == 0 and N % TN == 0
    grid = (B // TB, N // TN)
    tgt2d = target.astype(jnp.int32).reshape(B, 1)
    const = lambda bb, nn: (0, 0)

    flops = 2 * B * N * (6 * 128 + 128 * 128 + 128 * 256) \
        + 2 * B * (256 * 128 + 128 * cpad)
    weight_bytes = sum(int(a.size) * a.dtype.itemsize
                       for a in (w1t, w2t, w3t, wf1, wf2p, bcol, brow))
    bytes_accessed = int(xyz.size) * 4 + int(tgt2d.size) * 4 + weight_bytes \
        + B * (cpad + 256 + 1) * 4
    cost = pl.CostEstimate(flops=int(flops), transcendentals=int(B * cpad),
                           bytes_accessed=int(bytes_accessed))

    logp_pad, points, nll_rows = pl.pallas_call(
        _pointnet2_fused_kernel,
        grid=grid,
        in_specs=[
            pl.BlockSpec((TB, 6, TN), lambda bb, nn: (bb, 0, nn)),
            pl.BlockSpec((TB, 1), lambda bb, nn: (bb, 0)),
            pl.BlockSpec(w1t.shape, const),
            pl.BlockSpec(w2t.shape, const),
            pl.BlockSpec(w3t.shape, const),
            pl.BlockSpec(wf1.shape, const),
            pl.BlockSpec(wf2p.shape, const),
            pl.BlockSpec(bcol.shape, const),
            pl.BlockSpec(brow.shape, const),
        ],
        out_specs=[
            pl.BlockSpec((TB, cpad), lambda bb, nn: (bb, 0)),
            pl.BlockSpec((TB, 256), lambda bb, nn: (bb, 0)),
            pl.BlockSpec((TB, 1), lambda bb, nn: (bb, 0)),
        ],
        out_shape=[
            jax.ShapeDtypeStruct((B, cpad), jnp.float32),
            jax.ShapeDtypeStruct((B, 256), jnp.float32),
            jax.ShapeDtypeStruct((B, 1), jnp.float32),
        ],
        scratch_shapes=[pltpu.VMEM((256, TB), jnp.float32)],
        compiler_params=pltpu.CompilerParams(
            dimension_semantics=("parallel", "arbitrary"),
            vmem_limit_bytes=48 * 1024 * 1024),
        cost_estimate=cost,
    )(xyz, tgt2d, w1t, w2t, w3t, wf1, wf2p, bcol, brow)

    loss = jnp.mean(nll_rows)
    return logp_pad[:, :num_class], points, loss


# ------------------------------ get_loss kernel ------------------------------
# Standalone implementation of the original module: F.nll_loss(pred, target).

def _nll_loss_kernel(pred_ref, tgt_ref, loss_ref):
    pred = pred_ref[...]                                       # [B, Cpad] f32
    tgt = tgt_ref[...]                                         # [B, 1] int32
    col = jax.lax.broadcasted_iota(jnp.int32, pred.shape, 1)
    picked = jnp.where(col == tgt, pred, 0.0)                  # one-hot gather
    per_row = jnp.sum(picked, axis=1, keepdims=True)           # [B, 1]
    loss_ref[...] = -jnp.sum(per_row, axis=0, keepdims=True) / pred.shape[0]


def get_loss_forward(pred, target, trans_feat=None):
    """Pallas implementation of get_loss.forward: F.nll_loss(pred, target).

    pred: [B, num_class] log-probabilities; target: [B] int class indices;
    trans_feat is unused (kept for signature fidelity)."""
    del trans_feat
    B, C = pred.shape
    cpad = ((C + 127) // 128) * 128
    pred_p = jnp.pad(pred.astype(jnp.float32), ((0, 0), (0, cpad - C)))
    tgt = target.astype(jnp.int32).reshape(B, 1)
    loss = pl.pallas_call(
        _nll_loss_kernel,
        out_shape=jax.ShapeDtypeStruct((1, 1), jnp.float32),
    )(pred_p, tgt)
    return loss[0, 0]


# ----------------------------- parameter setup ------------------------------

def _uniform(key, shape, bound):
    return jax.random.uniform(key, shape, jnp.float32, -bound, bound)


def make_params(key, num_class):
    """Deterministic init mimicking PyTorch default (uniform +-1/sqrt(fan_in)).
    BatchNorm2d defaults (gamma=1, beta=0, mean=0, var=1, eps=1e-5) are folded
    into the conv weight/bias.  SA weights are stored channels-first
    ([Cout, Cin]); layer-1 weight stays f32 (VPU), layers 2/3 and the fc
    weights are bf16 MXU operands; biases stay f32 and are packed."""
    eps = 1e-5
    chans = [6, 128, 128, 256]
    keys = jax.random.split(key, 16)
    ki = iter(range(16))

    cf_w, cf_b = [], []
    for cin, cout in zip(chans[:-1], chans[1:]):
        bound = 1.0 / np.sqrt(cin)
        w_conv = _uniform(keys[next(ki)], (cout, cin), bound)   # Conv2d(1x1)
        b_conv = _uniform(keys[next(ki)], (cout,), bound)
        gamma = jnp.ones((cout,), jnp.float32)
        beta = jnp.zeros((cout,), jnp.float32)
        r_mean = jnp.zeros((cout,), jnp.float32)
        r_var = jnp.ones((cout,), jnp.float32)
        s = gamma / jnp.sqrt(r_var + eps)                       # BN fold
        cf_w.append(w_conv * s[:, None])                        # [Cout, Cin]
        cf_b.append((b_conv - r_mean) * s + beta)               # [Cout]

    w1t = cf_w[0]                                               # [128, 6] f32
    w2t = cf_w[1].astype(jnp.bfloat16)                          # [128, 128]
    w3t = cf_w[2].astype(jnp.bfloat16)                          # [256, 128]

    bound = 1.0 / np.sqrt(256 + 3)
    w_fc1 = _uniform(keys[next(ki)], (256 + 3, 128), bound)
    b_fc1 = _uniform(keys[next(ki)], (128,), bound)
    bound = 1.0 / np.sqrt(128)
    w_fc2 = _uniform(keys[next(ki)], (128, num_class), bound)
    b_fc2 = _uniform(keys[next(ki)], (num_class,), bound)

    cpad = 128
    # new_xyz is all-zeros under group_all -> the 3 xyz rows of fc1 are unused
    wf1 = w_fc1[3:, :].astype(jnp.bfloat16)                     # [256, 128]
    wf2p = jnp.concatenate(
        [w_fc2, jnp.zeros((128, cpad - num_class), jnp.float32)],
        axis=1).astype(jnp.bfloat16)                            # [128, 128]
    bf2p = jnp.concatenate(
        [b_fc2, jnp.full((cpad - num_class,), -1e30, jnp.float32)])

    bcol = jnp.zeros((256, 3), jnp.float32)                     # SA biases
    bcol = bcol.at[:128, 0].set(cf_b[0])
    bcol = bcol.at[:128, 1].set(cf_b[1])
    bcol = bcol.at[:, 2].set(cf_b[2])
    brow = jnp.concatenate([b_fc1, bf2p])[None, :]              # [1, 256]

    return {"w1t": w1t, "w2t": w2t, "w3t": w3t,
            "wf1": wf1, "wf2p": wf2p, "bcol": bcol, "brow": brow}


# ------------------------------ pure-JAX reference --------------------------

def reference_forward(xyz, params, num_class):
    """Matches the kernel's dataflow (f32 layer 1, bf16 MXU inputs, f32 acc)."""
    w1t, w2t, w3t = params["w1t"], params["w2t"], params["w3t"]
    wf1, wf2p = params["wf1"], params["wf2p"]
    bcol, brow = params["bcol"], params["brow"]
    b1 = bcol[:128, 0][None, :, None]
    b2 = bcol[:128, 1][None, :, None]
    b3 = bcol[:, 2][None, :, None]
    bf1 = brow[:, :128]
    bf2 = brow[:, 128:]

    h = jnp.einsum("jc,bcn->bjn", w1t, xyz) + b1                # f32 layer 1
    h = jnp.maximum(h, 0.0).astype(jnp.bfloat16)
    h = jnp.einsum("jk,bkn->bjn", w2t, h,
                   preferred_element_type=jnp.float32) + b2
    h = jnp.maximum(h, 0.0).astype(jnp.bfloat16)
    h = jnp.einsum("jk,bkn->bjn", w3t, h,
                   preferred_element_type=jnp.float32) + b3
    h = jnp.maximum(h, 0.0)
    feat = jnp.max(h, axis=2)                                   # [B, 256]
    z = jnp.maximum(jnp.dot(feat.astype(jnp.bfloat16), wf1,
                            preferred_element_type=jnp.float32) + bf1, 0.0)
    logits = jnp.dot(z.astype(jnp.bfloat16), wf2p,
                     preferred_element_type=jnp.float32) + bf2
    logp = jax.nn.log_softmax(logits, axis=-1)
    return logp[:, :num_class], feat


# ----------------------------------- main ------------------------------------

if __name__ == "__main__":
    B, N, NUM_CLASS = 2, 64, 10
    key = jax.random.PRNGKey(0)
    k_data, k_param, k_tgt = jax.random.split(key, 3)

    # input matches PyTorch: [B, channels=6 (xyz + normals), N points]
    xyz = jax.random.normal(k_data, (B, 6, N), jnp.float32)
    target = jax.random.randint(k_tgt, (B,), 0, NUM_CLASS, dtype=jnp.int32)
    params = make_params(k_param, NUM_CLASS)

    # fused forward + NLL loss (single pallas_call)
    logp, points, loss_fused = simplified_model_forward_and_loss(
        xyz, target, params, NUM_CLASS)
    jax.block_until_ready((logp, points, loss_fused))

    # standalone get_loss module (the literal spec) on the kernel predictions
    loss_module = get_loss_forward(logp, target, trans_feat=points)
    jax.block_until_ready(loss_module)

    logp_ref, points_ref = reference_forward(xyz, params, NUM_CLASS)
    loss_ref = -jnp.mean(jnp.take_along_axis(logp_ref, target[:, None], axis=1))

    np.testing.assert_allclose(np.asarray(points), np.asarray(points_ref),
                               rtol=2e-2, atol=2e-2)
    np.testing.assert_allclose(np.asarray(logp), np.asarray(logp_ref),
                               rtol=2e-2, atol=2e-2)
    np.testing.assert_allclose(np.asarray(loss_fused), np.asarray(loss_ref),
                               rtol=2e-2, atol=2e-2)
    np.testing.assert_allclose(np.asarray(loss_module), np.asarray(loss_fused),
                               rtol=1e-5, atol=1e-6)
    assert logp.shape == (B, NUM_CLASS) and points.shape == (B, 256)

    print("KERNEL_OK")
</pallas_src>

<mosaic_0001>
module attributes {stable_mosaic.version = 11 : i64} {
  func.func @_pointnet2_fused_kernel(%arg0: i32, %arg1: i32, %arg2: memref<2x6x64xf32, #tpu.memory_space<vmem>>, %arg3: memref<2x1xi32, #tpu.memory_space<vmem>>, %arg4: memref<128x6xf32, #tpu.memory_space<vmem>>, %arg5: memref<128x128xbf16, #tpu.memory_space<vmem>>, %arg6: memref<256x128xbf16, #tpu.memory_space<vmem>>, %arg7: memref<256x128xbf16, #tpu.memory_space<vmem>>, %arg8: memref<128x128xbf16, #tpu.memory_space<vmem>>, %arg9: memref<256x3xf32, #tpu.memory_space<vmem>>, %arg10: memref<1x256xf32, #tpu.memory_space<vmem>>, %arg11: memref<2x128xf32, #tpu.memory_space<vmem>>, %arg12: memref<2x256xf32, #tpu.memory_space<vmem>>, %arg13: memref<2x1xf32, #tpu.memory_space<vmem>>, %arg14: memref<256x2xf32, #tpu.memory_space<vmem>>) attributes {dimension_semantics = [#tpu.dimension_semantics<parallel>, #tpu.dimension_semantics<arbitrary>], iteration_bounds = array<i64: 1, 1>, scalar_prefetch = 0 : i64, scratch_operands = 1 : i64, tpu.core_type = #tpu.core_type<tc>, window_params = [{transform_indices = @transform_0, window_bounds = array<i64: 2, 6, 64>}, {transform_indices = @transform_1, window_bounds = array<i64: 2, 1>}, {pipeline_mode = #tpu.pipeline_mode<synchronous>, transform_indices = @transform_2, window_bounds = array<i64: 128, 6>}, {pipeline_mode = #tpu.pipeline_mode<synchronous>, transform_indices = @transform_3, window_bounds = array<i64: 128, 128>}, {pipeline_mode = #tpu.pipeline_mode<synchronous>, transform_indices = @transform_4, window_bounds = array<i64: 256, 128>}, {pipeline_mode = #tpu.pipeline_mode<synchronous>, transform_indices = @transform_5, window_bounds = array<i64: 256, 128>}, {pipeline_mode = #tpu.pipeline_mode<synchronous>, transform_indices = @transform_6, window_bounds = array<i64: 128, 128>}, {pipeline_mode = #tpu.pipeline_mode<synchronous>, transform_indices = @transform_7, window_bounds = array<i64: 256, 3>}, {pipeline_mode = #tpu.pipeline_mode<synchronous>, transform_indices = @transform_8, window_bounds = array<i64: 1, 256>}, {transform_indices = @transform_9, window_bounds = array<i64: 2, 128>}, {transform_indices = @transform_10, window_bounds = array<i64: 2, 256>}, {transform_indices = @transform_11, window_bounds = array<i64: 2, 1>}]} {
    %c0_i32 = arith.constant 0 : i32
    %0 = arith.cmpi eq, %arg1, %c0_i32 : i32
    %1 = arith.extui %0 : i1 to i32
    %c0_i32_0 = arith.constant 0 : i32
    %2 = arith.cmpi ne, %1, %c0_i32_0 : i32
    scf.if %2 {
      %cst_37 = arith.constant 0.000000e+00 : f32
      %128 = vector.broadcast %cst_37 : f32 to vector<256x2xf32>
      %c0_38 = arith.constant 0 : index
      %c0_39 = arith.constant 0 : index
      %129 = vector.load %arg14[%c0_38, %c0_39] : memref<256x2xf32, #tpu.memory_space<vmem>>, vector<256x2xf32>
      tpu.vector_store %arg14[%c0_38, %c0_39], %128 {strides = array<i32>} : memref<256x2xf32, #tpu.memory_space<vmem>>, vector<256x2xf32>,
    } else {
    }
    %c0 = arith.constant 0 : index
    %c0_1 = arith.constant 0 : index
    %3 = vector.load %arg4[%c0, %c0_1] : memref<128x6xf32, #tpu.memory_space<vmem>>, vector<128x6xf32>
    %c0_2 = arith.constant 0 : index
    %c0_3 = arith.constant 0 : index
    %4 = vector.load %arg5[%c0_2, %c0_3] : memref<128x128xbf16, #tpu.memory_space<vmem>>, vector<128x128xbf16>
    %c0_4 = arith.constant 0 : index
    %c0_5 = arith.constant 0 : index
    %5 = vector.load %arg6[%c0_4, %c0_5] : memref<256x128xbf16, #tpu.memory_space<vmem>>, vector<256x128xbf16>
    %c0_6 = arith.constant 0 : index
    %c0_7 = arith.constant 0 : index
    %6 = vector.load %arg9[%c0_6, %c0_7] : memref<256x3xf32, #tpu.memory_space<vmem>>, vector<128x1xf32>
    %c0_8 = arith.constant 0 : index
    %c1 = arith.constant 1 : index
    %7 = vector.load %arg9[%c0_8, %c1] : memref<256x3xf32, #tpu.memory_space<vmem>>, vector<128x1xf32>
    %c0_9 = arith.constant 0 : index
    %c2 = arith.constant 2 : index
    %8 = vector.load %arg9[%c0_9, %c2] : memref<256x3xf32, #tpu.memory_space<vmem>>, vector<256x1xf32>
    %c0_10 = arith.constant 0 : index
    %c0_11 = arith.constant 0 : index
    %c0_12 = arith.constant 0 : index
    %9 = vector.load %arg2[%c0_10, %c0_11, %c0_12] : memref<2x6x64xf32, #tpu.memory_space<vmem>>, vector<1x6x64xf32>
    %10 = vector.shape_cast %9 : vector<1x6x64xf32> to vector<6x64xf32>
    %11 = vector.extract_strided_slice %3 {offsets = [0, 0], sizes = [128, 1], strides = [1, 1]} : vector<128x6xf32> to vector<128x1xf32>
    %12 = vector.extract_strided_slice %10 {offsets = [0, 0], sizes = [1, 64], strides = [1, 1]} : vector<6x64xf32> to vector<1x64xf32>
    %13 = vector.broadcast %11 : vector<128x1xf32> to vector<128x64xf32>
    %14 = vector.broadcast %12 : vector<1x64xf32> to vector<128x64xf32>
    %15 = arith.mulf %13, %14 : vector<128x64xf32>
    %16 = vector.extract_strided_slice %3 {offsets = [0, 1], sizes = [128, 1], strides = [1, 1]} : vector<128x6xf32> to vector<128x1xf32>
    %17 = vector.extract_strided_slice %10 {offsets = [1, 0], sizes = [1, 64], strides = [1, 1]} : vector<6x64xf32> to vector<1x64xf32>
    %18 = vector.broadcast %16 : vector<128x1xf32> to vector<128x64xf32>
    %19 = vector.broadcast %17 : vector<1x64xf32> to vector<128x64xf32>
    %20 = arith.mulf %18, %19 : vector<128x64xf32>
    %21 = arith.addf %15, %20 : vector<128x64xf32>
    %22 = vector.extract_strided_slice %3 {offsets = [0, 2], sizes = [128, 1], strides = [1, 1]} : vector<128x6xf32> to vector<128x1xf32>
    %23 = vector.extract_strided_slice %10 {offsets = [2, 0], sizes = [1, 64], strides = [1, 1]} : vector<6x64xf32> to vector<1x64xf32>
    %24 = vector.broadcast %22 : vector<128x1xf32> to vector<128x64xf32>
    %25 = vector.broadcast %23 : vector<1x64xf32> to vector<128x64xf32>
    %26 = arith.mulf %24, %25 : vector<128x64xf32>
    %27 = arith.addf %21, %26 : vector<128x64xf32>
    %28 = vector.extract_strided_slice %3 {offsets = [0, 3], sizes = [128, 1], strides = [1, 1]} : vector<128x6xf32> to vector<128x1xf32>
    %29 = vector.extract_strided_slice %10 {offsets = [3, 0], sizes = [1, 64], strides = [1, 1]} : vector<6x64xf32> to vector<1x64xf32>
    %30 = vector.broadcast %28 : vector<128x1xf32> to vector<128x64xf32>
    %31 = vector.broadcast %29 : vector<1x64xf32> to vector<128x64xf32>
    %32 = arith.mulf %30, %31 : vector<128x64xf32>
    %33 = arith.addf %27, %32 : vector<128x64xf32>
    %34 = vector.extract_strided_slice %3 {offsets = [0, 4], sizes = [128, 1], strides = [1, 1]} : vector<128x6xf32> to vector<128x1xf32>
    %35 = vector.extract_strided_slice %10 {offsets = [4, 0], sizes = [1, 64], strides = [1, 1]} : vector<6x64xf32> to vector<1x64xf32>
    %36 = vector.broadcast %34 : vector<128x1xf32> to vector<128x64xf32>
    %37 = vector.broadcast %35 : vector<1x64xf32> to vector<128x64xf32>
    %38 = arith.mulf %36, %37 : vector<128x64xf32>
    %39 = arith.addf %33, %38 : vector<128x64xf32>
    %40 = vector.extract_strided_slice %3 {offsets = [0, 5], sizes = [128, 1], strides = [1, 1]} : vector<128x6xf32> to vector<128x1xf32>
    %41 = vector.extract_strided_slice %10 {offsets = [5, 0], sizes = [1, 64], strides = [1, 1]} : vector<6x64xf32> to vector<1x64xf32>
    %42 = vector.broadcast %40 : vector<128x1xf32> to vector<128x64xf32>
    %43 = vector.broadcast %41 : vector<1x64xf32> to vector<128x64xf32>
    %44 = arith.mulf %42, %43 : vector<128x64xf32>
    %45 = arith.addf %39, %44 : vector<128x64xf32>
    %46 = vector.broadcast %6 : vector<128x1xf32> to vector<128x64xf32>
    %47 = arith.addf %45, %46 : vector<128x64xf32>
    %cst = arith.constant 0.000000e+00 : f32
    %48 = vector.broadcast %cst : f32 to vector<128x64xf32>
    %49 = arith.maximumf %47, %48 : vector<128x64xf32>
    %50 = arith.truncf %49 : vector<128x64xf32> to vector<128x64xbf16>
    %cst_13 = arith.constant dense<0.000000e+00> : vector<128x64xf32>
    %51 = tpu.matmul %4, %50, %cst_13 {dimension_numbers = #tpu.dot_dimension_numbers<[1], [0], [0], [1], [0, 0, 1, 1], [], []>} : vector<128x128xbf16>, vector<128x64xbf16>, vector<128x64xf32> -> vector<128x64xf32>
    %52 = vector.broadcast %7 : vector<128x1xf32> to vector<128x64xf32>
    %53 = arith.addf %51, %52 : vector<128x64xf32>
    %cst_14 = arith.constant 0.000000e+00 : f32
    %54 = vector.broadcast %cst_14 : f32 to vector<128x64xf32>
    %55 = arith.maximumf %53, %54 : vector<128x64xf32>
    %56 = arith.truncf %55 : vector<128x64xf32> to vector<128x64xbf16>
    %cst_15 = arith.constant dense<0.000000e+00> : vector<256x64xf32>
    %57 = tpu.matmul %5, %56, %cst_15 {dimension_numbers = #tpu.dot_dimension_numbers<[1], [0], [0], [1], [0, 0, 1, 1], [], []>} : vector<256x128xbf16>, vector<128x64xbf16>, vector<256x64xf32> -> vector<256x64xf32>
    %58 = vector.broadcast %8 : vector<256x1xf32> to vector<256x64xf32>
    %59 = arith.addf %57, %58 : vector<256x64xf32>
    %cst_16 = arith.constant 0.000000e+00 : f32
    %60 = vector.broadcast %cst_16 : f32 to vector<256x64xf32>
    %61 = arith.maximumf %59, %60 : vector<256x64xf32>
    %cst_17 = arith.constant dense<0xFF800000> : vector<256xf32>
    %62 = vector.multi_reduction <maximumf>, %61, %cst_17 [1] : vector<256x64xf32> to vector<256xf32>
    %63 = vector.shape_cast %62 : vector<256xf32> to vector<256x1xf32>
    %c0_18 = arith.constant 0 : index
    %c0_19 = arith.constant 0 : index
    %64 = vector.load %arg14[%c0_18, %c0_19] : memref<256x2xf32, #tpu.memory_space<vmem>>, vector<256x1xf32>
    %65 = arith.maximumf %64, %63 : vector<256x1xf32>
    %c0_20 = arith.constant 0 : index
    %c0_21 = arith.constant 0 : index
    %66 = vector.load %arg14[%c0_20, %c0_21] : memref<256x2xf32, #tpu.memory_space<vmem>>, vector<256x1xf32>
    tpu.vector_store %arg14[%c0_20, %c0_21], %65 {strides = array<i32>} : memref<256x2xf32, #tpu.memory_space<vmem>>, vector<256x1xf32>,
    %c1_22 = arith.constant 1 : index
    %c0_23 = arith.constant 0 : index
    %c0_24 = arith.constant 0 : index
    %67 = vector.load %arg2[%c1_22, %c0_23, %c0_24] : memref<2x6x64xf32, #tpu.memory_space<vmem>>, vector<1x6x64xf32>
    %68 = vector.shape_cast %67 : vector<1x6x64xf32> to vector<6x64xf32>
    %69 = vector.extract_strided_slice %3 {offsets = [0, 0], sizes = [128, 1], strides = [1, 1]} : vector<128x6xf32> to vector<128x1xf32>
    %70 = vector.extract_strided_slice %68 {offsets = [0, 0], sizes = [1, 64], strides = [1, 1]} : vector<6x64xf32> to vector<1x64xf32>
    %71 = vector.broadcast %69 : vector<128x1xf32> to vector<128x64xf32>
    %72 = vector.broadcast %70 : vector<1x64xf32> to vector<128x64xf32>
    %73 = arith.mulf %71, %72 : vector<128x64xf32>
    %74 = vector.extract_strided_slice %3 {offsets = [0, 1], sizes = [128, 1], strides = [1, 1]} : vector<128x6xf32> to vector<128x1xf32>
    %75 = vector.extract_strided_slice %68 {offsets = [1, 0], sizes = [1, 64], strides = [1, 1]} : vector<6x64xf32> to vector<1x64xf32>
    %76 = vector.broadcast %74 : vector<128x1xf32> to vector<128x64xf32>
    %77 = vector.broadcast %75 : vector<1x64xf32> to vector<128x64xf32>
    %78 = arith.mulf %76, %77 : vector<128x64xf32>
    %79 = arith.addf %73, %78 : vector<128x64xf32>
    %80 = vector.extract_strided_slice %3 {offsets = [0, 2], sizes = [128, 1], strides = [1, 1]} : vector<128x6xf32> to vector<128x1xf32>
    %81 = vector.extract_strided_slice %68 {offsets = [2, 0], sizes = [1, 64], strides = [1, 1]} : vector<6x64xf32> to vector<1x64xf32>
    %82 = vector.broadcast %80 : vector<128x1xf32> to vector<128x64xf32>
    %83 = vector.broadcast %81 : vector<1x64xf32> to vector<128x64xf32>
    %84 = arith.mulf %82, %83 : vector<128x64xf32>
    %85 = arith.addf %79, %84 : vector<128x64xf32>
    %86 = vector.extract_strided_slice %3 {offsets = [0, 3], sizes = [128, 1], strides = [1, 1]} : vector<128x6xf32> to vector<128x1xf32>
    %87 = vector.extract_strided_slice %68 {offsets = [3, 0], sizes = [1, 64], strides = [1, 1]} : vector<6x64xf32> to vector<1x64xf32>
    %88 = vector.broadcast %86 : vector<128x1xf32> to vector<128x64xf32>
    %89 = vector.broadcast %87 : vector<1x64xf32> to vector<128x64xf32>
    %90 = arith.mulf %88, %89 : vector<128x64xf32>
    %91 = arith.addf %85, %90 : vector<128x64xf32>
    %92 = vector.extract_strided_slice %3 {offsets = [0, 4], sizes = [128, 1], strides = [1, 1]} : vector<128x6xf32> to vector<128x1xf32>
    %93 = vector.extract_strided_slice %68 {offsets = [4, 0], sizes = [1, 64], strides = [1, 1]} : vector<6x64xf32> to vector<1x64xf32>
    %94 = vector.broadcast %92 : vector<128x1xf32> to vector<128x64xf32>
    %95 = vector.broadcast %93 : vector<1x64xf32> to vector<128x64xf32>
    %96 = arith.mulf %94, %95 : vector<128x64xf32>
    %97 = arith.addf %91, %96 : vector<128x64xf32>
    %98 = vector.extract_strided_slice %3 {offsets = [0, 5], sizes = [128, 1], strides = [1, 1]} : vector<128x6xf32> to vector<128x1xf32>
    %99 = vector.extract_strided_slice %68 {offsets = [5, 0], sizes = [1, 64], strides = [1, 1]} : vector<6x64xf32> to vector<1x64xf32>
    %100 = vector.broadcast %98 : vector<128x1xf32> to vector<128x64xf32>
    %101 = vector.broadcast %99 : vector<1x64xf32> to vector<128x64xf32>
    %102 = arith.mulf %100, %101 : vector<128x64xf32>
    %103 = arith.addf %97, %102 : vector<128x64xf32>
    %104 = vector.broadcast %6 : vector<128x1xf32> to vector<128x64xf32>
    %105 = arith.addf %103, %104 : vector<128x64xf32>
    %cst_25 = arith.constant 0.000000e+00 : f32
    %106 = vector.broadcast %cst_25 : f32 to vector<128x64xf32>
    %107 = arith.maximumf %105, %106 : vector<128x64xf32>
    %108 = arith.truncf %107 : vector<128x64xf32> to vector<128x64xbf16>
    %cst_26 = arith.constant dense<0.000000e+00> : vector<128x64xf32>
    %109 = tpu.matmul %4, %108, %cst_26 {dimension_numbers = #tpu.dot_dimension_numbers<[1], [0], [0], [1], [0, 0, 1, 1], [], []>} : vector<128x128xbf16>, vector<128x64xbf16>, vector<128x64xf32> -> vector<128x64xf32>
    %110 = vector.broadcast %7 : vector<128x1xf32> to vector<128x64xf32>
    %111 = arith.addf %109, %110 : vector<128x64xf32>
    %cst_27 = arith.constant 0.000000e+00 : f32
    %112 = vector.broadcast %cst_27 : f32 to vector<128x64xf32>
    %113 = arith.maximumf %111, %112 : vector<128x64xf32>
    %114 = arith.truncf %113 : vector<128x64xf32> to vector<128x64xbf16>
    %cst_28 = arith.constant dense<0.000000e+00> : vector<256x64xf32>
    %115 = tpu.matmul %5, %114, %cst_28 {dimension_numbers = #tpu.dot_dimension_numbers<[1], [0], [0], [1], [0, 0, 1, 1], [], []>} : vector<256x128xbf16>, vector<128x64xbf16>, vector<256x64xf32> -> vector<256x64xf32>
    %116 = vector.broadcast %8 : vector<256x1xf32> to vector<256x64xf32>
    %117 = arith.addf %115, %116 : vector<256x64xf32>
    %cst_29 = arith.constant 0.000000e+00 : f32
    %118 = vector.broadcast %cst_29 : f32 to vector<256x64xf32>
    %119 = arith.maximumf %117, %118 : vector<256x64xf32>
    %cst_30 = arith.constant dense<0xFF800000> : vector<256xf32>
    %120 = vector.multi_reduction <maximumf>, %119, %cst_30 [1] : vector<256x64xf32> to vector<256xf32>
    %121 = vector.shape_cast %120 : vector<256xf32> to vector<256x1xf32>
    %c0_31 = arith.constant 0 : index
    %c1_32 = arith.constant 1 : index
    %122 = vector.load %arg14[%c0_31, %c1_32] : memref<256x2xf32, #tpu.memory_space<vmem>>, vector<256x1xf32>
    %123 = arith.maximumf %122, %121 : vector<256x1xf32>
    %c0_33 = arith.constant 0 : index
    %c1_34 = arith.constant 1 : index
    %124 = vector.load %arg14[%c0_33, %c1_34] : memref<256x2xf32, #tpu.memory_space<vmem>>, vector<256x1xf32>
    tpu.vector_store %arg14[%c0_33, %c1_34], %123 {strides = array<i32>} : memref<256x2xf32, #tpu.memory_space<vmem>>, vector<256x1xf32>,
    %c0_i32_35 = arith.constant 0 : i32
    %125 = arith.cmpi eq, %arg1, %c0_i32_35 : i32
    %126 = arith.extui %125 : i1 to i32
    %c0_i32_36 = arith.constant 0 : i32
    %127 = arith.cmpi ne, %126, %c0_i32_36 : i32
    scf.if %127 {
      %c0_37 = arith.constant 0 : index
      %c0_38 = arith.constant 0 : index
      %128 = vector.load %arg14[%c0_37, %c0_38] : memref<256x2xf32, #tpu.memory_space<vmem>>, vector<256x2xf32>
      %129 = tpu.transpose %128, [1, 0] : vector<256x2xf32> -> vector<2x256xf32>
      %c0_39 = arith.constant 0 : index
      %c0_40 = arith.constant 0 : index
      %130 = vector.load %arg12[%c0_39, %c0_40] : memref<2x256xf32, #tpu.memory_space<vmem>>, vector<2x256xf32>
      tpu.vector_store %arg12[%c0_39, %c0_40], %129 {strides = array<i32>} : memref<2x256xf32, #tpu.memory_space<vmem>>, vector<2x256xf32>,
      %c0_41 = arith.constant 0 : index
      %c0_42 = arith.constant 0 : index
      %131 = vector.load %arg10[%c0_41, %c0_42] : memref<1x256xf32, #tpu.memory_space<vmem>>, vector<1x128xf32>
      %c0_43 = arith.constant 0 : index
      %c128 = arith.constant 128 : index
      %132 = vector.load %arg10[%c0_43, %c128] : memref<1x256xf32, #tpu.memory_space<vmem>>, vector<1x128xf32>
      %133 = arith.truncf %129 : vector<2x256xf32> to vector<2x256xbf16>
      %c0_44 = arith.constant 0 : index
      %c0_45 = arith.constant 0 : index
      %134 = vector.load %arg7[%c0_44, %c0_45] : memref<256x128xbf16, #tpu.memory_space<vmem>>, vector<256x128xbf16>
      %cst_46 = arith.constant dense<0.000000e+00> : vector<2x128xf32>
      %135 = tpu.matmul %133, %134, %cst_46 {dimension_numbers = #tpu.dot_dimension_numbers<[1], [0], [0], [1], [0, 0, 1, 1], [], []>} : vector<2x256xbf16>, vector<256x128xbf16>, vector<2x128xf32> -> vector<2x128xf32>
      %136 = vector.broadcast %131 : vector<1x128xf32> to vector<2x128xf32>
      %137 = arith.addf %135, %136 : vector<2x128xf32>
      %cst_47 = arith.constant 0.000000e+00 : f32
      %138 = vector.broadcast %cst_47 : f32 to vector<2x128xf32>
      %139 = arith.maximumf %137, %138 : vector<2x128xf32>
      %140 = arith.truncf %139 : vector<2x128xf32> to vector<2x128xbf16>
      %c0_48 = arith.constant 0 : index
      %c0_49 = arith.constant 0 : index
      %141 = vector.load %arg8[%c0_48, %c0_49] : memref<128x128xbf16, #tpu.memory_space<vmem>>, vector<128x128xbf16>
      %cst_50 = arith.constant dense<0.000000e+00> : vector<2x128xf32>
      %142 = tpu.matmul %140, %141, %cst_50 {dimension_numbers = #tpu.dot_dimension_numbers<[1], [0], [0], [1], [0, 0, 1, 1], [], []>} : vector<2x128xbf16>, vector<128x128xbf16>, vector<2x128xf32> -> vector<2x128xf32>
      %143 = vector.broadcast %132 : vector<1x128xf32> to vector<2x128xf32>
      %144 = arith.addf %142, %143 : vector<2x128xf32>
      %cst_51 = arith.constant dense<0xFF800000> : vector<2xf32>
      %145 = vector.multi_reduction <maximumf>, %144, %cst_51 [1] : vector<2x128xf32> to vector<2xf32>
      %146 = vector.shape_cast %145 : vector<2xf32> to vector<2x1xf32>
      %147 = vector.broadcast %146 : vector<2x1xf32> to vector<2x128xf32>
      %148 = arith.subf %144, %147 : vector<2x128xf32>
      %149 = math.exp %148 : vector<2x128xf32>
      %cst_52 = arith.constant dense<0.000000e+00> : vector<2xf32>
      %150 = vector.multi_reduction <add>, %149, %cst_52 [1] : vector<2x128xf32> to vector<2xf32>
      %151 = vector.shape_cast %150 : vector<2xf32> to vector<2x1xf32>
      %152 = math.log %151 : vector<2x1xf32>
      %153 = vector.broadcast %146 : vector<2x1xf32> to vector<2x128xf32>
      %154 = arith.subf %144, %153 : vector<2x128xf32>
      %155 = vector.broadcast %152 : vector<2x1xf32> to vector<2x128xf32>
      %156 = arith.subf %154, %155 : vector<2x128xf32>
      %c0_53 = arith.constant 0 : index
      %c0_54 = arith.constant 0 : index
      %157 = vector.load %arg11[%c0_53, %c0_54] : memref<2x128xf32, #tpu.memory_space<vmem>>, vector<2x128xf32>
      tpu.vector_store %arg11[%c0_53, %c0_54], %156 {strides = array<i32>} : memref<2x128xf32, #tpu.memory_space<vmem>>, vector<2x128xf32>,
      %c0_55 = arith.constant 0 : index
      %c0_56 = arith.constant 0 : index
      %158 = vector.load %arg3[%c0_55, %c0_56] : memref<2x1xi32, #tpu.memory_space<vmem>>, vector<2x1xi32>
      %159 = tpu.iota {dimensions = array<i32: 1>} : vector<2x128xi32>
      %160 = vector.broadcast %158 : vector<2x1xi32> to vector<2x128xi32>
      %161 = arith.cmpi eq, %159, %160 : vector<2x128xi32>
      %cst_57 = arith.constant 0.000000e+00 : f32
      %162 = vector.broadcast %cst_57 : f32 to vector<2x128xf32>
      %163 = arith.select %161, %156, %162 : vector<2x128xi1>, vector<2x128xf32>
      %cst_58 = arith.constant dense<0.000000e+00> : vector<2xf32>
      %164 = vector.multi_reduction <add>, %163, %cst_58 [1] : vector<2x128xf32> to vector<2xf32>
      %165 = vector.shape_cast %164 : vector<2xf32> to vector<2x1xf32>
      %cst_59 = arith.constant 0.000000e+00 : f32
      %166 = vector.broadcast %cst_59 : f32 to vector<2x1xf32>
      %167 = arith.subf %166, %165 : vector<2x1xf32>
      %c0_60 = arith.constant 0 : index
      %c0_61 = arith.constant 0 : index
      %168 = vector.load %arg13[%c0_60, %c0_61] : memref<2x1xf32, #tpu.memory_space<vmem>>, vector<2x1xf32>
      tpu.vector_store %arg13[%c0_60, %c0_61], %167 {strides = array<i32>} : memref<2x1xf32, #tpu.memory_space<vmem>>, vector<2x1xf32>,
    } else {
    }
    return
  }
  func.func @transform_0(%arg0: i32, %arg1: i32) -> (i32, i32, i32) {
    %c0_i32 = arith.constant 0 : i32
    %c0_i32_0 = arith.constant 0 : i32
    return %arg0, %c0_i32, %arg1 : i32, i32, i32
  }
  func.func @transform_1(%arg0: i32, %arg1: i32) -> (i32, i32) {
    %c0_i32 = arith.constant 0 : i32
    %c0_i32_0 = arith.constant 0 : i32
    return %arg0, %c0_i32 : i32, i32
  }
  func.func @transform_2(%arg0: i32, %arg1: i32) -> (i32, i32) {
    %c0_i32 = arith.constant 0 : i32
    %c0_i32_0 = arith.constant 0 : i32
    %c0_i32_1 = arith.constant 0 : i32
    return %c0_i32, %c0_i32_0 : i32, i32
  }
  func.func @transform_3(%arg0: i32, %arg1: i32) -> (i32, i32) {
    %c0_i32 = arith.constant 0 : i32
    %c0_i32_0 = arith.constant 0 : i32
    %c0_i32_1 = arith.constant 0 : i32
    return %c0_i32, %c0_i32_0 : i32, i32
  }
  func.func @transform_4(%arg0: i32, %arg1: i32) -> (i32, i32) {
    %c0_i32 = arith.constant 0 : i32
    %c0_i32_0 = arith.constant 0 : i32
    %c0_i32_1 = arith.constant 0 : i32
    return %c0_i32, %c0_i32_0 : i32, i32
  }
  func.func @transform_5(%arg0: i32, %arg1: i32) -> (i32, i32) {
    %c0_i32 = arith.constant 0 : i32
    %c0_i32_0 = arith.constant 0 : i32
    %c0_i32_1 = arith.constant 0 : i32
    return %c0_i32, %c0_i32_0 : i32, i32
  }
  func.func @transform_6(%arg0: i32, %arg1: i32) -> (i32, i32) {
    %c0_i32 = arith.constant 0 : i32
    %c0_i32_0 = arith.constant 0 : i32
    %c0_i32_1 = arith.constant 0 : i32
    return %c0_i32, %c0_i32_0 : i32, i32
  }
  func.func @transform_7(%arg0: i32, %arg1: i32) -> (i32, i32) {
    %c0_i32 = arith.constant 0 : i32
    %c0_i32_0 = arith.constant 0 : i32
    %c0_i32_1 = arith.constant 0 : i32
    return %c0_i32, %c0_i32_0 : i32, i32
  }
  func.func @transform_8(%arg0: i32, %arg1: i32) -> (i32, i32) {
    %c0_i32 = arith.constant 0 : i32
    %c0_i32_0 = arith.constant 0 : i32
    %c0_i32_1 = arith.constant 0 : i32
    return %c0_i32, %c0_i32_0 : i32, i32
  }
  func.func @transform_9(%arg0: i32, %arg1: i32) -> (i32, i32) {
    %c0_i32 = arith.constant 0 : i32
    %c0_i32_0 = arith.constant 0 : i32
    return %arg0, %c0_i32 : i32, i32
  }
  func.func @transform_10(%arg0: i32, %arg1: i32) -> (i32, i32) {
    %c0_i32 = arith.constant 0 : i32
    %c0_i32_0 = arith.constant 0 : i32
    return %arg0, %c0_i32 : i32, i32
  }
  func.func @transform_11(%arg0: i32, %arg1: i32) -> (i32, i32) {
    %c0_i32 = arith.constant 0 : i32
    %c0_i32_0 = arith.constant 0 : i32
    return %arg0, %c0_i32 : i32, i32
  }
}

</mosaic_0001>

<llo_original>
// kernel: tpu_custom_call.1
$region0: #{tpu_custom_call.1}
  #allocation0 [shape = 'u32[]', space=smem, size = 0x4, offset = 0x4, fixed_abs, tag = 'smem constant byte address 0x4 - core index']
  #allocation1 [shape = 'u32[144,128]{1,0:T(1,128)}', space=vmem, size = 0x12000, scoped, tag = 'internal scratch']
  #allocation2 [shape = 'f32[256,2]{1,0:T(8,128)}', space=vmem, size = 0x20000, scoped, tag = 'scratch operand']
  %s0 = inlined_call_operand.vmem [shape: f32[2,6,64], index: 0, kind: input, shape index: {}]
  %s1 = inlined_call_operand.vmem [shape: s32[2,1], index: 1, kind: input, shape index: {}]
  %s2 = inlined_call_operand.vmem [shape: f32[128,6], index: 2, kind: input, shape index: {}]
  %s3 = inlined_call_operand.vmem [shape: bf16[128,128], index: 3, kind: input, shape index: {}]
  %s4 = inlined_call_operand.vmem [shape: bf16[256,128], index: 4, kind: input, shape index: {}]
  %s5 = inlined_call_operand.vmem [shape: bf16[256,128], index: 5, kind: input, shape index: {}]
  %s6 = inlined_call_operand.vmem [shape: bf16[128,128], index: 6, kind: input, shape index: {}]
  %s7 = inlined_call_operand.vmem [shape: f32[256,3], index: 7, kind: input, shape index: {}]
  %s8 = inlined_call_operand.vmem [shape: f32[1,256], index: 8, kind: input, shape index: {}]
  %s9 = inlined_call_operand.hbm [shape: f32[2,128], index: 9, kind: output, shape index: {0}]
  %s10 = inlined_call_operand.hbm [shape: f32[2,256], index: 10, kind: output, shape index: {1}]
  %s11 = inlined_call_operand.vmem [shape: f32[2,1], index: 11, kind: output, shape index: {2}]
  %12 = xla_tuple %s9, %s10, %s11
  %s13 = sld [smem:[#allocation0]]
  $region70: #{tpu_custom_call.1} parent=0
    _
  %s15 = ssub.s32 1, %s13
  %s16 = scalar_select 0, %s15, %s13
  $region1: #{tpu_custom_call.1} parent=0
    #allocation3 [shape = 'u8[1024]{0}', space=vmem, size = 0x400, scoped, tag = 'output window, operand 0, single buffered']
    #allocation4 [shape = 's32[1]{0}', space=sflag, size = 0x4, scoped, tag = 'scoped memory for tpu_custom_call.1']
    #allocation5 [shape = 'u8[2048]{0}', space=vmem, size = 0x800, scoped, tag = 'output window, operand 1, single buffered']
    #allocation6 [shape = 's32[1]{0}', space=sflag, size = 0x4, scoped, tag = 'scoped memory for tpu_custom_call.1']
    %17 = vsyncpa [#allocation4], 0
    %18 = vsyncpa [#allocation6], 0
    // Predicated region
    $region2: #{tpu_custom_call.1} parent=1 // pred_check
      _
    $region3: #{tpu_custom_call.1} parent=1 // pred_check_branch
      %20 = sbr.rel (0) target = $region5
    $region4: #{tpu_custom_call.1} parent=1 // pred_region
      _
    $region5: #{tpu_custom_call.1} parent=1 // pred_fallthru
      _
    // Predicated region
    $region6: #{tpu_custom_call.1} parent=1 // pred_check
      _
    $region7: #{tpu_custom_call.1} parent=1 // pred_check_branch
      %22 = sbr.rel (0) target = $region9
    $region8: #{tpu_custom_call.1} parent=1 // pred_region
      _
    $region9: #{tpu_custom_call.1} parent=1 // pred_fallthru
      _
    // Predicated region
    $region10: #{tpu_custom_call.1} parent=1 // pred_check
      _
    $region11: #{tpu_custom_call.1} parent=1 // pred_check_branch
      %24 = sbr.rel (0) target = $region13
    $region12: #{tpu_custom_call.1} parent=1 // pred_region
      _
    $region13: #{tpu_custom_call.1} parent=1 // pred_fallthru
      _
    // Predicated region
    $region14: #{tpu_custom_call.1} parent=1 // pred_check
      _
    $region15: #{tpu_custom_call.1} parent=1 // pred_check_branch
      %26 = sbr.rel (0) target = $region17
    $region16: #{tpu_custom_call.1} parent=1 // pred_region
      _
    $region17: #{tpu_custom_call.1} parent=1 // pred_fallthru
      _
    // Predicated region
    $region18: #{tpu_custom_call.1} parent=1 // pred_check
      _
    $region19: #{tpu_custom_call.1} parent=1 // pred_check_branch
      %28 = sbr.rel (0) target = $region21
    $region20: #{tpu_custom_call.1} parent=1 // pred_region
      _
    $region21: #{tpu_custom_call.1} parent=1 // pred_fallthru
      _
    // Predicated region
    $region22: #{tpu_custom_call.1} parent=1 // pred_check
      _
    $region23: #{tpu_custom_call.1} parent=1 // pred_check_branch
      %30 = sbr.rel (0) target = $region25
    $region24: #{tpu_custom_call.1} parent=1 // pred_region
      _
    $region25: #{tpu_custom_call.1} parent=1 // pred_fallthru
      _
    // Predicated region
    $region26: #{tpu_custom_call.1} parent=1 // pred_check
      _
    $region27: #{tpu_custom_call.1} parent=1 // pred_check_branch
      %32 = sbr.rel (0) target = $region29
    $region28: #{tpu_custom_call.1} parent=1 // pred_region
      _
    $region29: #{tpu_custom_call.1} parent=1 // pred_fallthru
      _
    // Predicated region
    $region30: #{tpu_custom_call.1} parent=1 // pred_check
      _
    $region31: #{tpu_custom_call.1} parent=1 // pred_check_branch
      %34 = sbr.rel (0) target = $region33
    $region32: #{tpu_custom_call.1} parent=1 // pred_region
      _
    $region33: #{tpu_custom_call.1} parent=1 // pred_fallthru
      _
    // Predicated region
    $region34: #{tpu_custom_call.1} parent=1 // pred_check
      _
    $region35: #{tpu_custom_call.1} parent=1 // pred_check_branch
      %36 = sbr.rel (0) target = $region37
    $region36: #{tpu_custom_call.1} parent=1 // pred_region
      _
    $region37: #{tpu_custom_call.1} parent=1 // pred_fallthru
      _
    %p38 = scmp.eq.s32.totalorder 0, 0
    // Predicated region
    $region38: #{tpu_custom_call.1} parent=1 // pred_check
      %p39 = pneg %p38
    $region39: #{tpu_custom_call.1} parent=1 // pred_check_branch
      %41 = sbr.rel (%p39) target = $region41
    $region40: #{tpu_custom_call.1} parent=1 // pred_region
      %vm42 = vcmask 15360
      %43 = vst.msk [vmem:[#allocation2] sm:$0xff] %vm42, 0.0
      %44 = vst.msk [vmem:[#allocation2 + $0x8] sm:$0xff] %vm42, 0.0
      %45 = vst.msk [vmem:[#allocation2 + $0x10] sm:$0xff] %vm42, 0.0
      %46 = vst.msk [vmem:[#allocation2 + $0x18] sm:$0xff] %vm42, 0.0
      %47 = vst.msk [vmem:[#allocation2 + $0x20] sm:$0xff] %vm42, 0.0
      %48 = vst.msk [vmem:[#allocation2 + $0x28] sm:$0xff] %vm42, 0.0
      %49 = vst.msk [vmem:[#allocation2 + $0x30] sm:$0xff] %vm42, 0.0
      %50 = vst.msk [vmem:[#allocation2 + $0x38] sm:$0xff] %vm42, 0.0
      %51 = vst.msk [vmem:[#allocation2 + $0x40] sm:$0xff] %vm42, 0.0
      %52 = vst.msk [vmem:[#allocation2 + $0x48] sm:$0xff] %vm42, 0.0
      %53 = vst.msk [vmem:[#allocation2 + $0x50] sm:$0xff] %vm42, 0.0
      %54 = vst.msk [vmem:[#allocation2 + $0x58] sm:$0xff] %vm42, 0.0
      %55 = vst.msk [vmem:[#allocation2 + $0x60] sm:$0xff] %vm42, 0.0
      %56 = vst.msk [vmem:[#allocation2 + $0x68] sm:$0xff] %vm42, 0.0
      %57 = vst.msk [vmem:[#allocation2 + $0x70] sm:$0xff] %vm42, 0.0
      %58 = vst.msk [vmem:[#allocation2 + $0x78] sm:$0xff] %vm42, 0.0
      %59 = vst.msk [vmem:[#allocation2 + $0x80] sm:$0xff] %vm42, 0.0
      %60 = vst.msk [vmem:[#allocation2 + $0x88] sm:$0xff] %vm42, 0.0
      %61 = vst.msk [vmem:[#allocation2 + $0x90] sm:$0xff] %vm42, 0.0
      %62 = vst.msk [vmem:[#allocation2 + $0x98] sm:$0xff] %vm42, 0.0
      %63 = vst.msk [vmem:[#allocation2 + $0xa0] sm:$0xff] %vm42, 0.0
      %64 = vst.msk [vmem:[#allocation2 + $0xa8] sm:$0xff] %vm42, 0.0
      %65 = vst.msk [vmem:[#allocation2 + $0xb0] sm:$0xff] %vm42, 0.0
      %66 = vst.msk [vmem:[#allocation2 + $0xb8] sm:$0xff] %vm42, 0.0
      %67 = vst.msk [vmem:[#allocation2 + $0xc0] sm:$0xff] %vm42, 0.0
      %68 = vst.msk [vmem:[#allocation2 + $0xc8] sm:$0xff] %vm42, 0.0
      %69 = vst.msk [vmem:[#allocation2 + $0xd0] sm:$0xff] %vm42, 0.0
      %70 = vst.msk [vmem:[#allocation2 + $0xd8] sm:$0xff] %vm42, 0.0
      %71 = vst.msk [vmem:[#allocation2 + $0xe0] sm:$0xff] %vm42, 0.0
      %72 = vst.msk [vmem:[#allocation2 + $0xe8] sm:$0xff] %vm42, 0.0
      %73 = vst.msk [vmem:[#allocation2 + $0xf0] sm:$0xff] %vm42, 0.0
      %74 = vst.msk [vmem:[#allocation2 + $0xf8] sm:$0xff] %vm42, 0.0
    $region41: #{tpu_custom_call.1} parent=1 // pred_fallthru
      _
    %v75 = vld [vmem:[%s2] sm:$0xff]
    %v76 = vld [vmem:[%s2 + $0x8] sm:$0xff]
    %v77 = vld [vmem:[%s2 + $0x10] sm:$0xff]
    %v78 = vld [vmem:[%s2 + $0x18] sm:$0xff]
    %v79 = vld [vmem:[%s2 + $0x20] sm:$0xff]
    %v80 = vld [vmem:[%s2 + $0x28] sm:$0xff]
    %v81 = vld [vmem:[%s2 + $0x30] sm:$0xff]
    %v82 = vld [vmem:[%s2 + $0x38] sm:$0xff]
    %v83 = vld [vmem:[%s2 + $0x40] sm:$0xff]
    %v84 = vld [vmem:[%s2 + $0x48] sm:$0xff]
    %v85 = vld [vmem:[%s2 + $0x50] sm:$0xff]
    %v86 = vld [vmem:[%s2 + $0x58] sm:$0xff]
    %v87 = vld [vmem:[%s2 + $0x60] sm:$0xff]
    %v88 = vld [vmem:[%s2 + $0x68] sm:$0xff]
    %v89 = vld [vmem:[%s2 + $0x70] sm:$0xff]
    %v90 = vld [vmem:[%s2 + $0x78] sm:$0xff]
    %v91 = vld [vmem:[%s3] sm:$0xf]
    %v92 = vld [vmem:[%s3 + $0x4] sm:$0xf]
    %v93 = vld [vmem:[%s3 + $0x8] sm:$0xf]
    %v94 = vld [vmem:[%s3 + $0xc] sm:$0xf]
    %v95 = vld [vmem:[%s3 + $0x10] sm:$0xf]
    %v96 = vld [vmem:[%s3 + $0x14] sm:$0xf]
    %v97 = vld [vmem:[%s3 + $0x18] sm:$0xf]
    %v98 = vld [vmem:[%s3 + $0x1c] sm:$0xf]
    %v99 = vld [vmem:[%s3 + $0x20] sm:$0xf]
    %v100 = vld [vmem:[%s3 + $0x24] sm:$0xf]
    %v101 = vld [vmem:[%s3 + $0x28] sm:$0xf]
    %v102 = vld [vmem:[%s3 + $0x2c] sm:$0xf]
    %v103 = vld [vmem:[%s3 + $0x30] sm:$0xf]
    %v104 = vld [vmem:[%s3 + $0x34] sm:$0xf]
    %v105 = vld [vmem:[%s3 + $0x38] sm:$0xf]
    %v106 = vld [vmem:[%s3 + $0x3c] sm:$0xf]
    %v107 = vld [vmem:[%s4] sm:$0xf]
    %v108 = vld [vmem:[%s4 + $0x4] sm:$0xf]
    %v109 = vld [vmem:[%s4 + $0x8] sm:$0xf]
    %v110 = vld [vmem:[%s4 + $0xc] sm:$0xf]
    %v111 = vld [vmem:[%s4 + $0x10] sm:$0xf]
    %v112 = vld [vmem:[%s4 + $0x14] sm:$0xf]
    %v113 = vld [vmem:[%s4 + $0x18] sm:$0xf]
    %v114 = vld [vmem:[%s4 + $0x1c] sm:$0xf]
    %v115 = vld [vmem:[%s4 + $0x20] sm:$0xf]
    %v116 = vld [vmem:[%s4 + $0x24] sm:$0xf]
    %v117 = vld [vmem:[%s4 + $0x28] sm:$0xf]
    %v118 = vld [vmem:[%s4 + $0x2c] sm:$0xf]
    %v119 = vld [vmem:[%s4 + $0x30] sm:$0xf]
    %v120 = vld [vmem:[%s4 + $0x34] sm:$0xf]
    %v121 = vld [vmem:[%s4 + $0x38] sm:$0xf]
    %v122 = vld [vmem:[%s4 + $0x3c] sm:$0xf]
    %v123 = vld [vmem:[%s4 + $0x40] sm:$0xf]
    %v124 = vld [vmem:[%s4 + $0x44] sm:$0xf]
    %v125 = vld [vmem:[%s4 + $0x48] sm:$0xf]
    %v126 = vld [vmem:[%s4 + $0x4c] sm:$0xf]
    %v127 = vld [vmem:[%s4 + $0x50] sm:$0xf]
    %v128 = vld [vmem:[%s4 + $0x54] sm:$0xf]
    %v129 = vld [vmem:[%s4 + $0x58] sm:$0xf]
    %v130 = vld [vmem:[%s4 + $0x5c] sm:$0xf]
    %v131 = vld [vmem:[%s4 + $0x60] sm:$0xf]
    %v132 = vld [vmem:[%s4 + $0x64] sm:$0xf]
    %v133 = vld [vmem:[%s4 + $0x68] sm:$0xf]
    %v134 = vld [vmem:[%s4 + $0x6c] sm:$0xf]
    %v135 = vld [vmem:[%s4 + $0x70] sm:$0xf]
    %v136 = vld [vmem:[%s4 + $0x74] sm:$0xf]
    %v137 = vld [vmem:[%s4 + $0x78] sm:$0xf]
    %v138 = vld [vmem:[%s4 + $0x7c] sm:$0xf]
    %v139 = vld [vmem:[%s7] sm:$0xff]
    %v140 = vld [vmem:[%s7 + $0x8] sm:$0xff]
    %v141 = vld [vmem:[%s7 + $0x10] sm:$0xff]
    %v142 = vld [vmem:[%s7 + $0x18] sm:$0xff]
    %v143 = vld [vmem:[%s7 + $0x20] sm:$0xff]
    %v144 = vld [vmem:[%s7 + $0x28] sm:$0xff]
    %v145 = vld [vmem:[%s7 + $0x30] sm:$0xff]
    %v146 = vld [vmem:[%s7 + $0x38] sm:$0xff]
    %v147 = vld [vmem:[%s7 + $0x40] sm:$0xff]
    %v148 = vld [vmem:[%s7 + $0x48] sm:$0xff]
    %v149 = vld [vmem:[%s7 + $0x50] sm:$0xff]
    %v150 = vld [vmem:[%s7 + $0x58] sm:$0xff]
    %v151 = vld [vmem:[%s7 + $0x60] sm:$0xff]
    %v152 = vld [vmem:[%s7 + $0x68] sm:$0xff]
    %v153 = vld [vmem:[%s7 + $0x70] sm:$0xff]
    %v154 = vld [vmem:[%s7 + $0x78] sm:$0xff]
    %v155 = vld [vmem:[%s7 + $0x80] sm:$0xff]
    %v156 = vld [vmem:[%s7 + $0x88] sm:$0xff]
    %v157 = vld [vmem:[%s7 + $0x90] sm:$0xff]
    %v158 = vld [vmem:[%s7 + $0x98] sm:$0xff]
    %v159 = vld [vmem:[%s7 + $0xa0] sm:$0xff]
    %v160 = vld [vmem:[%s7 + $0xa8] sm:$0xff]
    %v161 = vld [vmem:[%s7 + $0xb0] sm:$0xff]
    %v162 = vld [vmem:[%s7 + $0xb8] sm:$0xff]
    %v163 = vld [vmem:[%s7 + $0xc0] sm:$0xff]
    %v164 = vld [vmem:[%s7 + $0xc8] sm:$0xff]
    %v165 = vld [vmem:[%s7 + $0xd0] sm:$0xff]
    %v166 = vld [vmem:[%s7 + $0xd8] sm:$0xff]
    %v167 = vld [vmem:[%s7 + $0xe0] sm:$0xff]
    %v168 = vld [vmem:[%s7 + $0xe8] sm:$0xff]
    %v169 = vld [vmem:[%s7 + $0xf0] sm:$0xff]
    %v170 = vld [vmem:[%s7 + $0xf8] sm:$0xff]
    %v171 = vld [vmem:[%s0] sm:$0x3f]
    %173 = vset.pattern.permute.xlu0 0
    %174 = vperm.xlu0 %173, %v75
    %v175 = vpop.permute.xlu0 %174
    %178 = vset.pattern.permute.xlu0 0
    %179 = vperm.xlu0 %178, %v76
    %v180 = vpop.permute.xlu0 %179
    %183 = vset.pattern.permute.xlu0 0
    %184 = vperm.xlu0 %183, %v77
    %v185 = vpop.permute.xlu0 %184
    %188 = vset.pattern.permute.xlu0 0
    %189 = vperm.xlu0 %188, %v78
    %v190 = vpop.permute.xlu0 %189
    %193 = vset.pattern.permute.xlu0 0
    %194 = vperm.xlu0 %193, %v79
    %v195 = vpop.permute.xlu0 %194
    %198 = vset.pattern.permute.xlu0 0
    %199 = vperm.xlu0 %198, %v80
    %v200 = vpop.permute.xlu0 %199
    %203 = vset.pattern.permute.xlu0 0
    %204 = vperm.xlu0 %203, %v81
    %v205 = vpop.permute.xlu0 %204
    %208 = vset.pattern.permute.xlu0 0
    %209 = vperm.xlu0 %208, %v82
    %v210 = vpop.permute.xlu0 %209
    %213 = vset.pattern.permute.xlu0 0
    %214 = vperm.xlu0 %213, %v83
    %v215 = vpop.permute.xlu0 %214
    %218 = vset.pattern.permute.xlu0 0
    %219 = vperm.xlu0 %218, %v84
    %v220 = vpop.permute.xlu0 %219
    %223 = vset.pattern.permute.xlu0 0
    %224 = vperm.xlu0 %223, %v85
    %v225 = vpop.permute.xlu0 %224
    %228 = vset.pattern.permute.xlu0 0
    %229 = vperm.xlu0 %228, %v86
    %v230 = vpop.permute.xlu0 %229
    %233 = vset.pattern.permute.xlu0 0
    %234 = vperm.xlu0 %233, %v87
    %v235 = vpop.permute.xlu0 %234
    %238 = vset.pattern.permute.xlu0 0
    %239 = vperm.xlu0 %238, %v88
    %v240 = vpop.permute.xlu0 %239
    %243 = vset.pattern.permute.xlu0 0
    %244 = vperm.xlu0 %243, %v89
    %v245 = vpop.permute.xlu0 %244
    %248 = vset.pattern.permute.xlu0 0
    %249 = vperm.xlu0 %248, %v90
    %v250 = vpop.permute.xlu0 %249
    %v252 = vlaneseq
    %v253 = vshrl.u32 %v252, 7
    %v254 = vsub.s32 0, %v253
    %v255 = vrot.slane %v171, %v254
    %v256 = vmul.f32 %v175, %v255
    %v257 = vmul.f32 %v180, %v255
    %v258 = vmul.f32 %v185, %v255
    %v259 = vmul.f32 %v190, %v255
    %v260 = vmul.f32 %v195, %v255
    %v261 = vmul.f32 %v200, %v255
    %v262 = vmul.f32 %v205, %v255
    %v263 = vmul.f32 %v210, %v255
    %v264 = vmul.f32 %v215, %v255
    %v265 = vmul.f32 %v220, %v255
    %v266 = vmul.f32 %v225, %v255
    %v267 = vmul.f32 %v230, %v255
    %v268 = vmul.f32 %v235, %v255
    %v269 = vmul.f32 %v240, %v255
    %v270 = vmul.f32 %v245, %v255
    %v271 = vmul.f32 %v250, %v255
    %272 = vset.pattern.permute.xlu0 1
    %273 = vperm.xlu0 %272, %v75
    %v274 = vpop.permute.xlu0 %273
    %276 = vset.pattern.permute.xlu0 1
    %277 = vperm.xlu0 %276, %v76
    %v278 = vpop.permute.xlu0 %277
    %280 = vset.pattern.permute.xlu0 1
    %281 = vperm.xlu0 %280, %v77
    %v282 = vpop.permute.xlu0 %281
    %284 = vset.pattern.permute.xlu0 1
    %285 = vperm.xlu0 %284, %v78
    %v286 = vpop.permute.xlu0 %285
    %288 = vset.pattern.permute.xlu0 1
    %289 = vperm.xlu0 %288, %v79
    %v290 = vpop.permute.xlu0 %289
    %292 = vset.pattern.permute.xlu0 1
    %293 = vperm.xlu0 %292, %v80
    %v294 = vpop.permute.xlu0 %293
    %296 = vset.pattern.permute.xlu0 1
    %297 = vperm.xlu0 %296, %v81
    %v298 = vpop.permute.xlu0 %297
    %300 = vset.pattern.permute.xlu0 1
    %301 = vperm.xlu0 %300, %v82
    %v302 = vpop.permute.xlu0 %301
    %304 = vset.pattern.permute.xlu0 1
    %305 = vperm.xlu0 %304, %v83
    %v306 = vpop.permute.xlu0 %305
    %308 = vset.pattern.permute.xlu0 1
    %309 = vperm.xlu0 %308, %v84
    %v310 = vpop.permute.xlu0 %309
    %312 = vset.pattern.permute.xlu0 1
    %313 = vperm.xlu0 %312, %v85
    %v314 = vpop.permute.xlu0 %313
    %316 = vset.pattern.permute.xlu0 1
    %317 = vperm.xlu0 %316, %v86
    %v318 = vpop.permute.xlu0 %317
    %320 = vset.pattern.permute.xlu0 1
    %321 = vperm.xlu0 %320, %v87
    %v322 = vpop.permute.xlu0 %321
    %324 = vset.pattern.permute.xlu0 1
    %325 = vperm.xlu0 %324, %v88
    %v326 = vpop.permute.xlu0 %325
    %328 = vset.pattern.permute.xlu0 1
    %329 = vperm.xlu0 %328, %v89
    %v330 = vpop.permute.xlu0 %329
    %332 = vset.pattern.permute.xlu0 1
    %333 = vperm.xlu0 %332, %v90
    %v334 = vpop.permute.xlu0 %333
    %v336 = vlaneseq
    %v337 = vshrl.u32 %v336, 7
    %v338 = vsub.s32 1, %v337
    %v339 = vrot.slane %v171, %v338
    %v340 = vmul.f32 %v274, %v339
    %v341 = vmul.f32 %v278, %v339
    %v342 = vmul.f32 %v282, %v339
    %v343 = vmul.f32 %v286, %v339
    %v344 = vmul.f32 %v290, %v339
    %v345 = vmul.f32 %v294, %v339
    %v346 = vmul.f32 %v298, %v339
    %v347 = vmul.f32 %v302, %v339
    %v348 = vmul.f32 %v306, %v339
    %v349 = vmul.f32 %v310, %v339
    %v350 = vmul.f32 %v314, %v339
    %v351 = vmul.f32 %v318, %v339
    %v352 = vmul.f32 %v322, %v339
    %v353 = vmul.f32 %v326, %v339
    %v354 = vmul.f32 %v330, %v339
    %v355 = vmul.f32 %v334, %v339
    %v356 = vadd.f32 %v256, %v340
    %v357 = vadd.f32 %v257, %v341
    %v358 = vadd.f32 %v258, %v342
    %v359 = vadd.f32 %v259, %v343
    %v360 = vadd.f32 %v260, %v344
    %v361 = vadd.f32 %v261, %v345
    %v362 = vadd.f32 %v262, %v346
    %v363 = vadd.f32 %v263, %v347
    %v364 = vadd.f32 %v264, %v348
    %v365 = vadd.f32 %v265, %v349
    %v366 = vadd.f32 %v266, %v350
    %v367 = vadd.f32 %v267, %v351
    %v368 = vadd.f32 %v268, %v352
    %v369 = vadd.f32 %v269, %v353
    %v370 = vadd.f32 %v270, %v354
    %v371 = vadd.f32 %v271, %v355
    %372 = vset.pattern.permute.xlu0 2
    %373 = vperm.xlu0 %372, %v75
    %v374 = vpop.permute.xlu0 %373
    %376 = vset.pattern.permute.xlu0 2
    %377 = vperm.xlu0 %376, %v76
    %v378 = vpop.permute.xlu0 %377
    %380 = vset.pattern.permute.xlu0 2
    %381 = vperm.xlu0 %380, %v77
    %v382 = vpop.permute.xlu0 %381
    %384 = vset.pattern.permute.xlu0 2
    %385 = vperm.xlu0 %384, %v78
    %v386 = vpop.permute.xlu0 %385
    %388 = vset.pattern.permute.xlu0 2
    %389 = vperm.xlu0 %388, %v79
    %v390 = vpop.permute.xlu0 %389
    %392 = vset.pattern.permute.xlu0 2
    %393 = vperm.xlu0 %392, %v80
    %v394 = vpop.permute.xlu0 %393
    %396 = vset.pattern.permute.xlu0 2
    %397 = vperm.xlu0 %396, %v81
    %v398 = vpop.permute.xlu0 %397
    %400 = vset.pattern.permute.xlu0 2
    %401 = vperm.xlu0 %400, %v82
    %v402 = vpop.permute.xlu0 %401
    %404 = vset.pattern.permute.xlu0 2
    %405 = vperm.xlu0 %404, %v83
    %v406 = vpop.permute.xlu0 %405
    %408 = vset.pattern.permute.xlu0 2
    %409 = vperm.xlu0 %408, %v84
    %v410 = vpop.permute.xlu0 %409
    %412 = vset.pattern.permute.xlu0 2
    %413 = vperm.xlu0 %412, %v85
    %v414 = vpop.permute.xlu0 %413
    %416 = vset.pattern.permute.xlu0 2
    %417 = vperm.xlu0 %416, %v86
    %v418 = vpop.permute.xlu0 %417
    %420 = vset.pattern.permute.xlu0 2
    %421 = vperm.xlu0 %420, %v87
    %v422 = vpop.permute.xlu0 %421
    %424 = vset.pattern.permute.xlu0 2
    %425 = vperm.xlu0 %424, %v88
    %v426 = vpop.permute.xlu0 %425
    %428 = vset.pattern.permute.xlu0 2
    %429 = vperm.xlu0 %428, %v89
    %v430 = vpop.permute.xlu0 %429
    %432 = vset.pattern.permute.xlu0 2
    %433 = vperm.xlu0 %432, %v90
    %v434 = vpop.permute.xlu0 %433
    %v436 = vlaneseq
    %v437 = vshrl.u32 %v436, 7
    %v438 = vsub.s32 2, %v437
    %v439 = vrot.slane %v171, %v438
    %v440 = vmul.f32 %v374, %v439
    %v441 = vmul.f32 %v378, %v439
    %v442 = vmul.f32 %v382, %v439
    %v443 = vmul.f32 %v386, %v439
    %v444 = vmul.f32 %v390, %v439
    %v445 = vmul.f32 %v394, %v439
    %v446 = vmul.f32 %v398, %v439
    %v447 = vmul.f32 %v402, %v439
    %v448 = vmul.f32 %v406, %v439
    %v449 = vmul.f32 %v410, %v439
    %v450 = vmul.f32 %v414, %v439
    %v451 = vmul.f32 %v418, %v439
    %v452 = vmul.f32 %v422, %v439
    %v453 = vmul.f32 %v426, %v439
    %v454 = vmul.f32 %v430, %v439
    %v455 = vmul.f32 %v434, %v439
    %v456 = vadd.f32 %v356, %v440
    %v457 = vadd.f32 %v357, %v441
    %v458 = vadd.f32 %v358, %v442
    %v459 = vadd.f32 %v359, %v443
    %v460 = vadd.f32 %v360, %v444
    %v461 = vadd.f32 %v361, %v445
    %v462 = vadd.f32 %v362, %v446
    %v463 = vadd.f32 %v363, %v447
    %v464 = vadd.f32 %v364, %v448
    %v465 = vadd.f32 %v365, %v449
    %v466 = vadd.f32 %v366, %v450
    %v467 = vadd.f32 %v367, %v451
    %v468 = vadd.f32 %v368, %v452
    %v469 = vadd.f32 %v369, %v453
    %v470 = vadd.f32 %v370, %v454
    %v471 = vadd.f32 %v371, %v455
    %472 = vset.pattern.permute.xlu0 3
    %473 = vperm.xlu0 %472, %v75
    %v474 = vpop.permute.xlu0 %473
    %476 = vset.pattern.permute.xlu0 3
    %477 = vperm.xlu0 %476, %v76
    %v478 = vpop.permute.xlu0 %477
    %480 = vset.pattern.permute.xlu0 3
    %481 = vperm.xlu0 %480, %v77
    %v482 = vpop.permute.xlu0 %481
    %484 = vset.pattern.permute.xlu0 3
    %485 = vperm.xlu0 %484, %v78
    %v486 = vpop.permute.xlu0 %485
    %488 = vset.pattern.permute.xlu0 3
    %489 = vperm.xlu0 %488, %v79
    %v490 = vpop.permute.xlu0 %489
    %492 = vset.pattern.permute.xlu0 3
    %493 = vperm.xlu0 %492, %v80
    %v494 = vpop.permute.xlu0 %493
    %496 = vset.pattern.permute.xlu0 3
    %497 = vperm.xlu0 %496, %v81
    %v498 = vpop.permute.xlu0 %497
    %500 = vset.pattern.permute.xlu0 3
    %501 = vperm.xlu0 %500, %v82
    %v502 = vpop.permute.xlu0 %501
    %504 = vset.pattern.permute.xlu0 3
    %505 = vperm.xlu0 %504, %v83
    %v506 = vpop.permute.xlu0 %505
    %508 = vset.pattern.permute.xlu0 3
    %509 = vperm.xlu0 %508, %v84
    %v510 = vpop.permute.xlu0 %509
    %512 = vset.pattern.permute.xlu0 3
    %513 = vperm.xlu0 %512, %v85
    %v514 = vpop.permute.xlu0 %513
    %516 = vset.pattern.permute.xlu0 3
    %517 = vperm.xlu0 %516, %v86
    %v518 = vpop.permute.xlu0 %517
    %520 = vset.pattern.permute.xlu0 3
    %521 = vperm.xlu0 %520, %v87
    %v522 = vpop.permute.xlu0 %521
    %524 = vset.pattern.permute.xlu0 3
    %525 = vperm.xlu0 %524, %v88
    %v526 = vpop.permute.xlu0 %525
    %528 = vset.pattern.permute.xlu0 3
    %529 = vperm.xlu0 %528, %v89
    %v530 = vpop.permute.xlu0 %529
    %532 = vset.pattern.permute.xlu0 3
    %533 = vperm.xlu0 %532, %v90
    %v534 = vpop.permute.xlu0 %533
    %v536 = vlaneseq
    %v537 = vshrl.u32 %v536, 7
    %v538 = vsub.s32 3, %v537
    %v539 = vrot.slane %v171, %v538
    %v540 = vmul.f32 %v474, %v539
    %v541 = vmul.f32 %v478, %v539
    %v542 = vmul.f32 %v482, %v539
    %v543 = vmul.f32 %v486, %v539
    %v544 = vmul.f32 %v490, %v539
    %v545 = vmul.f32 %v494, %v539
    %v546 = vmul.f32 %v498, %v539
    %v547 = vmul.f32 %v502, %v539
    %v548 = vmul.f32 %v506, %v539
    %v549 = vmul.f32 %v510, %v539
    %v550 = vmul.f32 %v514, %v539
    %v551 = vmul.f32 %v518, %v539
    %v552 = vmul.f32 %v522, %v539
    %v553 = vmul.f32 %v526, %v539
    %v554 = vmul.f32 %v530, %v539
    %v555 = vmul.f32 %v534, %v539
    %v556 = vadd.f32 %v456, %v540
    %v557 = vadd.f32 %v457, %v541
    %v558 = vadd.f32 %v458, %v542
    %v559 = vadd.f32 %v459, %v543
    %v560 = vadd.f32 %v460, %v544
    %v561 = vadd.f32 %v461, %v545
    %v562 = vadd.f32 %v462, %v546
    %v563 = vadd.f32 %v463, %v547
    %v564 = vadd.f32 %v464, %v548
    %v565 = vadd.f32 %v465, %v549
    %v566 = vadd.f32 %v466, %v550
    %v567 = vadd.f32 %v467, %v551
    %v568 = vadd.f32 %v468, %v552
    %v569 = vadd.f32 %v469, %v553
    %v570 = vadd.f32 %v470, %v554
    %v571 = vadd.f32 %v471, %v555
    %572 = vset.pattern.permute.xlu0 4
    %573 = vperm.xlu0 %572, %v75
    %v574 = vpop.permute.xlu0 %573
    %576 = vset.pattern.permute.xlu0 4
    %577 = vperm.xlu0 %576, %v76
    %v578 = vpop.permute.xlu0 %577
    %580 = vset.pattern.permute.xlu0 4
    %581 = vperm.xlu0 %580, %v77
    %v582 = vpop.permute.xlu0 %581
    %584 = vset.pattern.permute.xlu0 4
    %585 = vperm.xlu0 %584, %v78
    %v586 = vpop.permute.xlu0 %585
    %588 = vset.pattern.permute.xlu0 4
    %589 = vperm.xlu0 %588, %v79
    %v590 = vpop.permute.xlu0 %589
    %592 = vset.pattern.permute.xlu0 4
    %593 = vperm.xlu0 %592, %v80
    %v594 = vpop.permute.xlu0 %593
    %596 = vset.pattern.permute.xlu0 4
    %597 = vperm.xlu0 %596, %v81
    %v598 = vpop.permute.xlu0 %597
    %600 = vset.pattern.permute.xlu0 4
    %601 = vperm.xlu0 %600, %v82
    %v602 = vpop.permute.xlu0 %601
    %604 = vset.pattern.permute.xlu0 4
    %605 = vperm.xlu0 %604, %v83
    %v606 = vpop.permute.xlu0 %605
    %608 = vset.pattern.permute.xlu0 4
    %609 = vperm.xlu0 %608, %v84
    %v610 = vpop.permute.xlu0 %609
    %612 = vset.pattern.permute.xlu0 4
    %613 = vperm.xlu0 %612, %v85
    %v614 = vpop.permute.xlu0 %613
    %616 = vset.pattern.permute.xlu0 4
    %617 = vperm.xlu0 %616, %v86
    %v618 = vpop.permute.xlu0 %617
    %620 = vset.pattern.permute.xlu0 4
    %621 = vperm.xlu0 %620, %v87
    %v622 = vpop.permute.xlu0 %621
    %624 = vset.pattern.permute.xlu0 4
    %625 = vperm.xlu0 %624, %v88
    %v626 = vpop.permute.xlu0 %625
    %628 = vset.pattern.permute.xlu0 4
    %629 = vperm.xlu0 %628, %v89
    %v630 = vpop.permute.xlu0 %629
    %632 = vset.pattern.permute.xlu0 4
    %633 = vperm.xlu0 %632, %v90
    %v634 = vpop.permute.xlu0 %633
    %v636 = vlaneseq
    %v637 = vshrl.u32 %v636, 7
    %v638 = vsub.s32 4, %v637
    %v639 = vrot.slane %v171, %v638
    %v640 = vmul.f32 %v574, %v639
    %v641 = vmul.f32 %v578, %v639
    %v642 = vmul.f32 %v582, %v639
    %v643 = vmul.f32 %v586, %v639
    %v644 = vmul.f32 %v590, %v639
    %v645 = vmul.f32 %v594, %v639
    %v646 = vmul.f32 %v598, %v639
    %v647 = vmul.f32 %v602, %v639
    %v648 = vmul.f32 %v606, %v639
    %v649 = vmul.f32 %v610, %v639
    %v650 = vmul.f32 %v614, %v639
    %v651 = vmul.f32 %v618, %v639
    %v652 = vmul.f32 %v622, %v639
    %v653 = vmul.f32 %v626, %v639
    %v654 = vmul.f32 %v630, %v639
    %v655 = vmul.f32 %v634, %v639
    %v656 = vadd.f32 %v556, %v640
    %v657 = vadd.f32 %v557, %v641
    %v658 = vadd.f32 %v558, %v642
    %v659 = vadd.f32 %v559, %v643
    %v660 = vadd.f32 %v560, %v644
    %v661 = vadd.f32 %v561, %v645
    %v662 = vadd.f32 %v562, %v646
    %v663 = vadd.f32 %v563, %v647
    %v664 = vadd.f32 %v564, %v648
    %v665 = vadd.f32 %v565, %v649
    %v666 = vadd.f32 %v566, %v650
    %v667 = vadd.f32 %v567, %v651
    %v668 = vadd.f32 %v568, %v652
    %v669 = vadd.f32 %v569, %v653
    %v670 = vadd.f32 %v570, %v654
    %v671 = vadd.f32 %v571, %v655
    %672 = vset.pattern.permute.xlu0 5
    %673 = vperm.xlu0 %672, %v75
    %v674 = vpop.permute.xlu0 %673
    %676 = vset.pattern.permute.xlu0 5
    %677 = vperm.xlu0 %676, %v76
    %v678 = vpop.permute.xlu0 %677
    %680 = vset.pattern.permute.xlu0 5
    %681 = vperm.xlu0 %680, %v77
    %v682 = vpop.permute.xlu0 %681
    %684 = vset.pattern.permute.xlu0 5
    %685 = vperm.xlu0 %684, %v78
    %v686 = vpop.permute.xlu0 %685
    %688 = vset.pattern.permute.xlu0 5
    %689 = vperm.xlu0 %688, %v79
    %v690 = vpop.permute.xlu0 %689
    %692 = vset.pattern.permute.xlu0 5
    %693 = vperm.xlu0 %692, %v80
    %v694 = vpop.permute.xlu0 %693
    %696 = vset.pattern.permute.xlu0 5
    %697 = vperm.xlu0 %696, %v81
    %v698 = vpop.permute.xlu0 %697
    %700 = vset.pattern.permute.xlu0 5
    %701 = vperm.xlu0 %700, %v82
    %v702 = vpop.permute.xlu0 %701
    %704 = vset.pattern.permute.xlu0 5
    %705 = vperm.xlu0 %704, %v83
    %v706 = vpop.permute.xlu0 %705
    %708 = vset.pattern.permute.xlu0 5
    %709 = vperm.xlu0 %708, %v84
    %v710 = vpop.permute.xlu0 %709
    %712 = vset.pattern.permute.xlu0 5
    %713 = vperm.xlu0 %712, %v85
    %v714 = vpop.permute.xlu0 %713
    %716 = vset.pattern.permute.xlu0 5
    %717 = vperm.xlu0 %716, %v86
    %v718 = vpop.permute.xlu0 %717
    %720 = vset.pattern.permute.xlu0 5
    %721 = vperm.xlu0 %720, %v87
    %v722 = vpop.permute.xlu0 %721
    %724 = vset.pattern.permute.xlu0 5
    %725 = vperm.xlu0 %724, %v88
    %v726 = vpop.permute.xlu0 %725
    %728 = vset.pattern.permute.xlu0 5
    %729 = vperm.xlu0 %728, %v89
    %v730 = vpop.permute.xlu0 %729
    %732 = vset.pattern.permute.xlu0 5
    %733 = vperm.xlu0 %732, %v90
    %v734 = vpop.permute.xlu0 %733
    %v736 = vlaneseq
    %v737 = vshrl.u32 %v736, 7
    %v738 = vsub.s32 5, %v737
    %v739 = vrot.slane %v171, %v738
    %v740 = vmul.f32 %v674, %v739
    %v741 = vmul.f32 %v678, %v739
    %v742 = vmul.f32 %v682, %v739
    %v743 = vmul.f32 %v686, %v739
    %v744 = vmul.f32 %v690, %v739
    %v745 = vmul.f32 %v694, %v739
    %v746 = vmul.f32 %v698, %v739
    %v747 = vmul.f32 %v702, %v739
    %v748 = vmul.f32 %v706, %v739
    %v749 = vmul.f32 %v710, %v739
    %v750 = vmul.f32 %v714, %v739
    %v751 = vmul.f32 %v718, %v739
    %v752 = vmul.f32 %v722, %v739
    %v753 = vmul.f32 %v726, %v739
    %v754 = vmul.f32 %v730, %v739
    %v755 = vmul.f32 %v734, %v739
    %v756 = vadd.f32 %v656, %v740
    %v757 = vadd.f32 %v657, %v741
    %v758 = vadd.f32 %v658, %v742
    %v759 = vadd.f32 %v659, %v743
    %v760 = vadd.f32 %v660, %v744
    %v761 = vadd.f32 %v661, %v745
    %v762 = vadd.f32 %v662, %v746
    %v763 = vadd.f32 %v663, %v747
    %v764 = vadd.f32 %v664, %v748
    %v765 = vadd.f32 %v665, %v749
    %v766 = vadd.f32 %v666, %v750
    %v767 = vadd.f32 %v667, %v751
    %v768 = vadd.f32 %v668, %v752
    %v769 = vadd.f32 %v669, %v753
    %v770 = vadd.f32 %v670, %v754
    %v771 = vadd.f32 %v671, %v755
    %773 = vset.pattern.permute.xlu0 0
    %774 = vperm.xlu0 %773, %v139
    %v775 = vpop.permute.xlu0 %774
    %778 = vset.pattern.permute.xlu0 0
    %779 = vperm.xlu0 %778, %v140
    %v780 = vpop.permute.xlu0 %779
    %783 = vset.pattern.permute.xlu0 0
    %784 = vperm.xlu0 %783, %v141
    %v785 = vpop.permute.xlu0 %784
    %788 = vset.pattern.permute.xlu0 0
    %789 = vperm.xlu0 %788, %v142
    %v790 = vpop.permute.xlu0 %789
    %793 = vset.pattern.permute.xlu0 0
    %794 = vperm.xlu0 %793, %v143
    %v795 = vpop.permute.xlu0 %794
    %798 = vset.pattern.permute.xlu0 0
    %799 = vperm.xlu0 %798, %v144
    %v800 = vpop.permute.xlu0 %799
    %803 = vset.pattern.permute.xlu0 0
    %804 = vperm.xlu0 %803, %v145
    %v805 = vpop.permute.xlu0 %804
    %808 = vset.pattern.permute.xlu0 0
    %809 = vperm.xlu0 %808, %v146
    %v810 = vpop.permute.xlu0 %809
    %813 = vset.pattern.permute.xlu0 0
    %814 = vperm.xlu0 %813, %v147
    %v815 = vpop.permute.xlu0 %814
    %818 = vset.pattern.permute.xlu0 0
    %819 = vperm.xlu0 %818, %v148
    %v820 = vpop.permute.xlu0 %819
    %823 = vset.pattern.permute.xlu0 0
    %824 = vperm.xlu0 %823, %v149
    %v825 = vpop.permute.xlu0 %824
    %828 = vset.pattern.permute.xlu0 0
    %829 = vperm.xlu0 %828, %v150
    %v830 = vpop.permute.xlu0 %829
    %833 = vset.pattern.permute.xlu0 0
    %834 = vperm.xlu0 %833, %v151
    %v835 = vpop.permute.xlu0 %834
    %838 = vset.pattern.permute.xlu0 0
    %839 = vperm.xlu0 %838, %v152
    %v840 = vpop.permute.xlu0 %839
    %843 = vset.pattern.permute.xlu0 0
    %844 = vperm.xlu0 %843, %v153
    %v845 = vpop.permute.xlu0 %844
    %848 = vset.pattern.permute.xlu0 0
    %849 = vperm.xlu0 %848, %v154
    %v850 = vpop.permute.xlu0 %849
    %v852 = vadd.f32 %v756, %v775
    %v853 = vadd.f32 %v757, %v780
    %v854 = vadd.f32 %v758, %v785
    %v855 = vadd.f32 %v759, %v790
    %v856 = vadd.f32 %v760, %v795
    %v857 = vadd.f32 %v761, %v800
    %v858 = vadd.f32 %v762, %v805
    %v859 = vadd.f32 %v763, %v810
    %v860 = vadd.f32 %v764, %v815
    %v861 = vadd.f32 %v765, %v820
    %v862 = vadd.f32 %v766, %v825
    %v863 = vadd.f32 %v767, %v830
    %v864 = vadd.f32 %v768, %v835
    %v865 = vadd.f32 %v769, %v840
    %v866 = vadd.f32 %v770, %v845
    %v867 = vadd.f32 %v771, %v850
    %v868 = vmax.f32 %v852, 0.0
    %v869 = vmax.f32 %v853, 0.0
    %v870 = vmax.f32 %v854, 0.0
    %v871 = vmax.f32 %v855, 0.0
    %v872 = vmax.f32 %v856, 0.0
    %v873 = vmax.f32 %v857, 0.0
    %v874 = vmax.f32 %v858, 0.0
    %v875 = vmax.f32 %v859, 0.0
    %v876 = vmax.f32 %v860, 0.0
    %v877 = vmax.f32 %v861, 0.0
    %v878 = vmax.f32 %v862, 0.0
    %v879 = vmax.f32 %v863, 0.0
    %v880 = vmax.f32 %v864, 0.0
    %v881 = vmax.f32 %v865, 0.0
    %v882 = vmax.f32 %v866, 0.0
    %v883 = vmax.f32 %v867, 0.0
    %v884 = vpack.c.bf16 %v869, %v868
    %v885 = vpack.c.bf16 %v871, %v870
    %v886 = vpack.c.bf16 %v873, %v872
    %v887 = vpack.c.bf16 %v875, %v874
    %v888 = vpack.c.bf16 %v877, %v876
    %v889 = vpack.c.bf16 %v879, %v878
    %v890 = vpack.c.bf16 %v881, %v880
    %v891 = vpack.c.bf16 %v883, %v882
    %892 = vset.pattern.permute.xlu0 1
    %893 = vperm.xlu0 %892, %v139
    %v894 = vpop.permute.xlu0 %893
    %896 = vset.pattern.permute.xlu0 1
    %897 = vperm.xlu0 %896, %v140
    %v898 = vpop.permute.xlu0 %897
    %900 = vset.pattern.permute.xlu0 1
    %901 = vperm.xlu0 %900, %v141
    %v902 = vpop.permute.xlu0 %901
    %904 = vset.pattern.permute.xlu0 1
    %905 = vperm.xlu0 %904, %v142
    %v906 = vpop.permute.xlu0 %905
    %908 = vset.pattern.permute.xlu0 1
    %909 = vperm.xlu0 %908, %v143
    %v910 = vpop.permute.xlu0 %909
    %912 = vset.pattern.permute.xlu0 1
    %913 = vperm.xlu0 %912, %v144
    %v914 = vpop.permute.xlu0 %913
    %916 = vset.pattern.permute.xlu0 1
    %917 = vperm.xlu0 %916, %v145
    %v918 = vpop.permute.xlu0 %917
    %920 = vset.pattern.permute.xlu0 1
    %921 = vperm.xlu0 %920, %v146
    %v922 = vpop.permute.xlu0 %921
    %924 = vset.pattern.permute.xlu0 1
    %925 = vperm.xlu0 %924, %v147
    %v926 = vpop.permute.xlu0 %925
    %928 = vset.pattern.permute.xlu0 1
    %929 = vperm.xlu0 %928, %v148
    %v930 = vpop.permute.xlu0 %929
    %932 = vset.pattern.permute.xlu0 1
    %933 = vperm.xlu0 %932, %v149
    %v934 = vpop.permute.xlu0 %933
    %936 = vset.pattern.permute.xlu0 1
    %937 = vperm.xlu0 %936, %v150
    %v938 = vpop.permute.xlu0 %937
    %940 = vset.pattern.permute.xlu0 1
    %941 = vperm.xlu0 %940, %v151
    %v942 = vpop.permute.xlu0 %941
    %944 = vset.pattern.permute.xlu0 1
    %945 = vperm.xlu0 %944, %v152
    %v946 = vpop.permute.xlu0 %945
    %948 = vset.pattern.permute.xlu0 1
    %949 = vperm.xlu0 %948, %v153
    %v950 = vpop.permute.xlu0 %949
    %952 = vset.pattern.permute.xlu0 1
    %953 = vperm.xlu0 %952, %v154
    %v954 = vpop.permute.xlu0 %953
    %v972 = vunpack.c.l.b16 %v91
    %v973 = vunpack.c.l.b16 %v92
    %v974 = vunpack.c.l.b16 %v93
    %v975 = vunpack.c.l.b16 %v94
    %v976 = vunpack.c.l.b16 %v95
    %v977 = vunpack.c.l.b16 %v96
    %v978 = vunpack.c.l.b16 %v97
    %v979 = vunpack.c.l.b16 %v98
    %v980 = vunpack.c.l.b16 %v99
    %v981 = vunpack.c.l.b16 %v100
    %v982 = vunpack.c.l.b16 %v101
    %v983 = vunpack.c.l.b16 %v102
    %v984 = vunpack.c.l.b16 %v103
    %v985 = vunpack.c.l.b16 %v104
    %v986 = vunpack.c.l.b16 %v105
    %v987 = vunpack.c.l.b16 %v106
    %v988 = vpack.c.b16 %v973, %v972
    %v989 = vpack.c.b16 %v975, %v974
    %v990 = vpack.c.b16 %v977, %v976
    %v991 = vpack.c.b16 %v979, %v978
    %v992 = vpack.c.b16 %v981, %v980
    %v993 = vpack.c.b16 %v983, %v982
    %v994 = vpack.c.b16 %v985, %v984
    %v995 = vpack.c.b16 %v987, %v986
    %1004 = vmatprep.subr.bf16.mxu0 0
    %1005 = vmatpush1.bf16.msra.mxu0 %v884
    %1006 = vmatprep.subr.bf16.mxu0 0
    %1007 = vmatpush1.bf16.msra.mxu0 %v885
    %1008 = vmatprep.subr.bf16.mxu0 0
    %1009 = vmatpush1.bf16.msra.mxu0 %v886
    %1010 = vmatprep.subr.bf16.mxu0 0
    %1011 = vmatpush1.bf16.msra.mxu0 %v887
    %1012 = vmatprep.subr.bf16.mxu0 0
    %1013 = vmatpush1.bf16.msra.mxu0 %v888
    %1014 = vmatprep.subr.bf16.mxu0 0
    %1015 = vmatpush1.bf16.msra.mxu0 %v889
    %1016 = vmatprep.subr.bf16.mxu0 0
    %1017 = vmatpush1.bf16.msra.mxu0 %v890
    %1018 = vmatprep.subr.bf16.mxu0 0
    %1019 = vmatpush1.bf16.msra.mxu0 %v891
    %1020 = vmatprep.subr.bf16.mxu0 0
    %1021 = vmatpush1.bf16.msra.mxu0 0
    %1022 = vmatprep.subr.bf16.mxu0 0
    %1023 = vmatpush1.bf16.msra.mxu0 0
    %1024 = vmatprep.subr.bf16.mxu0 0
    %1025 = vmatpush1.bf16.msra.mxu0 0
    %1026 = vmatprep.subr.bf16.mxu0 0
    %1027 = vmatpush1.bf16.msra.mxu0 0
    %1028 = vmatprep.subr.bf16.mxu0 0
    %1029 = vmatpush1.bf16.msra.mxu0 0
    %1030 = vmatprep.subr.bf16.mxu0 0
    %1031 = vmatpush1.bf16.msra.mxu0 0
    %1032 = vmatprep.subr.bf16.mxu0 0
    %1033 = vmatpush1.bf16.msra.mxu0 0
    %1034 = vmatprep.subr.bf16.mxu0 0
    %1035 = vmatpush1.bf16.msra.mxu0 0
    %1036 = vmatprep.mubr.bf16.mxu0 0
    %1037 = vmatmul.mubr.bf16.gmra.mrb[0].mxu0 %v988
    %v1038 = vpop.f32.mrb[0].mxu0
    %v1039 = vadd.f32 %v894, %v1038
    %v1040 = vpop.f32.mrb[0].mxu0
    %v1041 = vpop.f32.mrb[0].mxu0
    %v1042 = vadd.f32 %v898, %v1041
    %v1043 = vpop.f32.mrb[0].mxu0
    %1044 = vmatprep.mubr.bf16.mxu0 0
    %1045 = vmatmul.mubr.bf16.gmra.mrb[0].mxu0 %v989
    %v1046 = vpop.f32.mrb[0].mxu0
    %v1047 = vadd.f32 %v902, %v1046
    %v1048 = vpop.f32.mrb[0].mxu0
    %v1049 = vpop.f32.mrb[0].mxu0
    %v1050 = vadd.f32 %v906, %v1049
    %v1051 = vpop.f32.mrb[0].mxu0
    %1052 = vmatprep.mubr.bf16.mxu0 0
    %1053 = vmatmul.mubr.bf16.gmra.mrb[0].mxu0 %v990
    %v1054 = vpop.f32.mrb[0].mxu0
    %v1055 = vadd.f32 %v910, %v1054
    %v1056 = vpop.f32.mrb[0].mxu0
    %v1057 = vpop.f32.mrb[0].mxu0
    %v1058 = vadd.f32 %v914, %v1057
    %v1059 = vpop.f32.mrb[0].mxu0
    %1060 = vmatprep.mubr.bf16.mxu0 0
    %1061 = vmatmul.mubr.bf16.gmra.mrb[0].mxu0 %v991
    %v1062 = vpop.f32.mrb[0].mxu0
    %v1063 = vadd.f32 %v918, %v1062
    %v1064 = vpop.f32.mrb[0].mxu0
    %v1065 = vpop.f32.mrb[0].mxu0
    %v1066 = vadd.f32 %v922, %v1065
    %v1067 = vpop.f32.mrb[0].mxu0
    %1068 = vmatprep.mubr.bf16.mxu0 0
    %1069 = vmatmul.mubr.bf16.gmra.mrb[0].mxu0 %v992
    %v1070 = vpop.f32.mrb[0].mxu0
    %v1071 = vadd.f32 %v926, %v1070
    %v1072 = vpop.f32.mrb[0].mxu0
    %v1073 = vpop.f32.mrb[0].mxu0
    %v1074 = vadd.f32 %v930, %v1073
    %v1075 = vpop.f32.mrb[0].mxu0
    %1076 = vmatprep.mubr.bf16.mxu0 0
    %1077 = vmatmul.mubr.bf16.gmra.mrb[0].mxu0 %v993
    %v1078 = vpop.f32.mrb[0].mxu0
    %v1079 = vadd.f32 %v934, %v1078
    %v1080 = vpop.f32.mrb[0].mxu0
    %v1081 = vpop.f32.mrb[0].mxu0
    %v1082 = vadd.f32 %v938, %v1081
    %v1083 = vpop.f32.mrb[0].mxu0
    %1084 = vmatprep.mubr.bf16.mxu0 0
    %1085 = vmatmul.mubr.bf16.gmra.mrb[0].mxu0 %v994
    %v1086 = vpop.f32.mrb[0].mxu0
    %v1087 = vadd.f32 %v942, %v1086
    %v1088 = vpop.f32.mrb[0].mxu0
    %v1089 = vpop.f32.mrb[0].mxu0
    %v1090 = vadd.f32 %v946, %v1089
    %v1091 = vpop.f32.mrb[0].mxu0
    %1092 = vmatprep.mubr.bf16.mxu0 0
    %1093 = vmatmul.mubr.bf16.gmra.mrb[0].mxu0 %v995
    %v1094 = vpop.f32.mrb[0].mxu0
    %v1095 = vadd.f32 %v950, %v1094
    %v1096 = vpop.f32.mrb[0].mxu0
    %v1097 = vpop.f32.mrb[0].mxu0
    %v1098 = vadd.f32 %v954, %v1097
    %v1099 = vpop.f32.mrb[0].mxu0
    %1100 = vdwg.mxu0
    %v1101 = vmax.f32 %v1039, 0.0
    %v1102 = vmax.f32 %v1042, 0.0
    %v1103 = vmax.f32 %v1047, 0.0
    %v1104 = vmax.f32 %v1050, 0.0
    %v1105 = vmax.f32 %v1055, 0.0
    %v1106 = vmax.f32 %v1058, 0.0
    %v1107 = vmax.f32 %v1063, 0.0
    %v1108 = vmax.f32 %v1066, 0.0
    %v1109 = vmax.f32 %v1071, 0.0
    %v1110 = vmax.f32 %v1074, 0.0
    %v1111 = vmax.f32 %v1079, 0.0
    %v1112 = vmax.f32 %v1082, 0.0
    %v1113 = vmax.f32 %v1087, 0.0
    %v1114 = vmax.f32 %v1090, 0.0
    %v1115 = vmax.f32 %v1095, 0.0
    %v1116 = vmax.f32 %v1098, 0.0
    %v1117 = vpack.c.bf16 %v1102, %v1101
    %v1118 = vpack.c.bf16 %v1104, %v1103
    %v1119 = vpack.c.bf16 %v1106, %v1105
    %v1120 = vpack.c.bf16 %v1108, %v1107
    %v1121 = vpack.c.bf16 %v1110, %v1109
    %v1122 = vpack.c.bf16 %v1112, %v1111
    %v1123 = vpack.c.bf16 %v1114, %v1113
    %v1124 = vpack.c.bf16 %v1116, %v1115
    %1125 = vset.pattern.permute.xlu0 2
    %1126 = vperm.xlu0 %1125, %v139
    %v1127 = vpop.permute.xlu0 %1126
    %1129 = vset.pattern.permute.xlu0 2
    %1130 = vperm.xlu0 %1129, %v140
    %v1131 = vpop.permute.xlu0 %1130
    %1133 = vset.pattern.permute.xlu0 2
    %1134 = vperm.xlu0 %1133, %v141
    %v1135 = vpop.permute.xlu0 %1134
    %1137 = vset.pattern.permute.xlu0 2
    %1138 = vperm.xlu0 %1137, %v142
    %v1139 = vpop.permute.xlu0 %1138
    %1141 = vset.pattern.permute.xlu0 2
    %1142 = vperm.xlu0 %1141, %v143
    %v1143 = vpop.permute.xlu0 %1142
    %1145 = vset.pattern.permute.xlu0 2
    %1146 = vperm.xlu0 %1145, %v144
    %v1147 = vpop.permute.xlu0 %1146
    %1149 = vset.pattern.permute.xlu0 2
    %1150 = vperm.xlu0 %1149, %v145
    %v1151 = vpop.permute.xlu0 %1150
    %1153 = vset.pattern.permute.xlu0 2
    %1154 = vperm.xlu0 %1153, %v146
    %v1155 = vpop.permute.xlu0 %1154
    %1157 = vset.pattern.permute.xlu0 2
    %1158 = vperm.xlu0 %1157, %v147
    %v1159 = vpop.permute.xlu0 %1158
    %1161 = vset.pattern.permute.xlu0 2
    %1162 = vperm.xlu0 %1161, %v148
    %v1163 = vpop.permute.xlu0 %1162
    %1165 = vset.pattern.permute.xlu0 2
    %1166 = vperm.xlu0 %1165, %v149
    %v1167 = vpop.permute.xlu0 %1166
    %1169 = vset.pattern.permute.xlu0 2
    %1170 = vperm.xlu0 %1169, %v150
    %v1171 = vpop.permute.xlu0 %1170
    %1173 = vset.pattern.permute.xlu0 2
    %1174 = vperm.xlu0 %1173, %v151
    %v1175 = vpop.permute.xlu0 %1174
    %1177 = vset.pattern.permute.xlu0 2
    %1178 = vperm.xlu0 %1177, %v152
    %v1179 = vpop.permute.xlu0 %1178
    %1181 = vset.pattern.permute.xlu0 2
    %1182 = vperm.xlu0 %1181, %v153
    %v1183 = vpop.permute.xlu0 %1182
    %1185 = vset.pattern.permute.xlu0 2
    %1186 = vperm.xlu0 %1185, %v154
    %v1187 = vpop.permute.xlu0 %1186
    %1190 = vset.pattern.permute.xlu0 2
    %1191 = vperm.xlu0 %1190, %v155
    %v1192 = vpop.permute.xlu0 %1191
    %1195 = vset.pattern.permute.xlu0 2
    %1196 = vperm.xlu0 %1195, %v156
    %v1197 = vpop.permute.xlu0 %1196
    %1200 = vset.pattern.permute.xlu0 2
    %1201 = vperm.xlu0 %1200, %v157
    %v1202 = vpop.permute.xlu0 %1201
    %1205 = vset.pattern.permute.xlu0 2
    %1206 = vperm.xlu0 %1205, %v158
    %v1207 = vpop.permute.xlu0 %1206
    %1210 = vset.pattern.permute.xlu0 2
    %1211 = vperm.xlu0 %1210, %v159
    %v1212 = vpop.permute.xlu0 %1211
    %1215 = vset.pattern.permute.xlu0 2
    %1216 = vperm.xlu0 %1215, %v160
    %v1217 = vpop.permute.xlu0 %1216
    %1220 = vset.pattern.permute.xlu0 2
    %1221 = vperm.xlu0 %1220, %v161
    %v1222 = vpop.permute.xlu0 %1221
    %1225 = vset.pattern.permute.xlu0 2
    %1226 = vperm.xlu0 %1225, %v162
    %v1227 = vpop.permute.xlu0 %1226
    %1230 = vset.pattern.permute.xlu0 2
    %1231 = vperm.xlu0 %1230, %v163
    %v1232 = vpop.permute.xlu0 %1231
    %1235 = vset.pattern.permute.xlu0 2
    %1236 = vperm.xlu0 %1235, %v164
    %v1237 = vpop.permute.xlu0 %1236
    %1240 = vset.pattern.permute.xlu0 2
    %1241 = vperm.xlu0 %1240, %v165
    %v1242 = vpop.permute.xlu0 %1241
    %1245 = vset.pattern.permute.xlu0 2
    %1246 = vperm.xlu0 %1245, %v166
    %v1247 = vpop.permute.xlu0 %1246
    %1250 = vset.pattern.permute.xlu0 2
    %1251 = vperm.xlu0 %1250, %v167
    %v1252 = vpop.permute.xlu0 %1251
    %1255 = vset.pattern.permute.xlu0 2
    %1256 = vperm.xlu0 %1255, %v168
    %v1257 = vpop.permute.xlu0 %1256
    %1260 = vset.pattern.permute.xlu0 2
    %1261 = vperm.xlu0 %1260, %v169
    %v1262 = vpop.permute.xlu0 %1261
    %1265 = vset.pattern.permute.xlu0 2
    %1266 = vperm.xlu0 %1265, %v170
    %v1267 = vpop.permute.xlu0 %1266
    %v1301 = vunpack.c.l.b16 %v107
    %v1302 = vunpack.c.l.b16 %v108
    %v1303 = vunpack.c.l.b16 %v109
    %v1304 = vunpack.c.l.b16 %v110
    %v1305 = vunpack.c.l.b16 %v111
    %v1306 = vunpack.c.l.b16 %v112
    %v1307 = vunpack.c.l.b16 %v113
    %v1308 = vunpack.c.l.b16 %v114
    %v1309 = vunpack.c.l.b16 %v115
    %v1310 = vunpack.c.l.b16 %v116
    %v1311 = vunpack.c.l.b16 %v117
    %v1312 = vunpack.c.l.b16 %v118
    %v1313 = vunpack.c.l.b16 %v119
    %v1314 = vunpack.c.l.b16 %v120
    %v1315 = vunpack.c.l.b16 %v121
    %v1316 = vunpack.c.l.b16 %v122
    %v1317 = vunpack.c.l.b16 %v123
    %v1318 = vunpack.c.l.b16 %v124
    %v1319 = vunpack.c.l.b16 %v125
    %v1320 = vunpack.c.l.b16 %v126
    %v1321 = vunpack.c.l.b16 %v127
    %v1322 = vunpack.c.l.b16 %v128
    %v1323 = vunpack.c.l.b16 %v129
    %v1324 = vunpack.c.l.b16 %v130
    %v1325 = vunpack.c.l.b16 %v131
    %v1326 = vunpack.c.l.b16 %v132
    %v1327 = vunpack.c.l.b16 %v133
    %v1328 = vunpack.c.l.b16 %v134
    %v1329 = vunpack.c.l.b16 %v135
    %v1330 = vunpack.c.l.b16 %v136
    %v1331 = vunpack.c.l.b16 %v137
    %v1332 = vunpack.c.l.b16 %v138
    %v1333 = vpack.c.b16 %v1302, %v1301
    %v1334 = vpack.c.b16 %v1304, %v1303
    %v1335 = vpack.c.b16 %v1306, %v1305
    %v1336 = vpack.c.b16 %v1308, %v1307
    %v1337 = vpack.c.b16 %v1310, %v1309
    %v1338 = vpack.c.b16 %v1312, %v1311
    %v1339 = vpack.c.b16 %v1314, %v1313
    %v1340 = vpack.c.b16 %v1316, %v1315
    %v1341 = vpack.c.b16 %v1318, %v1317
    %v1342 = vpack.c.b16 %v1320, %v1319
    %v1343 = vpack.c.b16 %v1322, %v1321
    %v1344 = vpack.c.b16 %v1324, %v1323
    %v1345 = vpack.c.b16 %v1326, %v1325
    %v1346 = vpack.c.b16 %v1328, %v1327
    %v1347 = vpack.c.b16 %v1330, %v1329
    %v1348 = vpack.c.b16 %v1332, %v1331
    %1365 = vmatprep.subr.bf16.mxu0 0
    %1366 = vmatpush1.bf16.msra.mxu0 %v1117
    %1367 = vmatprep.subr.bf16.mxu0 0
    %1368 = vmatpush1.bf16.msra.mxu0 %v1118
    %1369 = vmatprep.subr.bf16.mxu0 0
    %1370 = vmatpush1.bf16.msra.mxu0 %v1119
    %1371 = vmatprep.subr.bf16.mxu0 0
    %1372 = vmatpush1.bf16.msra.mxu0 %v1120
    %1373 = vmatprep.subr.bf16.mxu0 0
    %1374 = vmatpush1.bf16.msra.mxu0 %v1121
    %1375 = vmatprep.subr.bf16.mxu0 0
    %1376 = vmatpush1.bf16.msra.mxu0 %v1122
    %1377 = vmatprep.subr.bf16.mxu0 0
    %1378 = vmatpush1.bf16.msra.mxu0 %v1123
    %1379 = vmatprep.subr.bf16.mxu0 0
    %1380 = vmatpush1.bf16.msra.mxu0 %v1124
    %1381 = vmatprep.subr.bf16.mxu0 0
    %1382 = vmatpush1.bf16.msra.mxu0 0
    %1383 = vmatprep.subr.bf16.mxu0 0
    %1384 = vmatpush1.bf16.msra.mxu0 0
    %1385 = vmatprep.subr.bf16.mxu0 0
    %1386 = vmatpush1.bf16.msra.mxu0 0
    %1387 = vmatprep.subr.bf16.mxu0 0
    %1388 = vmatpush1.bf16.msra.mxu0 0
    %1389 = vmatprep.subr.bf16.mxu0 0
    %1390 = vmatpush1.bf16.msra.mxu0 0
    %1391 = vmatprep.subr.bf16.mxu0 0
    %1392 = vmatpush1.bf16.msra.mxu0 0
    %1393 = vmatprep.subr.bf16.mxu0 0
    %1394 = vmatpush1.bf16.msra.mxu0 0
    %1395 = vmatprep.subr.bf16.mxu0 0
    %1396 = vmatpush1.bf16.msra.mxu0 0
    %1397 = vmatprep.mubr.bf16.mxu0 0
    %1398 = vmatmul.mubr.bf16.gmra.mrb[0].mxu0 %v1333
    %v1399 = vpop.f32.mrb[0].mxu0
    %v1400 = vadd.f32 %v1127, %v1399
    %v1401 = vpop.f32.mrb[0].mxu0
    %v1402 = vpop.f32.mrb[0].mxu0
    %v1403 = vadd.f32 %v1131, %v1402
    %v1404 = vpop.f32.mrb[0].mxu0
    %1405 = vmatprep.mubr.bf16.mxu0 0
    %1406 = vmatmul.mubr.bf16.gmra.mrb[0].mxu0 %v1334
    %v1407 = vpop.f32.mrb[0].mxu0
    %v1408 = vadd.f32 %v1135, %v1407
    %v1409 = vpop.f32.mrb[0].mxu0
    %v1410 = vpop.f32.mrb[0].mxu0
    %v1411 = vadd.f32 %v1139, %v1410
    %v1412 = vpop.f32.mrb[0].mxu0
    %1413 = vmatprep.mubr.bf16.mxu0 0
    %1414 = vmatmul.mubr.bf16.gmra.mrb[0].mxu0 %v1335
    %v1415 = vpop.f32.mrb[0].mxu0
    %v1416 = vadd.f32 %v1143, %v1415
    %v1417 = vpop.f32.mrb[0].mxu0
    %v1418 = vpop.f32.mrb[0].mxu0
    %v1419 = vadd.f32 %v1147, %v1418
    %v1420 = vpop.f32.mrb[0].mxu0
    %1421 = vmatprep.mubr.bf16.mxu0 0
    %1422 = vmatmul.mubr.bf16.gmra.mrb[0].mxu0 %v1336
    %v1423 = vpop.f32.mrb[0].mxu0
    %v1424 = vadd.f32 %v1151, %v1423
    %v1425 = vpop.f32.mrb[0].mxu0
    %v1426 = vpop.f32.mrb[0].mxu0
    %v1427 = vadd.f32 %v1155, %v1426
    %v1428 = vpop.f32.mrb[0].mxu0
    %1429 = vmatprep.mubr.bf16.mxu0 0
    %1430 = vmatmul.mubr.bf16.gmra.mrb[0].mxu0 %v1337
    %v1431 = vpop.f32.mrb[0].mxu0
    %v1432 = vadd.f32 %v1159, %v1431
    %v1433 = vpop.f32.mrb[0].mxu0
    %v1434 = vpop.f32.mrb[0].mxu0
    %v1435 = vadd.f32 %v1163, %v1434
    %v1436 = vpop.f32.mrb[0].mxu0
    %1437 = vmatprep.mubr.bf16.mxu0 0
    %1438 = vmatmul.mubr.bf16.gmra.mrb[0].mxu0 %v1338
    %v1439 = vpop.f32.mrb[0].mxu0
    %v1440 = vadd.f32 %v1167, %v1439
    %v1441 = vpop.f32.mrb[0].mxu0
    %v1442 = vpop.f32.mrb[0].mxu0
    %v1443 = vadd.f32 %v1171, %v1442
    %v1444 = vpop.f32.mrb[0].mxu0
    %1445 = vmatprep.mubr.bf16.mxu0 0
    %1446 = vmatmul.mubr.bf16.gmra.mrb[0].mxu0 %v1339
    %v1447 = vpop.f32.mrb[0].mxu0
    %v1448 = vadd.f32 %v1175, %v1447
    %v1449 = vpop.f32.mrb[0].mxu0
    %v1450 = vpop.f32.mrb[0].mxu0
    %v1451 = vadd.f32 %v1179, %v1450
    %v1452 = vpop.f32.mrb[0].mxu0
    %1453 = vmatprep.mubr.bf16.mxu0 0
    %1454 = vmatmul.mubr.bf16.gmra.mrb[0].mxu0 %v1340
    %v1455 = vpop.f32.mrb[0].mxu0
    %v1456 = vadd.f32 %v1183, %v1455
    %v1457 = vpop.f32.mrb[0].mxu0
    %v1458 = vpop.f32.mrb[0].mxu0
    %v1459 = vadd.f32 %v1187, %v1458
    %v1460 = vpop.f32.mrb[0].mxu0
    %1461 = vmatprep.mubr.bf16.mxu0 0
    %1462 = vmatmul.mubr.bf16.gmra.mrb[0].mxu0 %v1341
    %v1463 = vpop.f32.mrb[0].mxu0
    %v1464 = vadd.f32 %v1192, %v1463
    %v1465 = vpop.f32.mrb[0].mxu0
    %v1466 = vpop.f32.mrb[0].mxu0
    %v1467 = vadd.f32 %v1197, %v1466
    %v1468 = vpop.f32.mrb[0].mxu0
    %1469 = vmatprep.mubr.bf16.mxu0 0
    %1470 = vmatmul.mubr.bf16.gmra.mrb[0].mxu0 %v1342
    %v1471 = vpop.f32.mrb[0].mxu0
    %v1472 = vadd.f32 %v1202, %v1471
    %v1473 = vpop.f32.mrb[0].mxu0
    %v1474 = vpop.f32.mrb[0].mxu0
    %v1475 = vadd.f32 %v1207, %v1474
    %v1476 = vpop.f32.mrb[0].mxu0
    %1477 = vmatprep.mubr.bf16.mxu0 0
    %1478 = vmatmul.mubr.bf16.gmra.mrb[0].mxu0 %v1343
    %v1479 = vpop.f32.mrb[0].mxu0
    %v1480 = vadd.f32 %v1212, %v1479
    %v1481 = vpop.f32.mrb[0].mxu0
    %v1482 = vpop.f32.mrb[0].mxu0
    %v1483 = vadd.f32 %v1217, %v1482
    %v1484 = vpop.f32.mrb[0].mxu0
    %1485 = vmatprep.mubr.bf16.mxu0 0
    %1486 = vmatmul.mubr.bf16.gmra.mrb[0].mxu0 %v1344
    %v1487 = vpop.f32.mrb[0].mxu0
    %v1488 = vadd.f32 %v1222, %v1487
    %v1489 = vpop.f32.mrb[0].mxu0
    %v1490 = vpop.f32.mrb[0].mxu0
    %v1491 = vadd.f32 %v1227, %v1490
    %v1492 = vpop.f32.mrb[0].mxu0
    %1493 = vmatprep.mubr.bf16.mxu0 0
    %1494 = vmatmul.mubr.bf16.gmra.mrb[0].mxu0 %v1345
    %v1495 = vpop.f32.mrb[0].mxu0
    %v1496 = vadd.f32 %v1232, %v1495
    %v1497 = vpop.f32.mrb[0].mxu0
    %v1498 = vpop.f32.mrb[0].mxu0
    %v1499 = vadd.f32 %v1237, %v1498
    %v1500 = vpop.f32.mrb[0].mxu0
    %1501 = vmatprep.mubr.bf16.mxu0 0
    %1502 = vmatmul.mubr.bf16.gmra.mrb[0].mxu0 %v1346
    %v1503 = vpop.f32.mrb[0].mxu0
    %v1504 = vadd.f32 %v1242, %v1503
    %v1505 = vpop.f32.mrb[0].mxu0
    %v1506 = vpop.f32.mrb[0].mxu0
    %v1507 = vadd.f32 %v1247, %v1506
    %v1508 = vpop.f32.mrb[0].mxu0
    %1509 = vmatprep.mubr.bf16.mxu0 0
    %1510 = vmatmul.mubr.bf16.gmra.mrb[0].mxu0 %v1347
    %v1511 = vpop.f32.mrb[0].mxu0
    %v1512 = vadd.f32 %v1252, %v1511
    %v1513 = vpop.f32.mrb[0].mxu0
    %v1514 = vpop.f32.mrb[0].mxu0
    %v1515 = vadd.f32 %v1257, %v1514
    %v1516 = vpop.f32.mrb[0].mxu0
    %1517 = vmatprep.mubr.bf16.mxu0 0
    %1518 = vmatmul.mubr.bf16.gmra.mrb[0].mxu0 %v1348
    %v1519 = vpop.f32.mrb[0].mxu0
    %v1520 = vadd.f32 %v1262, %v1519
    %v1521 = vpop.f32.mrb[0].mxu0
    %v1522 = vpop.f32.mrb[0].mxu0
    %v1523 = vadd.f32 %v1267, %v1522
    %v1524 = vpop.f32.mrb[0].mxu0
    %1525 = vdwg.mxu0
    %v1526 = vmax.f32 %v1400, 0.0
    %v1527 = vmax.f32 %v1403, 0.0
    %v1528 = vmax.f32 %v1408, 0.0
    %v1529 = vmax.f32 %v1411, 0.0
    %v1530 = vmax.f32 %v1416, 0.0
    %v1531 = vmax.f32 %v1419, 0.0
    %v1532 = vmax.f32 %v1424, 0.0
    %v1533 = vmax.f32 %v1427, 0.0
    %v1534 = vmax.f32 %v1432, 0.0
    %v1535 = vmax.f32 %v1435, 0.0
    %v1536 = vmax.f32 %v1440, 0.0
    %v1537 = vmax.f32 %v1443, 0.0
    %v1538 = vmax.f32 %v1448, 0.0
    %v1539 = vmax.f32 %v1451, 0.0
    %v1540 = vmax.f32 %v1456, 0.0
    %v1541 = vmax.f32 %v1459, 0.0
    %v1542 = vmax.f32 %v1464, 0.0
    %v1543 = vmax.f32 %v1467, 0.0
    %v1544 = vmax.f32 %v1472, 0.0
    %v1545 = vmax.f32 %v1475, 0.0
    %v1546 = vmax.f32 %v1480, 0.0
    %v1547 = vmax.f32 %v1483, 0.0
    %v1548 = vmax.f32 %v1488, 0.0
    %v1549 = vmax.f32 %v1491, 0.0
    %v1550 = vmax.f32 %v1496, 0.0
    %v1551 = vmax.f32 %v1499, 0.0
    %v1552 = vmax.f32 %v1504, 0.0
    %v1553 = vmax.f32 %v1507, 0.0
    %v1554 = vmax.f32 %v1512, 0.0
    %v1555 = vmax.f32 %v1515, 0.0
    %v1556 = vmax.f32 %v1520, 0.0
    %v1557 = vmax.f32 %v1523, 0.0
    %vm1558 = vcmask 523264
    %v1559 = vsel %vm1558, %v1526, -inf
    %1560 = vmax.xlane.f32.xlu0 %v1559
    %v1561 = vpop.xlane.xlu0 %1560
    %v1562 = vsel %vm1558, %v1527, -inf
    %1563 = vmax.xlane.f32.xlu0 %v1562
    %v1564 = vpop.xlane.xlu0 %1563
    %v1565 = vsel %vm1558, %v1528, -inf
    %1566 = vmax.xlane.f32.xlu0 %v1565
    %v1567 = vpop.xlane.xlu0 %1566
    %v1568 = vsel %vm1558, %v1529, -inf
    %1569 = vmax.xlane.f32.xlu0 %v1568
    %v1570 = vpop.xlane.xlu0 %1569
    %v1571 = vsel %vm1558, %v1530, -inf
    %1572 = vmax.xlane.f32.xlu0 %v1571
    %v1573 = vpop.xlane.xlu0 %1572
    %v1574 = vsel %vm1558, %v1531, -inf
    %1575 = vmax.xlane.f32.xlu0 %v1574
    %v1576 = vpop.xlane.xlu0 %1575
    %v1577 = vsel %vm1558, %v1532, -inf
    %1578 = vmax.xlane.f32.xlu0 %v1577
    %v1579 = vpop.xlane.xlu0 %1578
    %v1580 = vsel %vm1558, %v1533, -inf
    %1581 = vmax.xlane.f32.xlu0 %v1580
    %v1582 = vpop.xlane.xlu0 %1581
    %v1583 = vsel %vm1558, %v1534, -inf
    %1584 = vmax.xlane.f32.xlu0 %v1583
    %v1585 = vpop.xlane.xlu0 %1584
    %v1586 = vsel %vm1558, %v1535, -inf
    %1587 = vmax.xlane.f32.xlu0 %v1586
    %v1588 = vpop.xlane.xlu0 %1587
    %v1589 = vsel %vm1558, %v1536, -inf
    %1590 = vmax.xlane.f32.xlu0 %v1589
    %v1591 = vpop.xlane.xlu0 %1590
    %v1592 = vsel %vm1558, %v1537, -inf
    %1593 = vmax.xlane.f32.xlu0 %v1592
    %v1594 = vpop.xlane.xlu0 %1593
    %v1595 = vsel %vm1558, %v1538, -inf
    %1596 = vmax.xlane.f32.xlu0 %v1595
    %v1597 = vpop.xlane.xlu0 %1596
    %v1598 = vsel %vm1558, %v1539, -inf
    %1599 = vmax.xlane.f32.xlu0 %v1598
    %v1600 = vpop.xlane.xlu0 %1599
    %v1601 = vsel %vm1558, %v1540, -inf
    %1602 = vmax.xlane.f32.xlu0 %v1601
    %v1603 = vpop.xlane.xlu0 %1602
    %v1604 = vsel %vm1558, %v1541, -inf
    %1605 = vmax.xlane.f32.xlu0 %v1604
    %v1606 = vpop.xlane.xlu0 %1605
    %v1607 = vsel %vm1558, %v1542, -inf
    %1608 = vmax.xlane.f32.xlu0 %v1607
    %v1609 = vpop.xlane.xlu0 %1608
    %v1610 = vsel %vm1558, %v1543, -inf
    %1611 = vmax.xlane.f32.xlu0 %v1610
    %v1612 = vpop.xlane.xlu0 %1611
    %v1613 = vsel %vm1558, %v1544, -inf
    %1614 = vmax.xlane.f32.xlu0 %v1613
    %v1615 = vpop.xlane.xlu0 %1614
    %v1616 = vsel %vm1558, %v1545, -inf
    %1617 = vmax.xlane.f32.xlu0 %v1616
    %v1618 = vpop.xlane.xlu0 %1617
    %v1619 = vsel %vm1558, %v1546, -inf
    %1620 = vmax.xlane.f32.xlu0 %v1619
    %v1621 = vpop.xlane.xlu0 %1620
    %v1622 = vsel %vm1558, %v1547, -inf
    %1623 = vmax.xlane.f32.xlu0 %v1622
    %v1624 = vpop.xlane.xlu0 %1623
    %v1625 = vsel %vm1558, %v1548, -inf
    %1626 = vmax.xlane.f32.xlu0 %v1625
    %v1627 = vpop.xlane.xlu0 %1626
    %v1628 = vsel %vm1558, %v1549, -inf
    %1629 = vmax.xlane.f32.xlu0 %v1628
    %v1630 = vpop.xlane.xlu0 %1629
    %v1631 = vsel %vm1558, %v1550, -inf
    %1632 = vmax.xlane.f32.xlu0 %v1631
    %v1633 = vpop.xlane.xlu0 %1632
    %v1634 = vsel %vm1558, %v1551, -inf
    %1635 = vmax.xlane.f32.xlu0 %v1634
    %v1636 = vpop.xlane.xlu0 %1635
    %v1637 = vsel %vm1558, %v1552, -inf
    %1638 = vmax.xlane.f32.xlu0 %v1637
    %v1639 = vpop.xlane.xlu0 %1638
    %v1640 = vsel %vm1558, %v1553, -inf
    %1641 = vmax.xlane.f32.xlu0 %v1640
    %v1642 = vpop.xlane.xlu0 %1641
    %v1643 = vsel %vm1558, %v1554, -inf
    %1644 = vmax.xlane.f32.xlu0 %v1643
    %v1645 = vpop.xlane.xlu0 %1644
    %v1646 = vsel %vm1558, %v1555, -inf
    %1647 = vmax.xlane.f32.xlu0 %v1646
    %v1648 = vpop.xlane.xlu0 %1647
    %v1649 = vsel %vm1558, %v1556, -inf
    %1650 = vmax.xlane.f32.xlu0 %v1649
    %v1651 = vpop.xlane.xlu0 %1650
    %v1652 = vsel %vm1558, %v1557, -inf
    %1653 = vmax.xlane.f32.xlu0 %v1652
    %v1654 = vpop.xlane.xlu0 %1653
    %v1655 = vld [vmem:[#allocation2] sm:$0xff]
    %v1656 = vld [vmem:[#allocation2 + $0x8] sm:$0xff]
    %v1657 = vld [vmem:[#allocation2 + $0x10] sm:$0xff]
    %v1658 = vld [vmem:[#allocation2 + $0x18] sm:$0xff]
    %v1659 = vld [vmem:[#allocation2 + $0x20] sm:$0xff]
    %v1660 = vld [vmem:[#allocation2 + $0x28] sm:$0xff]
    %v1661 = vld [vmem:[#allocation2 + $0x30] sm:$0xff]
    %v1662 = vld [vmem:[#allocation2 + $0x38] sm:$0xff]
    %v1663 = vld [vmem:[#allocation2 + $0x40] sm:$0xff]
    %v1664 = vld [vmem:[#allocation2 + $0x48] sm:$0xff]
    %v1665 = vld [vmem:[#allocation2 + $0x50] sm:$0xff]
    %v1666 = vld [vmem:[#allocation2 + $0x58] sm:$0xff]
    %v1667 = vld [vmem:[#allocation2 + $0x60] sm:$0xff]
    %v1668 = vld [vmem:[#allocation2 + $0x68] sm:$0xff]
    %v1669 = vld [vmem:[#allocation2 + $0x70] sm:$0xff]
    %v1670 = vld [vmem:[#allocation2 + $0x78] sm:$0xff]
    %v1671 = vld [vmem:[#allocation2 + $0x80] sm:$0xff]
    %v1672 = vld [vmem:[#allocation2 + $0x88] sm:$0xff]
    %v1673 = vld [vmem:[#allocation2 + $0x90] sm:$0xff]
    %v1674 = vld [vmem:[#allocation2 + $0x98] sm:$0xff]
    %v1675 = vld [vmem:[#allocation2 + $0xa0] sm:$0xff]
    %v1676 = vld [vmem:[#allocation2 + $0xa8] sm:$0xff]
    %v1677 = vld [vmem:[#allocation2 + $0xb0] sm:$0xff]
    %v1678 = vld [vmem:[#allocation2 + $0xb8] sm:$0xff]
    %v1679 = vld [vmem:[#allocation2 + $0xc0] sm:$0xff]
    %v1680 = vld [vmem:[#allocation2 + $0xc8] sm:$0xff]
    %v1681 = vld [vmem:[#allocation2 + $0xd0] sm:$0xff]
    %v1682 = vld [vmem:[#allocation2 + $0xd8] sm:$0xff]
    %v1683 = vld [vmem:[#allocation2 + $0xe0] sm:$0xff]
    %v1684 = vld [vmem:[#allocation2 + $0xe8] sm:$0xff]
    %v1685 = vld [vmem:[#allocation2 + $0xf0] sm:$0xff]
    %v1686 = vld [vmem:[#allocation2 + $0xf8] sm:$0xff]
    %v1687 = vmax.f32 %v1655, %v1561
    %v1688 = vmax.f32 %v1656, %v1564
    %v1689 = vmax.f32 %v1657, %v1567
    %v1690 = vmax.f32 %v1658, %v1570
    %v1691 = vmax.f32 %v1659, %v1573
    %v1692 = vmax.f32 %v1660, %v1576
    %v1693 = vmax.f32 %v1661, %v1579
    %v1694 = vmax.f32 %v1662, %v1582
    %v1695 = vmax.f32 %v1663, %v1585
    %v1696 = vmax.f32 %v1664, %v1588
    %v1697 = vmax.f32 %v1665, %v1591
    %v1698 = vmax.f32 %v1666, %v1594
    %v1699 = vmax.f32 %v1667, %v1597
    %v1700 = vmax.f32 %v1668, %v1600
    %v1701 = vmax.f32 %v1669, %v1603
    %v1702 = vmax.f32 %v1670, %v1606
    %v1703 = vmax.f32 %v1671, %v1609
    %v1704 = vmax.f32 %v1672, %v1612
    %v1705 = vmax.f32 %v1673, %v1615
    %v1706 = vmax.f32 %v1674, %v1618
    %v1707 = vmax.f32 %v1675, %v1621
    %v1708 = vmax.f32 %v1676, %v1624
    %v1709 = vmax.f32 %v1677, %v1627
    %v1710 = vmax.f32 %v1678, %v1630
    %v1711 = vmax.f32 %v1679, %v1633
    %v1712 = vmax.f32 %v1680, %v1636
    %v1713 = vmax.f32 %v1681, %v1639
    %v1714 = vmax.f32 %v1682, %v1642
    %v1715 = vmax.f32 %v1683, %v1645
    %v1716 = vmax.f32 %v1684, %v1648
    %v1717 = vmax.f32 %v1685, %v1651
    %v1718 = vmax.f32 %v1686, %v1654
    %vm1719 = vcmask 7168
    %1720 = vst.msk [vmem:[#allocation2] sm:$0xff] %vm1719, %v1687
    %1721 = vst.msk [vmem:[#allocation2 + $0x8] sm:$0xff] %vm1719, %v1688
    %1722 = vst.msk [vmem:[#allocation2 + $0x10] sm:$0xff] %vm1719, %v1689
    %1723 = vst.msk [vmem:[#allocation2 + $0x18] sm:$0xff] %vm1719, %v1690
    %1724 = vst.msk [vmem:[#allocation2 + $0x20] sm:$0xff] %vm1719, %v1691
    %1725 = vst.msk [vmem:[#allocation2 + $0x28] sm:$0xff] %vm1719, %v1692
    %1726 = vst.msk [vmem:[#allocation2 + $0x30] sm:$0xff] %vm1719, %v1693
    %1727 = vst.msk [vmem:[#allocation2 + $0x38] sm:$0xff] %vm1719, %v1694
    %1728 = vst.msk [vmem:[#allocation2 + $0x40] sm:$0xff] %vm1719, %v1695
    %1729 = vst.msk [vmem:[#allocation2 + $0x48] sm:$0xff] %vm1719, %v1696
    %1730 = vst.msk [vmem:[#allocation2 + $0x50] sm:$0xff] %vm1719, %v1697
    %1731 = vst.msk [vmem:[#allocation2 + $0x58] sm:$0xff] %vm1719, %v1698
    %1732 = vst.msk [vmem:[#allocation2 + $0x60] sm:$0xff] %vm1719, %v1699
    %1733 = vst.msk [vmem:[#allocation2 + $0x68] sm:$0xff] %vm1719, %v1700
    %1734 = vst.msk [vmem:[#allocation2 + $0x70] sm:$0xff] %vm1719, %v1701
    %1735 = vst.msk [vmem:[#allocation2 + $0x78] sm:$0xff] %vm1719, %v1702
    %1736 = vst.msk [vmem:[#allocation2 + $0x80] sm:$0xff] %vm1719, %v1703
    %1737 = vst.msk [vmem:[#allocation2 + $0x88] sm:$0xff] %vm1719, %v1704
    %1738 = vst.msk [vmem:[#allocation2 + $0x90] sm:$0xff] %vm1719, %v1705
    %1739 = vst.msk [vmem:[#allocation2 + $0x98] sm:$0xff] %vm1719, %v1706
    %1740 = vst.msk [vmem:[#allocation2 + $0xa0] sm:$0xff] %vm1719, %v1707
    %1741 = vst.msk [vmem:[#allocation2 + $0xa8] sm:$0xff] %vm1719, %v1708
    %1742 = vst.msk [vmem:[#allocation2 + $0xb0] sm:$0xff] %vm1719, %v1709
    %1743 = vst.msk [vmem:[#allocation2 + $0xb8] sm:$0xff] %vm1719, %v1710
    %1744 = vst.msk [vmem:[#allocation2 + $0xc0] sm:$0xff] %vm1719, %v1711
    %1745 = vst.msk [vmem:[#allocation2 + $0xc8] sm:$0xff] %vm1719, %v1712
    %1746 = vst.msk [vmem:[#allocation2 + $0xd0] sm:$0xff] %vm1719, %v1713
    %1747 = vst.msk [vmem:[#allocation2 + $0xd8] sm:$0xff] %vm1719, %v1714
    %1748 = vst.msk [vmem:[#allocation2 + $0xe0] sm:$0xff] %vm1719, %v1715
    %1749 = vst.msk [vmem:[#allocation2 + $0xe8] sm:$0xff] %vm1719, %v1716
    %1750 = vst.msk [vmem:[#allocation2 + $0xf0] sm:$0xff] %vm1719, %v1717
    %1751 = vst.msk [vmem:[#allocation2 + $0xf8] sm:$0xff] %vm1719, %v1718
    %s1752 = scalar_lea.vmem %s0, 8
    %v1753 = vld [vmem:[%s1752] sm:$0x3f]
    %v1754 = vlaneseq
    %v1755 = vshrl.u32 %v1754, 7
    %v1756 = vsub.s32 0, %v1755
    %v1757 = vrot.slane %v1753, %v1756
    %v1758 = vmul.f32 %v175, %v1757
    %v1759 = vmul.f32 %v180, %v1757
    %v1760 = vmul.f32 %v185, %v1757
    %v1761 = vmul.f32 %v190, %v1757
    %v1762 = vmul.f32 %v195, %v1757
    %v1763 = vmul.f32 %v200, %v1757
    %v1764 = vmul.f32 %v205, %v1757
    %v1765 = vmul.f32 %v210, %v1757
    %v1766 = vmul.f32 %v215, %v1757
    %v1767 = vmul.f32 %v220, %v1757
    %v1768 = vmul.f32 %v225, %v1757
    %v1769 = vmul.f32 %v230, %v1757
    %v1770 = vmul.f32 %v235, %v1757
    %v1771 = vmul.f32 %v240, %v1757
    %v1772 = vmul.f32 %v245, %v1757
    %v1773 = vmul.f32 %v250, %v1757
    %v1774 = vlaneseq
    %v1775 = vshrl.u32 %v1774, 7
    %v1776 = vsub.s32 1, %v1775
    %v1777 = vrot.slane %v1753, %v1776
    %v1778 = vmul.f32 %v274, %v1777
    %v1779 = vmul.f32 %v278, %v1777
    %v1780 = vmul.f32 %v282, %v1777
    %v1781 = vmul.f32 %v286, %v1777
    %v1782 = vmul.f32 %v290, %v1777
    %v1783 = vmul.f32 %v294, %v1777
    %v1784 = vmul.f32 %v298, %v1777
    %v1785 = vmul.f32 %v302, %v1777
    %v1786 = vmul.f32 %v306, %v1777
    %v1787 = vmul.f32 %v310, %v1777
    %v1788 = vmul.f32 %v314, %v1777
    %v1789 = vmul.f32 %v318, %v1777
    %v1790 = vmul.f32 %v322, %v1777
    %v1791 = vmul.f32 %v326, %v1777
    %v1792 = vmul.f32 %v330, %v1777
    %v1793 = vmul.f32 %v334, %v1777
    %v1794 = vadd.f32 %v1758, %v1778
    %v1795 = vadd.f32 %v1759, %v1779
    %v1796 = vadd.f32 %v1760, %v1780
    %v1797 = vadd.f32 %v1761, %v1781
    %v1798 = vadd.f32 %v1762, %v1782
    %v1799 = vadd.f32 %v1763, %v1783
    %v1800 = vadd.f32 %v1764, %v1784
    %v1801 = vadd.f32 %v1765, %v1785
    %v1802 = vadd.f32 %v1766, %v1786
    %v1803 = vadd.f32 %v1767, %v1787
    %v1804 = vadd.f32 %v1768, %v1788
    %v1805 = vadd.f32 %v1769, %v1789
    %v1806 = vadd.f32 %v1770, %v1790
    %v1807 = vadd.f32 %v1771, %v1791
    %v1808 = vadd.f32 %v1772, %v1792
    %v1809 = vadd.f32 %v1773, %v1793
    %v1810 = vlaneseq
    %v1811 = vshrl.u32 %v1810, 7
    %v1812 = vsub.s32 2, %v1811
    %v1813 = vrot.slane %v1753, %v1812
    %v1814 = vmul.f32 %v374, %v1813
    %v1815 = vmul.f32 %v378, %v1813
    %v1816 = vmul.f32 %v382, %v1813
    %v1817 = vmul.f32 %v386, %v1813
    %v1818 = vmul.f32 %v390, %v1813
    %v1819 = vmul.f32 %v394, %v1813
    %v1820 = vmul.f32 %v398, %v1813
    %v1821 = vmul.f32 %v402, %v1813
    %v1822 = vmul.f32 %v406, %v1813
    %v1823 = vmul.f32 %v410, %v1813
    %v1824 = vmul.f32 %v414, %v1813
    %v1825 = vmul.f32 %v418, %v1813
    %v1826 = vmul.f32 %v422, %v1813
    %v1827 = vmul.f32 %v426, %v1813
    %v1828 = vmul.f32 %v430, %v1813
    %v1829 = vmul.f32 %v434, %v1813
    %v1830 = vadd.f32 %v1794, %v1814
    %v1831 = vadd.f32 %v1795, %v1815
    %v1832 = vadd.f32 %v1796, %v1816
    %v1833 = vadd.f32 %v1797, %v1817
    %v1834 = vadd.f32 %v1798, %v1818
    %v1835 = vadd.f32 %v1799, %v1819
    %v1836 = vadd.f32 %v1800, %v1820
    %v1837 = vadd.f32 %v1801, %v1821
    %v1838 = vadd.f32 %v1802, %v1822
    %v1839 = vadd.f32 %v1803, %v1823
    %v1840 = vadd.f32 %v1804, %v1824
    %v1841 = vadd.f32 %v1805, %v1825
    %v1842 = vadd.f32 %v1806, %v1826
    %v1843 = vadd.f32 %v1807, %v1827
    %v1844 = vadd.f32 %v1808, %v1828
    %v1845 = vadd.f32 %v1809, %v1829
    %v1846 = vlaneseq
    %v1847 = vshrl.u32 %v1846, 7
    %v1848 = vsub.s32 3, %v1847
    %v1849 = vrot.slane %v1753, %v1848
    %v1850 = vmul.f32 %v474, %v1849
    %v1851 = vmul.f32 %v478, %v1849
    %v1852 = vmul.f32 %v482, %v1849
    %v1853 = vmul.f32 %v486, %v1849
    %v1854 = vmul.f32 %v490, %v1849
    %v1855 = vmul.f32 %v494, %v1849
    %v1856 = vmul.f32 %v498, %v1849
    %v1857 = vmul.f32 %v502, %v1849
    %v1858 = vmul.f32 %v506, %v1849
    %v1859 = vmul.f32 %v510, %v1849
    %v1860 = vmul.f32 %v514, %v1849
    %v1861 = vmul.f32 %v518, %v1849
    %v1862 = vmul.f32 %v522, %v1849
    %v1863 = vmul.f32 %v526, %v1849
    %v1864 = vmul.f32 %v530, %v1849
    %v1865 = vmul.f32 %v534, %v1849
    %v1866 = vadd.f32 %v1830, %v1850
    %v1867 = vadd.f32 %v1831, %v1851
    %v1868 = vadd.f32 %v1832, %v1852
    %v1869 = vadd.f32 %v1833, %v1853
    %v1870 = vadd.f32 %v1834, %v1854
    %v1871 = vadd.f32 %v1835, %v1855
    %v1872 = vadd.f32 %v1836, %v1856
    %v1873 = vadd.f32 %v1837, %v1857
    %v1874 = vadd.f32 %v1838, %v1858
    %v1875 = vadd.f32 %v1839, %v1859
    %v1876 = vadd.f32 %v1840, %v1860
    %v1877 = vadd.f32 %v1841, %v1861
    %v1878 = vadd.f32 %v1842, %v1862
    %v1879 = vadd.f32 %v1843, %v1863
    %v1880 = vadd.f32 %v1844, %v1864
    %v1881 = vadd.f32 %v1845, %v1865
    %v1882 = vlaneseq
    %v1883 = vshrl.u32 %v1882, 7
    %v1884 = vsub.s32 4, %v1883
    %v1885 = vrot.slane %v1753, %v1884
    %v1886 = vmul.f32 %v574, %v1885
    %v1887 = vmul.f32 %v578, %v1885
    %v1888 = vmul.f32 %v582, %v1885
    %v1889 = vmul.f32 %v586, %v1885
    %v1890 = vmul.f32 %v590, %v1885
    %v1891 = vmul.f32 %v594, %v1885
    %v1892 = vmul.f32 %v598, %v1885
    %v1893 = vmul.f32 %v602, %v1885
    %v1894 = vmul.f32 %v606, %v1885
    %v1895 = vmul.f32 %v610, %v1885
    %v1896 = vmul.f32 %v614, %v1885
    %v1897 = vmul.f32 %v618, %v1885
    %v1898 = vmul.f32 %v622, %v1885
    %v1899 = vmul.f32 %v626, %v1885
    %v1900 = vmul.f32 %v630, %v1885
    %v1901 = vmul.f32 %v634, %v1885
    %v1902 = vadd.f32 %v1866, %v1886
    %v1903 = vadd.f32 %v1867, %v1887
    %v1904 = vadd.f32 %v1868, %v1888
    %v1905 = vadd.f32 %v1869, %v1889
    %v1906 = vadd.f32 %v1870, %v1890
    %v1907 = vadd.f32 %v1871, %v1891
    %v1908 = vadd.f32 %v1872, %v1892
    %v1909 = vadd.f32 %v1873, %v1893
    %v1910 = vadd.f32 %v1874, %v1894
    %v1911 = vadd.f32 %v1875, %v1895
    %v1912 = vadd.f32 %v1876, %v1896
    %v1913 = vadd.f32 %v1877, %v1897
    %v1914 = vadd.f32 %v1878, %v1898
    %v1915 = vadd.f32 %v1879, %v1899
    %v1916 = vadd.f32 %v1880, %v1900
    %v1917 = vadd.f32 %v1881, %v1901
    %v1918 = vlaneseq
    %v1919 = vshrl.u32 %v1918, 7
    %v1920 = vsub.s32 5, %v1919
    %v1921 = vrot.slane %v1753, %v1920
    %v1922 = vmul.f32 %v674, %v1921
    %v1923 = vmul.f32 %v678, %v1921
    %v1924 = vmul.f32 %v682, %v1921
    %v1925 = vmul.f32 %v686, %v1921
    %v1926 = vmul.f32 %v690, %v1921
    %v1927 = vmul.f32 %v694, %v1921
    %v1928 = vmul.f32 %v698, %v1921
    %v1929 = vmul.f32 %v702, %v1921
    %v1930 = vmul.f32 %v706, %v1921
    %v1931 = vmul.f32 %v710, %v1921
    %v1932 = vmul.f32 %v714, %v1921
    %v1933 = vmul.f32 %v718, %v1921
    %v1934 = vmul.f32 %v722, %v1921
    %v1935 = vmul.f32 %v726, %v1921
    %v1936 = vmul.f32 %v730, %v1921
    %v1937 = vmul.f32 %v734, %v1921
    %v1938 = vadd.f32 %v1902, %v1922
    %v1939 = vadd.f32 %v1903, %v1923
    %v1940 = vadd.f32 %v1904, %v1924
    %v1941 = vadd.f32 %v1905, %v1925
    %v1942 = vadd.f32 %v1906, %v1926
    %v1943 = vadd.f32 %v1907, %v1927
    %v1944 = vadd.f32 %v1908, %v1928
    %v1945 = vadd.f32 %v1909, %v1929
    %v1946 = vadd.f32 %v1910, %v1930
    %v1947 = vadd.f32 %v1911, %v1931
    %v1948 = vadd.f32 %v1912, %v1932
    %v1949 = vadd.f32 %v1913, %v1933
    %v1950 = vadd.f32 %v1914, %v1934
    %v1951 = vadd.f32 %v1915, %v1935
    %v1952 = vadd.f32 %v1916, %v1936
    %v1953 = vadd.f32 %v1917, %v1937
    %v1954 = vadd.f32 %v1938, %v775
    %v1955 = vadd.f32 %v1939, %v780
    %v1956 = vadd.f32 %v1940, %v785
    %v1957 = vadd.f32 %v1941, %v790
    %v1958 = vadd.f32 %v1942, %v795
    %v1959 = vadd.f32 %v1943, %v800
    %v1960 = vadd.f32 %v1944, %v805
    %v1961 = vadd.f32 %v1945, %v810
    %v1962 = vadd.f32 %v1946, %v815
    %v1963 = vadd.f32 %v1947, %v820
    %v1964 = vadd.f32 %v1948, %v825
    %v1965 = vadd.f32 %v1949, %v830
    %v1966 = vadd.f32 %v1950, %v835
    %v1967 = vadd.f32 %v1951, %v840
    %v1968 = vadd.f32 %v1952, %v845
    %v1969 = vadd.f32 %v1953, %v850
    %v1970 = vmax.f32 %v1954, 0.0
    %v1971 = vmax.f32 %v1955, 0.0
    %v1972 = vmax.f32 %v1956, 0.0
    %v1973 = vmax.f32 %v1957, 0.0
    %v1974 = vmax.f32 %v1958, 0.0
    %v1975 = vmax.f32 %v1959, 0.0
    %v1976 = vmax.f32 %v1960, 0.0
    %v1977 = vmax.f32 %v1961, 0.0
    %v1978 = vmax.f32 %v1962, 0.0
    %v1979 = vmax.f32 %v1963, 0.0
    %v1980 = vmax.f32 %v1964, 0.0
    %v1981 = vmax.f32 %v1965, 0.0
    %v1982 = vmax.f32 %v1966, 0.0
    %v1983 = vmax.f32 %v1967, 0.0
    %v1984 = vmax.f32 %v1968, 0.0
    %v1985 = vmax.f32 %v1969, 0.0
    %v1986 = vpack.c.bf16 %v1971, %v1970
    %v1987 = vpack.c.bf16 %v1973, %v1972
    %v1988 = vpack.c.bf16 %v1975, %v1974
    %v1989 = vpack.c.bf16 %v1977, %v1976
    %v1990 = vpack.c.bf16 %v1979, %v1978
    %v1991 = vpack.c.bf16 %v1981, %v1980
    %v1992 = vpack.c.bf16 %v1983, %v1982
    %v1993 = vpack.c.bf16 %v1985, %v1984
    %1994 = vmatprep.subr.bf16.mxu0 0
    %1995 = vmatpush1.bf16.msra.mxu0 %v1986
    %1996 = vmatprep.subr.bf16.mxu0 0
    %1997 = vmatpush1.bf16.msra.mxu0 %v1987
    %1998 = vmatprep.subr.bf16.mxu0 0
    %1999 = vmatpush1.bf16.msra.mxu0 %v1988
    %2000 = vmatprep.subr.bf16.mxu0 0
    %2001 = vmatpush1.bf16.msra.mxu0 %v1989
    %2002 = vmatprep.subr.bf16.mxu0 0
    %2003 = vmatpush1.bf16.msra.mxu0 %v1990
    %2004 = vmatprep.subr.bf16.mxu0 0
    %2005 = vmatpush1.bf16.msra.mxu0 %v1991
    %2006 = vmatprep.subr.bf16.mxu0 0
    %2007 = vmatpush1.bf16.msra.mxu0 %v1992
    %2008 = vmatprep.subr.bf16.mxu0 0
    %2009 = vmatpush1.bf16.msra.mxu0 %v1993
    %2010 = vmatprep.subr.bf16.mxu0 0
    %2011 = vmatpush1.bf16.msra.mxu0 0
    %2012 = vmatprep.subr.bf16.mxu0 0
    %2013 = vmatpush1.bf16.msra.mxu0 0
    %2014 = vmatprep.subr.bf16.mxu0 0
    %2015 = vmatpush1.bf16.msra.mxu0 0
    %2016 = vmatprep.subr.bf16.mxu0 0
    %2017 = vmatpush1.bf16.msra.mxu0 0
    %2018 = vmatprep.subr.bf16.mxu0 0
    %2019 = vmatpush1.bf16.msra.mxu0 0
    %2020 = vmatprep.subr.bf16.mxu0 0
    %2021 = vmatpush1.bf16.msra.mxu0 0
    %2022 = vmatprep.subr.bf16.mxu0 0
    %2023 = vmatpush1.bf16.msra.mxu0 0
    %2024 = vmatprep.subr.bf16.mxu0 0
    %2025 = vmatpush1.bf16.msra.mxu0 0
    %2026 = vmatprep.mubr.bf16.mxu0 0
    %2027 = vmatmul.mubr.bf16.gmra.mrb[0].mxu0 %v988
    %v2028 = vpop.f32.mrb[0].mxu0
    %v2029 = vadd.f32 %v894, %v2028
    %v2030 = vpop.f32.mrb[0].mxu0
    %v2031 = vpop.f32.mrb[0].mxu0
    %v2032 = vadd.f32 %v898, %v2031
    %v2033 = vpop.f32.mrb[0].mxu0
    %2034 = vmatprep.mubr.bf16.mxu0 0
    %2035 = vmatmul.mubr.bf16.gmra.mrb[0].mxu0 %v989
    %v2036 = vpop.f32.mrb[0].mxu0
    %v2037 = vadd.f32 %v902, %v2036
    %v2038 = vpop.f32.mrb[0].mxu0
    %v2039 = vpop.f32.mrb[0].mxu0
    %v2040 = vadd.f32 %v906, %v2039
    %v2041 = vpop.f32.mrb[0].mxu0
    %2042 = vmatprep.mubr.bf16.mxu0 0
    %2043 = vmatmul.mubr.bf16.gmra.mrb[0].mxu0 %v990
    %v2044 = vpop.f32.mrb[0].mxu0
    %v2045 = vadd.f32 %v910, %v2044
    %v2046 = vpop.f32.mrb[0].mxu0
    %v2047 = vpop.f32.mrb[0].mxu0
    %v2048 = vadd.f32 %v914, %v2047
    %v2049 = vpop.f32.mrb[0].mxu0
    %2050 = vmatprep.mubr.bf16.mxu0 0
    %2051 = vmatmul.mubr.bf16.gmra.mrb[0].mxu0 %v991
    %v2052 = vpop.f32.mrb[0].mxu0
    %v2053 = vadd.f32 %v918, %v2052
    %v2054 = vpop.f32.mrb[0].mxu0
    %v2055 = vpop.f32.mrb[0].mxu0
    %v2056 = vadd.f32 %v922, %v2055
    %v2057 = vpop.f32.mrb[0].mxu0
    %2058 = vmatprep.mubr.bf16.mxu0 0
    %2059 = vmatmul.mubr.bf16.gmra.mrb[0].mxu0 %v992
    %v2060 = vpop.f32.mrb[0].mxu0
    %v2061 = vadd.f32 %v926, %v2060
    %v2062 = vpop.f32.mrb[0].mxu0
    %v2063 = vpop.f32.mrb[0].mxu0
    %v2064 = vadd.f32 %v930, %v2063
    %v2065 = vpop.f32.mrb[0].mxu0
    %2066 = vmatprep.mubr.bf16.mxu0 0
    %2067 = vmatmul.mubr.bf16.gmra.mrb[0].mxu0 %v993
    %v2068 = vpop.f32.mrb[0].mxu0
    %v2069 = vadd.f32 %v934, %v2068
    %v2070 = vpop.f32.mrb[0].mxu0
    %v2071 = vpop.f32.mrb[0].mxu0
    %v2072 = vadd.f32 %v938, %v2071
    %v2073 = vpop.f32.mrb[0].mxu0
    %2074 = vmatprep.mubr.bf16.mxu0 0
    %2075 = vmatmul.mubr.bf16.gmra.mrb[0].mxu0 %v994
    %v2076 = vpop.f32.mrb[0].mxu0
    %v2077 = vadd.f32 %v942, %v2076
    %v2078 = vpop.f32.mrb[0].mxu0
    %v2079 = vpop.f32.mrb[0].mxu0
    %v2080 = vadd.f32 %v946, %v2079
    %v2081 = vpop.f32.mrb[0].mxu0
    %2082 = vmatprep.mubr.bf16.mxu0 0
    %2083 = vmatmul.mubr.bf16.gmra.mrb[0].mxu0 %v995
    %v2084 = vpop.f32.mrb[0].mxu0
    %v2085 = vadd.f32 %v950, %v2084
    %v2086 = vpop.f32.mrb[0].mxu0
    %v2087 = vpop.f32.mrb[0].mxu0
    %v2088 = vadd.f32 %v954, %v2087
    %v2089 = vpop.f32.mrb[0].mxu0
    %2090 = vdwg.mxu0
    %v2091 = vmax.f32 %v2029, 0.0
    %v2092 = vmax.f32 %v2032, 0.0
    %v2093 = vmax.f32 %v2037, 0.0
    %v2094 = vmax.f32 %v2040, 0.0
    %v2095 = vmax.f32 %v2045, 0.0
    %v2096 = vmax.f32 %v2048, 0.0
    %v2097 = vmax.f32 %v2053, 0.0
    %v2098 = vmax.f32 %v2056, 0.0
    %v2099 = vmax.f32 %v2061, 0.0
    %v2100 = vmax.f32 %v2064, 0.0
    %v2101 = vmax.f32 %v2069, 0.0
    %v2102 = vmax.f32 %v2072, 0.0
    %v2103 = vmax.f32 %v2077, 0.0
    %v2104 = vmax.f32 %v2080, 0.0
    %v2105 = vmax.f32 %v2085, 0.0
    %v2106 = vmax.f32 %v2088, 0.0
    %v2107 = vpack.c.bf16 %v2092, %v2091
    %v2108 = vpack.c.bf16 %v2094, %v2093
    %v2109 = vpack.c.bf16 %v2096, %v2095
    %v2110 = vpack.c.bf16 %v2098, %v2097
    %v2111 = vpack.c.bf16 %v2100, %v2099
    %v2112 = vpack.c.bf16 %v2102, %v2101
    %v2113 = vpack.c.bf16 %v2104, %v2103
    %v2114 = vpack.c.bf16 %v2106, %v2105
    %2115 = vmatprep.subr.bf16.mxu0 0
    %2116 = vmatpush1.bf16.msra.mxu0 %v2107
    %2117 = vmatprep.subr.bf16.mxu0 0
    %2118 = vmatpush1.bf16.msra.mxu0 %v2108
    %2119 = vmatprep.subr.bf16.mxu0 0
    %2120 = vmatpush1.bf16.msra.mxu0 %v2109
    %2121 = vmatprep.subr.bf16.mxu0 0
    %2122 = vmatpush1.bf16.msra.mxu0 %v2110
    %2123 = vmatprep.subr.bf16.mxu0 0
    %2124 = vmatpush1.bf16.msra.mxu0 %v2111
    %2125 = vmatprep.subr.bf16.mxu0 0
    %2126 = vmatpush1.bf16.msra.mxu0 %v2112
    %2127 = vmatprep.subr.bf16.mxu0 0
    %2128 = vmatpush1.bf16.msra.mxu0 %v2113
    %2129 = vmatprep.subr.bf16.mxu0 0
    %2130 = vmatpush1.bf16.msra.mxu0 %v2114
    %2131 = vmatprep.subr.bf16.mxu0 0
    %2132 = vmatpush1.bf16.msra.mxu0 0
    %2133 = vmatprep.subr.bf16.mxu0 0
    %2134 = vmatpush1.bf16.msra.mxu0 0
    %2135 = vmatprep.subr.bf16.mxu0 0
    %2136 = vmatpush1.bf16.msra.mxu0 0
    %2137 = vmatprep.subr.bf16.mxu0 0
    %2138 = vmatpush1.bf16.msra.mxu0 0
    %2139 = vmatprep.subr.bf16.mxu0 0
    %2140 = vmatpush1.bf16.msra.mxu0 0
    %2141 = vmatprep.subr.bf16.mxu0 0
    %2142 = vmatpush1.bf16.msra.mxu0 0
    %2143 = vmatprep.subr.bf16.mxu0 0
    %2144 = vmatpush1.bf16.msra.mxu0 0
    %2145 = vmatprep.subr.bf16.mxu0 0
    %2146 = vmatpush1.bf16.msra.mxu0 0
    %2147 = vmatprep.mubr.bf16.mxu0 0
    %2148 = vmatmul.mubr.bf16.gmra.mrb[0].mxu0 %v1333
    %v2149 = vpop.f32.mrb[0].mxu0
    %v2150 = vadd.f32 %v1127, %v2149
    %v2151 = vpop.f32.mrb[0].mxu0
    %v2152 = vpop.f32.mrb[0].mxu0
    %v2153 = vadd.f32 %v1131, %v2152
    %v2154 = vpop.f32.mrb[0].mxu0
    %2155 = vmatprep.mubr.bf16.mxu0 0
    %2156 = vmatmul.mubr.bf16.gmra.mrb[0].mxu0 %v1334
    %v2157 = vpop.f32.mrb[0].mxu0
    %v2158 = vadd.f32 %v1135, %v2157
    %v2159 = vpop.f32.mrb[0].mxu0
    %v2160 = vpop.f32.mrb[0].mxu0
    %v2161 = vadd.f32 %v1139, %v2160
    %v2162 = vpop.f32.mrb[0].mxu0
    %2163 = vmatprep.mubr.bf16.mxu0 0
    %2164 = vmatmul.mubr.bf16.gmra.mrb[0].mxu0 %v1335
    %v2165 = vpop.f32.mrb[0].mxu0
    %v2166 = vadd.f32 %v1143, %v2165
    %v2167 = vpop.f32.mrb[0].mxu0
    %v2168 = vpop.f32.mrb[0].mxu0
    %v2169 = vadd.f32 %v1147, %v2168
    %v2170 = vpop.f32.mrb[0].mxu0
    %2171 = vmatprep.mubr.bf16.mxu0 0
    %2172 = vmatmul.mubr.bf16.gmra.mrb[0].mxu0 %v1336
    %v2173 = vpop.f32.mrb[0].mxu0
    %v2174 = vadd.f32 %v1151, %v2173
    %v2175 = vpop.f32.mrb[0].mxu0
    %v2176 = vpop.f32.mrb[0].mxu0
    %v2177 = vadd.f32 %v1155, %v2176
    %v2178 = vpop.f32.mrb[0].mxu0
    %2179 = vmatprep.mubr.bf16.mxu0 0
    %2180 = vmatmul.mubr.bf16.gmra.mrb[0].mxu0 %v1337
    %v2181 = vpop.f32.mrb[0].mxu0
    %v2182 = vadd.f32 %v1159, %v2181
    %v2183 = vpop.f32.mrb[0].mxu0
    %v2184 = vpop.f32.mrb[0].mxu0
    %v2185 = vadd.f32 %v1163, %v2184
    %v2186 = vpop.f32.mrb[0].mxu0
    %2187 = vmatprep.mubr.bf16.mxu0 0
    %2188 = vmatmul.mubr.bf16.gmra.mrb[0].mxu0 %v1338
    %v2189 = vpop.f32.mrb[0].mxu0
    %v2190 = vadd.f32 %v1167, %v2189
    %v2191 = vpop.f32.mrb[0].mxu0
    %v2192 = vpop.f32.mrb[0].mxu0
    %v2193 = vadd.f32 %v1171, %v2192
    %v2194 = vpop.f32.mrb[0].mxu0
    %2195 = vmatprep.mubr.bf16.mxu0 0
    %2196 = vmatmul.mubr.bf16.gmra.mrb[0].mxu0 %v1339
    %v2197 = vpop.f32.mrb[0].mxu0
    %v2198 = vadd.f32 %v1175, %v2197
    %v2199 = vpop.f32.mrb[0].mxu0
    %v2200 = vpop.f32.mrb[0].mxu0
    %v2201 = vadd.f32 %v1179, %v2200
    %v2202 = vpop.f32.mrb[0].mxu0
    %2203 = vmatprep.mubr.bf16.mxu0 0
    %2204 = vmatmul.mubr.bf16.gmra.mrb[0].mxu0 %v1340
    %v2205 = vpop.f32.mrb[0].mxu0
    %v2206 = vadd.f32 %v1183, %v2205
    %v2207 = vpop.f32.mrb[0].mxu0
    %v2208 = vpop.f32.mrb[0].mxu0
    %v2209 = vadd.f32 %v1187, %v2208
    %v2210 = vpop.f32.mrb[0].mxu0
    %2211 = vmatprep.mubr.bf16.mxu0 0
    %2212 = vmatmul.mubr.bf16.gmra.mrb[0].mxu0 %v1341
    %v2213 = vpop.f32.mrb[0].mxu0
    %v2214 = vadd.f32 %v1192, %v2213
    %v2215 = vpop.f32.mrb[0].mxu0
    %v2216 = vpop.f32.mrb[0].mxu0
    %v2217 = vadd.f32 %v1197, %v2216
    %v2218 = vpop.f32.mrb[0].mxu0
    %2219 = vmatprep.mubr.bf16.mxu0 0
    %2220 = vmatmul.mubr.bf16.gmra.mrb[0].mxu0 %v1342
    %v2221 = vpop.f32.mrb[0].mxu0
    %v2222 = vadd.f32 %v1202, %v2221
    %v2223 = vpop.f32.mrb[0].mxu0
    %v2224 = vpop.f32.mrb[0].mxu0
    %v2225 = vadd.f32 %v1207, %v2224
    %v2226 = vpop.f32.mrb[0].mxu0
    %2227 = vmatprep.mubr.bf16.mxu0 0
    %2228 = vmatmul.mubr.bf16.gmra.mrb[0].mxu0 %v1343
    %v2229 = vpop.f32.mrb[0].mxu0
    %v2230 = vadd.f32 %v1212, %v2229
    %v2231 = vpop.f32.mrb[0].mxu0
    %v2232 = vpop.f32.mrb[0].mxu0
    %v2233 = vadd.f32 %v1217, %v2232
    %v2234 = vpop.f32.mrb[0].mxu0
    %2235 = vmatprep.mubr.bf16.mxu0 0
    %2236 = vmatmul.mubr.bf16.gmra.mrb[0].mxu0 %v1344
    %v2237 = vpop.f32.mrb[0].mxu0
    %v2238 = vadd.f32 %v1222, %v2237
    %v2239 = vpop.f32.mrb[0].mxu0
    %v2240 = vpop.f32.mrb[0].mxu0
    %v2241 = vadd.f32 %v1227, %v2240
    %v2242 = vpop.f32.mrb[0].mxu0
    %2243 = vmatprep.mubr.bf16.mxu0 0
    %2244 = vmatmul.mubr.bf16.gmra.mrb[0].mxu0 %v1345
    %v2245 = vpop.f32.mrb[0].mxu0
    %v2246 = vadd.f32 %v1232, %v2245
    %v2247 = vpop.f32.mrb[0].mxu0
    %v2248 = vpop.f32.mrb[0].mxu0
    %v2249 = vadd.f32 %v1237, %v2248
    %v2250 = vpop.f32.mrb[0].mxu0
    %2251 = vmatprep.mubr.bf16.mxu0 0
    %2252 = vmatmul.mubr.bf16.gmra.mrb[0].mxu0 %v1346
    %v2253 = vpop.f32.mrb[0].mxu0
    %v2254 = vadd.f32 %v1242, %v2253
    %v2255 = vpop.f32.mrb[0].mxu0
    %v2256 = vpop.f32.mrb[0].mxu0
    %v2257 = vadd.f32 %v1247, %v2256
    %v2258 = vpop.f32.mrb[0].mxu0
    %2259 = vmatprep.mubr.bf16.mxu0 0
    %2260 = vmatmul.mubr.bf16.gmra.mrb[0].mxu0 %v1347
    %v2261 = vpop.f32.mrb[0].mxu0
    %v2262 = vadd.f32 %v1252, %v2261
    %v2263 = vpop.f32.mrb[0].mxu0
    %v2264 = vpop.f32.mrb[0].mxu0
    %v2265 = vadd.f32 %v1257, %v2264
    %v2266 = vpop.f32.mrb[0].mxu0
    %2267 = vmatprep.mubr.bf16.mxu0 0
    %2268 = vmatmul.mubr.bf16.gmra.mrb[0].mxu0 %v1348
    %v2269 = vpop.f32.mrb[0].mxu0
    %v2270 = vadd.f32 %v1262, %v2269
    %v2271 = vpop.f32.mrb[0].mxu0
    %v2272 = vpop.f32.mrb[0].mxu0
    %v2273 = vadd.f32 %v1267, %v2272
    %v2274 = vpop.f32.mrb[0].mxu0
    %2275 = vdwg.mxu0
    %v2276 = vmax.f32 %v2150, 0.0
    %v2277 = vmax.f32 %v2153, 0.0
    %v2278 = vmax.f32 %v2158, 0.0
    %v2279 = vmax.f32 %v2161, 0.0
    %v2280 = vmax.f32 %v2166, 0.0
    %v2281 = vmax.f32 %v2169, 0.0
    %v2282 = vmax.f32 %v2174, 0.0
    %v2283 = vmax.f32 %v2177, 0.0
    %v2284 = vmax.f32 %v2182, 0.0
    %v2285 = vmax.f32 %v2185, 0.0
    %v2286 = vmax.f32 %v2190, 0.0
    %v2287 = vmax.f32 %v2193, 0.0
    %v2288 = vmax.f32 %v2198, 0.0
    %v2289 = vmax.f32 %v2201, 0.0
    %v2290 = vmax.f32 %v2206, 0.0
    %v2291 = vmax.f32 %v2209, 0.0
    %v2292 = vmax.f32 %v2214, 0.0
    %v2293 = vmax.f32 %v2217, 0.0
    %v2294 = vmax.f32 %v2222, 0.0
    %v2295 = vmax.f32 %v2225, 0.0
    %v2296 = vmax.f32 %v2230, 0.0
    %v2297 = vmax.f32 %v2233, 0.0
    %v2298 = vmax.f32 %v2238, 0.0
    %v2299 = vmax.f32 %v2241, 0.0
    %v2300 = vmax.f32 %v2246, 0.0
    %v2301 = vmax.f32 %v2249, 0.0
    %v2302 = vmax.f32 %v2254, 0.0
    %v2303 = vmax.f32 %v2257, 0.0
    %v2304 = vmax.f32 %v2262, 0.0
    %v2305 = vmax.f32 %v2265, 0.0
    %v2306 = vmax.f32 %v2270, 0.0
    %v2307 = vmax.f32 %v2273, 0.0
    %v2308 = vsel %vm1558, %v2276, -inf
    %2309 = vmax.xlane.f32.xlu0 %v2308
    %v2310 = vpop.xlane.xlu0 %2309
    %v2311 = vsel %vm1558, %v2277, -inf
    %2312 = vmax.xlane.f32.xlu0 %v2311
    %v2313 = vpop.xlane.xlu0 %2312
    %v2314 = vsel %vm1558, %v2278, -inf
    %2315 = vmax.xlane.f32.xlu0 %v2314
    %v2316 = vpop.xlane.xlu0 %2315
    %v2317 = vsel %vm1558, %v2279, -inf
    %2318 = vmax.xlane.f32.xlu0 %v2317
    %v2319 = vpop.xlane.xlu0 %2318
    %v2320 = vsel %vm1558, %v2280, -inf
    %2321 = vmax.xlane.f32.xlu0 %v2320
    %v2322 = vpop.xlane.xlu0 %2321
    %v2323 = vsel %vm1558, %v2281, -inf
    %2324 = vmax.xlane.f32.xlu0 %v2323
    %v2325 = vpop.xlane.xlu0 %2324
    %v2326 = vsel %vm1558, %v2282, -inf
    %2327 = vmax.xlane.f32.xlu0 %v2326
    %v2328 = vpop.xlane.xlu0 %2327
    %v2329 = vsel %vm1558, %v2283, -inf
    %2330 = vmax.xlane.f32.xlu0 %v2329
    %v2331 = vpop.xlane.xlu0 %2330
    %v2332 = vsel %vm1558, %v2284, -inf
    %2333 = vmax.xlane.f32.xlu0 %v2332
    %v2334 = vpop.xlane.xlu0 %2333
    %v2335 = vsel %vm1558, %v2285, -inf
    %2336 = vmax.xlane.f32.xlu0 %v2335
    %v2337 = vpop.xlane.xlu0 %2336
    %v2338 = vsel %vm1558, %v2286, -inf
    %2339 = vmax.xlane.f32.xlu0 %v2338
    %v2340 = vpop.xlane.xlu0 %2339
    %v2341 = vsel %vm1558, %v2287, -inf
    %2342 = vmax.xlane.f32.xlu0 %v2341
    %v2343 = vpop.xlane.xlu0 %2342
    %v2344 = vsel %vm1558, %v2288, -inf
    %2345 = vmax.xlane.f32.xlu0 %v2344
    %v2346 = vpop.xlane.xlu0 %2345
    %v2347 = vsel %vm1558, %v2289, -inf
    %2348 = vmax.xlane.f32.xlu0 %v2347
    %v2349 = vpop.xlane.xlu0 %2348
    %v2350 = vsel %vm1558, %v2290, -inf
    %2351 = vmax.xlane.f32.xlu0 %v2350
    %v2352 = vpop.xlane.xlu0 %2351
    %v2353 = vsel %vm1558, %v2291, -inf
    %2354 = vmax.xlane.f32.xlu0 %v2353
    %v2355 = vpop.xlane.xlu0 %2354
    %v2356 = vsel %vm1558, %v2292, -inf
    %2357 = vmax.xlane.f32.xlu0 %v2356
    %v2358 = vpop.xlane.xlu0 %2357
    %v2359 = vsel %vm1558, %v2293, -inf
    %2360 = vmax.xlane.f32.xlu0 %v2359
    %v2361 = vpop.xlane.xlu0 %2360
    %v2362 = vsel %vm1558, %v2294, -inf
    %2363 = vmax.xlane.f32.xlu0 %v2362
    %v2364 = vpop.xlane.xlu0 %2363
    %v2365 = vsel %vm1558, %v2295, -inf
    %2366 = vmax.xlane.f32.xlu0 %v2365
    %v2367 = vpop.xlane.xlu0 %2366
    %v2368 = vsel %vm1558, %v2296, -inf
    %2369 = vmax.xlane.f32.xlu0 %v2368
    %v2370 = vpop.xlane.xlu0 %2369
    %v2371 = vsel %vm1558, %v2297, -inf
    %2372 = vmax.xlane.f32.xlu0 %v2371
    %v2373 = vpop.xlane.xlu0 %2372
    %v2374 = vsel %vm1558, %v2298, -inf
    %2375 = vmax.xlane.f32.xlu0 %v2374
    %v2376 = vpop.xlane.xlu0 %2375
    %v2377 = vsel %vm1558, %v2299, -inf
    %2378 = vmax.xlane.f32.xlu0 %v2377
    %v2379 = vpop.xlane.xlu0 %2378
    %v2380 = vsel %vm1558, %v2300, -inf
    %2381 = vmax.xlane.f32.xlu0 %v2380
    %v2382 = vpop.xlane.xlu0 %2381
    %v2383 = vsel %vm1558, %v2301, -inf
    %2384 = vmax.xlane.f32.xlu0 %v2383
    %v2385 = vpop.xlane.xlu0 %2384
    %v2386 = vsel %vm1558, %v2302, -inf
    %2387 = vmax.xlane.f32.xlu0 %v2386
    %v2388 = vpop.xlane.xlu0 %2387
    %v2389 = vsel %vm1558, %v2303, -inf
    %2390 = vmax.xlane.f32.xlu0 %v2389
    %v2391 = vpop.xlane.xlu0 %2390
    %v2392 = vsel %vm1558, %v2304, -inf
    %2393 = vmax.xlane.f32.xlu0 %v2392
    %v2394 = vpop.xlane.xlu0 %2393
    %v2395 = vsel %vm1558, %v2305, -inf
    %2396 = vmax.xlane.f32.xlu0 %v2395
    %v2397 = vpop.xlane.xlu0 %2396
    %v2398 = vsel %vm1558, %v2306, -inf
    %2399 = vmax.xlane.f32.xlu0 %v2398
    %v2400 = vpop.xlane.xlu0 %2399
    %v2401 = vsel %vm1558, %v2307, -inf
    %2402 = vmax.xlane.f32.xlu0 %v2401
    %v2403 = vpop.xlane.xlu0 %2402
    %v2404 = vld [vmem:[#allocation2] sm:$0xff]
    %v2405 = vld [vmem:[#allocation2 + $0x8] sm:$0xff]
    %v2406 = vld [vmem:[#allocation2 + $0x10] sm:$0xff]
    %v2407 = vld [vmem:[#allocation2 + $0x18] sm:$0xff]
    %v2408 = vld [vmem:[#allocation2 + $0x20] sm:$0xff]
    %v2409 = vld [vmem:[#allocation2 + $0x28] sm:$0xff]
    %v2410 = vld [vmem:[#allocation2 + $0x30] sm:$0xff]
    %v2411 = vld [vmem:[#allocation2 + $0x38] sm:$0xff]
    %v2412 = vld [vmem:[#allocation2 + $0x40] sm:$0xff]
    %v2413 = vld [vmem:[#allocation2 + $0x48] sm:$0xff]
    %v2414 = vld [vmem:[#allocation2 + $0x50] sm:$0xff]
    %v2415 = vld [vmem:[#allocation2 + $0x58] sm:$0xff]
    %v2416 = vld [vmem:[#allocation2 + $0x60] sm:$0xff]
    %v2417 = vld [vmem:[#allocation2 + $0x68] sm:$0xff]
    %v2418 = vld [vmem:[#allocation2 + $0x70] sm:$0xff]
    %v2419 = vld [vmem:[#allocation2 + $0x78] sm:$0xff]
    %v2420 = vld [vmem:[#allocation2 + $0x80] sm:$0xff]
    %v2421 = vld [vmem:[#allocation2 + $0x88] sm:$0xff]
    %v2422 = vld [vmem:[#allocation2 + $0x90] sm:$0xff]
    %v2423 = vld [vmem:[#allocation2 + $0x98] sm:$0xff]
    %v2424 = vld [vmem:[#allocation2 + $0xa0] sm:$0xff]
    %v2425 = vld [vmem:[#allocation2 + $0xa8] sm:$0xff]
    %v2426 = vld [vmem:[#allocation2 + $0xb0] sm:$0xff]
    %v2427 = vld [vmem:[#allocation2 + $0xb8] sm:$0xff]
    %v2428 = vld [vmem:[#allocation2 + $0xc0] sm:$0xff]
    %v2429 = vld [vmem:[#allocation2 + $0xc8] sm:$0xff]
    %v2430 = vld [vmem:[#allocation2 + $0xd0] sm:$0xff]
    %v2431 = vld [vmem:[#allocation2 + $0xd8] sm:$0xff]
    %v2432 = vld [vmem:[#allocation2 + $0xe0] sm:$0xff]
    %v2433 = vld [vmem:[#allocation2 + $0xe8] sm:$0xff]
    %v2434 = vld [vmem:[#allocation2 + $0xf0] sm:$0xff]
    %v2435 = vld [vmem:[#allocation2 + $0xf8] sm:$0xff]
    %v2436 = vmax.f32 %v2404, %v2310
    %v2437 = vmax.f32 %v2405, %v2313
    %v2438 = vmax.f32 %v2406, %v2316
    %v2439 = vmax.f32 %v2407, %v2319
    %v2440 = vmax.f32 %v2408, %v2322
    %v2441 = vmax.f32 %v2409, %v2325
    %v2442 = vmax.f32 %v2410, %v2328
    %v2443 = vmax.f32 %v2411, %v2331
    %v2444 = vmax.f32 %v2412, %v2334
    %v2445 = vmax.f32 %v2413, %v2337
    %v2446 = vmax.f32 %v2414, %v2340
    %v2447 = vmax.f32 %v2415, %v2343
    %v2448 = vmax.f32 %v2416, %v2346
    %v2449 = vmax.f32 %v2417, %v2349
    %v2450 = vmax.f32 %v2418, %v2352
    %v2451 = vmax.f32 %v2419, %v2355
    %v2452 = vmax.f32 %v2420, %v2358
    %v2453 = vmax.f32 %v2421, %v2361
    %v2454 = vmax.f32 %v2422, %v2364
    %v2455 = vmax.f32 %v2423, %v2367
    %v2456 = vmax.f32 %v2424, %v2370
    %v2457 = vmax.f32 %v2425, %v2373
    %v2458 = vmax.f32 %v2426, %v2376
    %v2459 = vmax.f32 %v2427, %v2379
    %v2460 = vmax.f32 %v2428, %v2382
    %v2461 = vmax.f32 %v2429, %v2385
    %v2462 = vmax.f32 %v2430, %v2388
    %v2463 = vmax.f32 %v2431, %v2391
    %v2464 = vmax.f32 %v2432, %v2394
    %v2465 = vmax.f32 %v2433, %v2397
    %v2466 = vmax.f32 %v2434, %v2400
    %v2467 = vmax.f32 %v2435, %v2403
    %vm2468 = vcmask 15368
    %2469 = vst.msk [vmem:[#allocation2] sm:$0xff] %vm2468, %v2436
    %2470 = vst.msk [vmem:[#allocation2 + $0x8] sm:$0xff] %vm2468, %v2437
    %2471 = vst.msk [vmem:[#allocation2 + $0x10] sm:$0xff] %vm2468, %v2438
    %2472 = vst.msk [vmem:[#allocation2 + $0x18] sm:$0xff] %vm2468, %v2439
    %2473 = vst.msk [vmem:[#allocation2 + $0x20] sm:$0xff] %vm2468, %v2440
    %2474 = vst.msk [vmem:[#allocation2 + $0x28] sm:$0xff] %vm2468, %v2441
    %2475 = vst.msk [vmem:[#allocation2 + $0x30] sm:$0xff] %vm2468, %v2442
    %2476 = vst.msk [vmem:[#allocation2 + $0x38] sm:$0xff] %vm2468, %v2443
    %2477 = vst.msk [vmem:[#allocation2 + $0x40] sm:$0xff] %vm2468, %v2444
    %2478 = vst.msk [vmem:[#allocation2 + $0x48] sm:$0xff] %vm2468, %v2445
    %2479 = vst.msk [vmem:[#allocation2 + $0x50] sm:$0xff] %vm2468, %v2446
    %2480 = vst.msk [vmem:[#allocation2 + $0x58] sm:$0xff] %vm2468, %v2447
    %2481 = vst.msk [vmem:[#allocation2 + $0x60] sm:$0xff] %vm2468, %v2448
    %2482 = vst.msk [vmem:[#allocation2 + $0x68] sm:$0xff] %vm2468, %v2449
    %2483 = vst.msk [vmem:[#allocation2 + $0x70] sm:$0xff] %vm2468, %v2450
    %2484 = vst.msk [vmem:[#allocation2 + $0x78] sm:$0xff] %vm2468, %v2451
    %2485 = vst.msk [vmem:[#allocation2 + $0x80] sm:$0xff] %vm2468, %v2452
    %2486 = vst.msk [vmem:[#allocation2 + $0x88] sm:$0xff] %vm2468, %v2453
    %2487 = vst.msk [vmem:[#allocation2 + $0x90] sm:$0xff] %vm2468, %v2454
    %2488 = vst.msk [vmem:[#allocation2 + $0x98] sm:$0xff] %vm2468, %v2455
    %2489 = vst.msk [vmem:[#allocation2 + $0xa0] sm:$0xff] %vm2468, %v2456
    %2490 = vst.msk [vmem:[#allocation2 + $0xa8] sm:$0xff] %vm2468, %v2457
    %2491 = vst.msk [vmem:[#allocation2 + $0xb0] sm:$0xff] %vm2468, %v2458
    %2492 = vst.msk [vmem:[#allocation2 + $0xb8] sm:$0xff] %vm2468, %v2459
    %2493 = vst.msk [vmem:[#allocation2 + $0xc0] sm:$0xff] %vm2468, %v2460
    %2494 = vst.msk [vmem:[#allocation2 + $0xc8] sm:$0xff] %vm2468, %v2461
    %2495 = vst.msk [vmem:[#allocation2 + $0xd0] sm:$0xff] %vm2468, %v2462
    %2496 = vst.msk [vmem:[#allocation2 + $0xd8] sm:$0xff] %vm2468, %v2463
    %2497 = vst.msk [vmem:[#allocation2 + $0xe0] sm:$0xff] %vm2468, %v2464
    %2498 = vst.msk [vmem:[#allocation2 + $0xe8] sm:$0xff] %vm2468, %v2465
    %2499 = vst.msk [vmem:[#allocation2 + $0xf0] sm:$0xff] %vm2468, %v2466
    %2500 = vst.msk [vmem:[#allocation2 + $0xf8] sm:$0xff] %vm2468, %v2467
    // Predicated region
    $region42: #{tpu_custom_call.1} parent=1 // pred_check
      %p2501 = pneg %p38
    $region43: #{tpu_custom_call.1} parent=1 // pred_check_branch
      %2503 = sbr.rel (%p2501) target = $region45
    $region44: #{tpu_custom_call.1} parent=1 // pred_region
      %v2504 = vld [vmem:[#allocation2] sm:$0xff]
      %v2505 = vld [vmem:[#allocation2 + $0x8] sm:$0xff]
      %v2506 = vld [vmem:[#allocation2 + $0x10] sm:$0xff]
      %v2507 = vld [vmem:[#allocation2 + $0x18] sm:$0xff]
      %v2508 = vld [vmem:[#allocation2 + $0x20] sm:$0xff]
      %v2509 = vld [vmem:[#allocation2 + $0x28] sm:$0xff]
      %v2510 = vld [vmem:[#allocation2 + $0x30] sm:$0xff]
      %v2511 = vld [vmem:[#allocation2 + $0x38] sm:$0xff]
      %v2512 = vld [vmem:[#allocation2 + $0x40] sm:$0xff]
      %v2513 = vld [vmem:[#allocation2 + $0x48] sm:$0xff]
      %v2514 = vld [vmem:[#allocation2 + $0x50] sm:$0xff]
      %v2515 = vld [vmem:[#allocation2 + $0x58] sm:$0xff]
      %v2516 = vld [vmem:[#allocation2 + $0x60] sm:$0xff]
      %v2517 = vld [vmem:[#allocation2 + $0x68] sm:$0xff]
      %v2518 = vld [vmem:[#allocation2 + $0x70] sm:$0xff]
      %v2519 = vld [vmem:[#allocation2 + $0x78] sm:$0xff]
      %v2520 = vld [vmem:[#allocation2 + $0x80] sm:$0xff]
      %v2521 = vld [vmem:[#allocation2 + $0x88] sm:$0xff]
      %v2522 = vld [vmem:[#allocation2 + $0x90] sm:$0xff]
      %v2523 = vld [vmem:[#allocation2 + $0x98] sm:$0xff]
      %v2524 = vld [vmem:[#allocation2 + $0xa0] sm:$0xff]
      %v2525 = vld [vmem:[#allocation2 + $0xa8] sm:$0xff]
      %v2526 = vld [vmem:[#allocation2 + $0xb0] sm:$0xff]
      %v2527 = vld [vmem:[#allocation2 + $0xb8] sm:$0xff]
      %v2528 = vld [vmem:[#allocation2 + $0xc0] sm:$0xff]
      %v2529 = vld [vmem:[#allocation2 + $0xc8] sm:$0xff]
      %v2530 = vld [vmem:[#allocation2 + $0xd0] sm:$0xff]
      %v2531 = vld [vmem:[#allocation2 + $0xd8] sm:$0xff]
      %v2532 = vld [vmem:[#allocation2 + $0xe0] sm:$0xff]
      %v2533 = vld [vmem:[#allocation2 + $0xe8] sm:$0xff]
      %v2534 = vld [vmem:[#allocation2 + $0xf0] sm:$0xff]
      %v2535 = vld [vmem:[#allocation2 + $0xf8] sm:$0xff]
      %2536 = vxpose.xlu0.b32.start [1/16] %v2504, 128
      %2537 = vxpose.xlu0.b32.cont [2/16] %v2505, 128
      %2538 = vxpose.xlu0.b32.cont [3/16] %v2506, 128
      %2539 = vxpose.xlu0.b32.cont [4/16] %v2507, 128
      %2540 = vxpose.xlu0.b32.cont [5/16] %v2508, 128
      %2541 = vxpose.xlu0.b32.cont [6/16] %v2509, 128
      %2542 = vxpose.xlu0.b32.cont [7/16] %v2510, 128
      %2543 = vxpose.xlu0.b32.cont [8/16] %v2511, 128
      %2544 = vxpose.xlu0.b32.cont [9/16] %v2512, 128
      %2545 = vxpose.xlu0.b32.cont [10/16] %v2513, 128
      %2546 = vxpose.xlu0.b32.cont [11/16] %v2514, 128
      %2547 = vxpose.xlu0.b32.cont [12/16] %v2515, 128
      %2548 = vxpose.xlu0.b32.cont [13/16] %v2516, 128
      %2549 = vxpose.xlu0.b32.cont [14/16] %v2517, 128
      %2550 = vxpose.xlu0.b32.cont [15/16] %v2518, 128
      %2551 = vxpose.xlu0.b32.end [16/16] %v2519, 128
      %v2552 = vpop.trf.xlu0
      %v2553 = vpop.trf.xlu0
      %v2554 = vpop.trf.xlu0
      %v2555 = vpop.trf.xlu0
      %v2556 = vpop.trf.xlu0
      %v2557 = vpop.trf.xlu0
      %v2558 = vpop.trf.xlu0
      %v2559 = vpop.trf.xlu0
      %v2560 = vpop.trf.xlu0
      %v2561 = vpop.trf.xlu0
      %v2562 = vpop.trf.xlu0
      %v2563 = vpop.trf.xlu0
      %v2564 = vpop.trf.xlu0
      %v2565 = vpop.trf.xlu0
      %v2566 = vpop.trf.xlu0
      %v2567 = vpop.trf.xlu0
      %2568 = vxpose.xlu0.b32.start [1/16] %v2520, 128
      %2569 = vxpose.xlu0.b32.cont [2/16] %v2521, 128
      %2570 = vxpose.xlu0.b32.cont [3/16] %v2522, 128
      %2571 = vxpose.xlu0.b32.cont [4/16] %v2523, 128
      %2572 = vxpose.xlu0.b32.cont [5/16] %v2524, 128
      %2573 = vxpose.xlu0.b32.cont [6/16] %v2525, 128
      %2574 = vxpose.xlu0.b32.cont [7/16] %v2526, 128
      %2575 = vxpose.xlu0.b32.cont [8/16] %v2527, 128
      %2576 = vxpose.xlu0.b32.cont [9/16] %v2528, 128
      %2577 = vxpose.xlu0.b32.cont [10/16] %v2529, 128
      %2578 = vxpose.xlu0.b32.cont [11/16] %v2530, 128
      %2579 = vxpose.xlu0.b32.cont [12/16] %v2531, 128
      %2580 = vxpose.xlu0.b32.cont [13/16] %v2532, 128
      %2581 = vxpose.xlu0.b32.cont [14/16] %v2533, 128
      %2582 = vxpose.xlu0.b32.cont [15/16] %v2534, 128
      %2583 = vxpose.xlu0.b32.end [16/16] %v2535, 128
      %v2584 = vpop.trf.xlu0
      %v2585 = vpop.trf.xlu0
      %v2586 = vpop.trf.xlu0
      %v2587 = vpop.trf.xlu0
      %v2588 = vpop.trf.xlu0
      %v2589 = vpop.trf.xlu0
      %v2590 = vpop.trf.xlu0
      %v2591 = vpop.trf.xlu0
      %v2592 = vpop.trf.xlu0
      %v2593 = vpop.trf.xlu0
      %v2594 = vpop.trf.xlu0
      %v2595 = vpop.trf.xlu0
      %v2596 = vpop.trf.xlu0
      %v2597 = vpop.trf.xlu0
      %v2598 = vpop.trf.xlu0
      %v2599 = vpop.trf.xlu0
      %v2602 = vcombine.low %v2552, %v2584
      %v2604 = vunpack.c.l.s4 1983009808
      %v2605 = vunpack.c.0.s8 %v2604
      %v2606 = vlaneseq
      %v2607 = vshrl.u32 %v2606, 7
      %v2608 = vsub.s32 %v2605, %v2607
      %v2609 = vrot.slane %v2602, %v2608
      %2611 = vst [vmem:[#allocation5] sm:$0xf] %v2609
      %v2612 = vld [vmem:[%s8] sm:$0x1]
      %v2613 = vld [vmem:[%s8 + $0x1] sm:$0x1]
      %v2614 = vpack.c.bf16 %v2552, %v2552
      %v2615 = vpack.c.bf16 %v2584, %v2584
      %v2616 = vld [vmem:[%s5] sm:$0xf]
      %v2617 = vld [vmem:[%s5 + $0x4] sm:$0xf]
      %v2618 = vld [vmem:[%s5 + $0x8] sm:$0xf]
      %v2619 = vld [vmem:[%s5 + $0xc] sm:$0xf]
      %v2620 = vld [vmem:[%s5 + $0x10] sm:$0xf]
      %v2621 = vld [vmem:[%s5 + $0x14] sm:$0xf]
      %v2622 = vld [vmem:[%s5 + $0x18] sm:$0xf]
      %v2623 = vld [vmem:[%s5 + $0x1c] sm:$0xf]
      %v2624 = vld [vmem:[%s5 + $0x20] sm:$0xf]
      %v2625 = vld [vmem:[%s5 + $0x24] sm:$0xf]
      %v2626 = vld [vmem:[%s5 + $0x28] sm:$0xf]
      %v2627 = vld [vmem:[%s5 + $0x2c] sm:$0xf]
      %v2628 = vld [vmem:[%s5 + $0x30] sm:$0xf]
      %v2629 = vld [vmem:[%s5 + $0x34] sm:$0xf]
      %v2630 = vld [vmem:[%s5 + $0x38] sm:$0xf]
      %v2631 = vld [vmem:[%s5 + $0x3c] sm:$0xf]
      %v2632 = vld [vmem:[%s5 + $0x40] sm:$0xf]
      %v2633 = vld [vmem:[%s5 + $0x44] sm:$0xf]
      %v2634 = vld [vmem:[%s5 + $0x48] sm:$0xf]
      %v2635 = vld [vmem:[%s5 + $0x4c] sm:$0xf]
      %v2636 = vld [vmem:[%s5 + $0x50] sm:$0xf]
      %v2637 = vld [vmem:[%s5 + $0x54] sm:$0xf]
      %v2638 = vld [vmem:[%s5 + $0x58] sm:$0xf]
      %v2639 = vld [vmem:[%s5 + $0x5c] sm:$0xf]
      %v2640 = vld [vmem:[%s5 + $0x60] sm:$0xf]
      %v2641 = vld [vmem:[%s5 + $0x64] sm:$0xf]
      %v2642 = vld [vmem:[%s5 + $0x68] sm:$0xf]
      %v2643 = vld [vmem:[%s5 + $0x6c] sm:$0xf]
      %v2644 = vld [vmem:[%s5 + $0x70] sm:$0xf]
      %v2645 = vld [vmem:[%s5 + $0x74] sm:$0xf]
      %v2646 = vld [vmem:[%s5 + $0x78] sm:$0xf]
      %v2647 = vld [vmem:[%s5 + $0x7c] sm:$0xf]
      %v2649 = vlaneseq
      %v2650 = vshrl.u32 %v2649, 7
      %v2651 = vsub.s32 0, %v2650
      %v2652 = vrot.slane %v2612, %v2651
      %v2686 = vunpack.c.l.b16 %v2616
      %v2687 = vunpack.c.l.b16 %v2617
      %v2688 = vunpack.c.l.b16 %v2618
      %v2689 = vunpack.c.l.b16 %v2619
      %v2690 = vunpack.c.l.b16 %v2620
      %v2691 = vunpack.c.l.b16 %v2621
      %v2692 = vunpack.c.l.b16 %v2622
      %v2693 = vunpack.c.l.b16 %v2623
      %v2694 = vunpack.c.l.b16 %v2624
      %v2695 = vunpack.c.l.b16 %v2625
      %v2696 = vunpack.c.l.b16 %v2626
      %v2697 = vunpack.c.l.b16 %v2627
      %v2698 = vunpack.c.l.b16 %v2628
      %v2699 = vunpack.c.l.b16 %v2629
      %v2700 = vunpack.c.l.b16 %v2630
      %v2701 = vunpack.c.l.b16 %v2631
      %v2702 = vunpack.c.l.b16 %v2632
      %v2703 = vunpack.c.l.b16 %v2633
      %v2704 = vunpack.c.l.b16 %v2634
      %v2705 = vunpack.c.l.b16 %v2635
      %v2706 = vunpack.c.l.b16 %v2636
      %v2707 = vunpack.c.l.b16 %v2637
      %v2708 = vunpack.c.l.b16 %v2638
      %v2709 = vunpack.c.l.b16 %v2639
      %v2710 = vunpack.c.l.b16 %v2640
      %v2711 = vunpack.c.l.b16 %v2641
      %v2712 = vunpack.c.l.b16 %v2642
      %v2713 = vunpack.c.l.b16 %v2643
      %v2714 = vunpack.c.l.b16 %v2644
      %v2715 = vunpack.c.l.b16 %v2645
      %v2716 = vunpack.c.l.b16 %v2646
      %v2717 = vunpack.c.l.b16 %v2647
      %v2718 = vpack.c.b16 %v2687, %v2686
      %v2719 = vpack.c.b16 %v2689, %v2688
      %v2720 = vpack.c.b16 %v2691, %v2690
      %v2721 = vpack.c.b16 %v2693, %v2692
      %v2722 = vpack.c.b16 %v2695, %v2694
      %v2723 = vpack.c.b16 %v2697, %v2696
      %v2724 = vpack.c.b16 %v2699, %v2698
      %v2725 = vpack.c.b16 %v2701, %v2700
      %v2726 = vpack.c.b16 %v2703, %v2702
      %v2727 = vpack.c.b16 %v2705, %v2704
      %v2728 = vpack.c.b16 %v2707, %v2706
      %v2729 = vpack.c.b16 %v2709, %v2708
      %v2730 = vpack.c.b16 %v2711, %v2710
      %v2731 = vpack.c.b16 %v2713, %v2712
      %v2732 = vpack.c.b16 %v2715, %v2714
      %v2733 = vpack.c.b16 %v2717, %v2716
      %2750 = vmatprep.subr.bf16.mxu0 0
      %2751 = vmatpush1.bf16.msra.mxu0 %v2718
      %2752 = vmatprep.subr.bf16.mxu0 0
      %2753 = vmatpush1.bf16.msra.mxu0 %v2719
      %2754 = vmatprep.subr.bf16.mxu0 0
      %2755 = vmatpush1.bf16.msra.mxu0 %v2720
      %2756 = vmatprep.subr.bf16.mxu0 0
      %2757 = vmatpush1.bf16.msra.mxu0 %v2721
      %2758 = vmatprep.subr.bf16.mxu0 0
      %2759 = vmatpush1.bf16.msra.mxu0 %v2722
      %2760 = vmatprep.subr.bf16.mxu0 0
      %2761 = vmatpush1.bf16.msra.mxu0 %v2723
      %2762 = vmatprep.subr.bf16.mxu0 0
      %2763 = vmatpush1.bf16.msra.mxu0 %v2724
      %2764 = vmatprep.subr.bf16.mxu0 0
      %2765 = vmatpush1.bf16.msra.mxu0 %v2725
      %2766 = vmatprep.subr.bf16.mxu0 0
      %2767 = vmatpush1.bf16.msra.mxu0 %v2726
      %2768 = vmatprep.subr.bf16.mxu0 0
      %2769 = vmatpush1.bf16.msra.mxu0 %v2727
      %2770 = vmatprep.subr.bf16.mxu0 0
      %2771 = vmatpush1.bf16.msra.mxu0 %v2728
      %2772 = vmatprep.subr.bf16.mxu0 0
      %2773 = vmatpush1.bf16.msra.mxu0 %v2729
      %2774 = vmatprep.subr.bf16.mxu0 0
      %2775 = vmatpush1.bf16.msra.mxu0 %v2730
      %2776 = vmatprep.subr.bf16.mxu0 0
      %2777 = vmatpush1.bf16.msra.mxu0 %v2731
      %2778 = vmatprep.subr.bf16.mxu0 0
      %2779 = vmatpush1.bf16.msra.mxu0 %v2732
      %2780 = vmatprep.subr.bf16.mxu0 0
      %2781 = vmatpush1.bf16.msra.mxu0 %v2733
      %2782 = vmatprep.mubr.bf16.mxu0 %v2615
      %2783 = vmatmul.mubr.bf16.gmra.mrb[0].mxu0 %v2614
      %v2784 = vpop.f32.mrb[0].mxu0
      %v2785 = vadd.f32 %v2652, %v2784
      %v2786 = vpop.f32.mrb[0].mxu0
      %v2787 = vpop.f32.mrb[0].mxu0
      %v2788 = vpop.f32.mrb[0].mxu0
      %2789 = vdwg.mxu0
      %v2790 = vmax.f32 %v2785, 0.0
      %v2791 = vpack.c.bf16 %v2790, %v2790
      %v2792 = vld [vmem:[%s6] sm:$0xf]
      %v2793 = vld [vmem:[%s6 + $0x4] sm:$0xf]
      %v2794 = vld [vmem:[%s6 + $0x8] sm:$0xf]
      %v2795 = vld [vmem:[%s6 + $0xc] sm:$0xf]
      %v2796 = vld [vmem:[%s6 + $0x10] sm:$0xf]
      %v2797 = vld [vmem:[%s6 + $0x14] sm:$0xf]
      %v2798 = vld [vmem:[%s6 + $0x18] sm:$0xf]
      %v2799 = vld [vmem:[%s6 + $0x1c] sm:$0xf]
      %v2800 = vld [vmem:[%s6 + $0x20] sm:$0xf]
      %v2801 = vld [vmem:[%s6 + $0x24] sm:$0xf]
      %v2802 = vld [vmem:[%s6 + $0x28] sm:$0xf]
      %v2803 = vld [vmem:[%s6 + $0x2c] sm:$0xf]
      %v2804 = vld [vmem:[%s6 + $0x30] sm:$0xf]
      %v2805 = vld [vmem:[%s6 + $0x34] sm:$0xf]
      %v2806 = vld [vmem:[%s6 + $0x38] sm:$0xf]
      %v2807 = vld [vmem:[%s6 + $0x3c] sm:$0xf]
      %v2809 = vlaneseq
      %v2810 = vshrl.u32 %v2809, 7
      %v2811 = vsub.s32 0, %v2810
      %v2812 = vrot.slane %v2613, %v2811
      %v2830 = vunpack.c.l.b16 %v2792
      %v2831 = vunpack.c.l.b16 %v2793
      %v2832 = vunpack.c.l.b16 %v2794
      %v2833 = vunpack.c.l.b16 %v2795
      %v2834 = vunpack.c.l.b16 %v2796
      %v2835 = vunpack.c.l.b16 %v2797
      %v2836 = vunpack.c.l.b16 %v2798
      %v2837 = vunpack.c.l.b16 %v2799
      %v2838 = vunpack.c.l.b16 %v2800
      %v2839 = vunpack.c.l.b16 %v2801
      %v2840 = vunpack.c.l.b16 %v2802
      %v2841 = vunpack.c.l.b16 %v2803
      %v2842 = vunpack.c.l.b16 %v2804
      %v2843 = vunpack.c.l.b16 %v2805
      %v2844 = vunpack.c.l.b16 %v2806
      %v2845 = vunpack.c.l.b16 %v2807
      %v2846 = vpack.c.b16 %v2831, %v2830
      %v2847 = vpack.c.b16 %v2833, %v2832
      %v2848 = vpack.c.b16 %v2835, %v2834
      %v2849 = vpack.c.b16 %v2837, %v2836
      %v2850 = vpack.c.b16 %v2839, %v2838
      %v2851 = vpack.c.b16 %v2841, %v2840
      %v2852 = vpack.c.b16 %v2843, %v2842
      %v2853 = vpack.c.b16 %v2845, %v2844
      %2862 = vmatprep.subr.bf16.mxu0 0
      %2863 = vmatpush1.bf16.msra.mxu0 %v2846
      %2864 = vmatprep.subr.bf16.mxu0 0
      %2865 = vmatpush1.bf16.msra.mxu0 %v2847
      %2866 = vmatprep.subr.bf16.mxu0 0
      %2867 = vmatpush1.bf16.msra.mxu0 %v2848
      %2868 = vmatprep.subr.bf16.mxu0 0
      %2869 = vmatpush1.bf16.msra.mxu0 %v2849
      %2870 = vmatprep.subr.bf16.mxu0 0
      %2871 = vmatpush1.bf16.msra.mxu0 %v2850
      %2872 = vmatprep.subr.bf16.mxu0 0
      %2873 = vmatpush1.bf16.msra.mxu0 %v2851
      %2874 = vmatprep.subr.bf16.mxu0 0
      %2875 = vmatpush1.bf16.msra.mxu0 %v2852
      %2876 = vmatprep.subr.bf16.mxu0 0
      %2877 = vmatpush1.bf16.msra.mxu0 %v2853
      %2878 = vmatprep.subr.bf16.mxu0 0
      %2879 = vmatpush1.bf16.msra.mxu0 0
      %2880 = vmatprep.subr.bf16.mxu0 0
      %2881 = vmatpush1.bf16.msra.mxu0 0
      %2882 = vmatprep.subr.bf16.mxu0 0
      %2883 = vmatpush1.bf16.msra.mxu0 0
      %2884 = vmatprep.subr.bf16.mxu0 0
      %2885 = vmatpush1.bf16.msra.mxu0 0
      %2886 = vmatprep.subr.bf16.mxu0 0
      %2887 = vmatpush1.bf16.msra.mxu0 0
      %2888 = vmatprep.subr.bf16.mxu0 0
      %2889 = vmatpush1.bf16.msra.mxu0 0
      %2890 = vmatprep.subr.bf16.mxu0 0
      %2891 = vmatpush1.bf16.msra.mxu0 0
      %2892 = vmatprep.subr.bf16.mxu0 0
      %2893 = vmatpush1.bf16.msra.mxu0 0
      %2894 = vmatprep.mubr.bf16.mxu0 0
      %2895 = vmatmul.mubr.bf16.gmra.mrb[0].mxu0 %v2791
      %v2896 = vpop.f32.mrb[0].mxu0
      %v2897 = vadd.f32 %v2812, %v2896
      %v2898 = vpop.f32.mrb[0].mxu0
      %v2899 = vpop.f32.mrb[0].mxu0
      %v2900 = vpop.f32.mrb[0].mxu0
      %2901 = vdwg.mxu0
      %vm2902 = vcmask 1041408
      %v2903 = vsel %vm2902, %v2897, -inf
      %2904 = vmax.xlane.f32.xlu0 %v2903
      %v2905 = vpop.xlane.xlu0 %2904
      %v2906 = vsub.f32 %v2897, %v2905
      %v2907 = vmul.f32 %v2906, 1.442695
      %v2908 = vpow.pop %v2907
      %v2909 = vsel %vm2902, %v2908, 0.0
      %2910 = vadd.xlane.f32.xlu0 %v2909
      %v2911 = vpop.xlane.xlu0 %2910
      %v2912 = vlog2.pop %v2911
      %v2913 = vmul.f32 %v2912, 0.6931472
      %v2914 = vsub.f32 %v2906, %v2913
      %2915 = vst [vmem:[#allocation3] sm:$0x3] %v2914
      %v2916 = vld [vmem:[%s1] sm:$0x3]
      %v2917 = vlaneseq
      %v2918 = vand.u32 %v2917, 127
      %2919 = vset.pattern.permute.xlu0 0
      %2920 = vperm.xlu0 %2919, %v2916
      %v2921 = vpop.permute.xlu0 %2920
      %vm2922 = vcmp.eq.s32.totalorder %v2918, %v2921
      %v2923 = vsel %vm2922, %v2914, 0.0
      %v2924 = vsel %vm2902, %v2923, 0.0
      %2925 = vadd.xlane.f32.xlu0 %v2924
      %v2926 = vpop.xlane.xlu0 %2925
      %v2927 = vsub.f32 0.0, %v2926
      %vm2928 = vcmask 1024
      %2929 = vst.msk [vmem:[%s11] sm:$0x3] %vm2928, %v2927
    $region45: #{tpu_custom_call.1} parent=1 // pred_fallthru
      _
    // Predicated region
    $region46: #{tpu_custom_call.1} parent=1 // pred_check
      _
    $region47: #{tpu_custom_call.1} parent=1 // pred_check_branch
      %2931 = sbr.rel (0) target = $region49
    $region48: #{tpu_custom_call.1} parent=1 // pred_region
      %s2933 = ssub.s32 32, 32
      %2934 = vsyncadd [#allocation4], %s2933
      %s2936 = sshll.u32 [#allocation3], 4
      %s2937 = int_to_ptr.vmem [resolvable:$true] %s2936
      %2939 = dma.vmem_to_hbm [thread:$0]  %s2937, 32, %s9, [#allocation4]
    $region49: #{tpu_custom_call.1} parent=1 // pred_fallthru
      _
    // Predicated region
    $region50: #{tpu_custom_call.1} parent=1 // pred_check
      _
    $region51: #{tpu_custom_call.1} parent=1 // pred_check_branch
      %2941 = sbr.rel (0) target = $region53
    $region52: #{tpu_custom_call.1} parent=1 // pred_region
      %s2943 = ssub.s32 64, 64
      %2944 = vsyncadd [#allocation6], %s2943
      %s2946 = sshll.u32 [#allocation5], 4
      %s2947 = int_to_ptr.vmem [resolvable:$true] %s2946
      %2949 = dma.vmem_to_hbm [thread:$0]  %s2947, 64, %s10, [#allocation6]
    $region53: #{tpu_custom_call.1} parent=1 // pred_fallthru
      _
    // Predicated region
    $region54: #{tpu_custom_call.1} parent=1 // pred_check
      _
    $region55: #{tpu_custom_call.1} parent=1 // pred_check_branch
      %2951 = sbr.rel (0) target = $region57
    $region56: #{tpu_custom_call.1} parent=1 // pred_region
      _
    $region57: #{tpu_custom_call.1} parent=1 // pred_fallthru
      _
    // Predicated region
    $region58: #{tpu_custom_call.1} parent=1 // pred_check
      _
    $region59: #{tpu_custom_call.1} parent=1 // pred_check_branch
      %2953 = sbr.rel (0) target = $region61
    $region60: #{tpu_custom_call.1} parent=1 // pred_region
      %2954 = dma.done [#allocation4], 32
    $region61: #{tpu_custom_call.1} parent=1 // pred_fallthru
      _
    // Predicated region
    $region62: #{tpu_custom_call.1} parent=1 // pred_check
      _
    $region63: #{tpu_custom_call.1} parent=1 // pred_check_branch
      %2956 = sbr.rel (0) target = $region65
    $region64: #{tpu_custom_call.1} parent=1 // pred_region
      %2957 = dma.done [#allocation6], 64
    $region65: #{tpu_custom_call.1} parent=1 // pred_fallthru
      _
    // Predicated region
    $region66: #{tpu_custom_call.1} parent=1 // pred_check
      _
    $region67: #{tpu_custom_call.1} parent=1 // pred_check_branch
      %2959 = sbr.rel (0) target = $region69
    $region68: #{tpu_custom_call.1} parent=1 // pred_region
      _
    $region69: #{tpu_custom_call.1} parent=1 // pred_fallthru
      _
    %2960 = vsyncpa [#allocation4], 1
    %2961 = vsyncpa [#allocation6], 1

</llo_original>
